<compile_context>
chip_gen: v5e
topology: v5e:2x2
jax: 0.10.0
libtpu: 0.0.40
codegen_flags: <defaults>
</compile_context>

<pallas_src>
import functools

import jax
import jax.numpy as jnp
from jax.experimental import pallas as pl
from jax.experimental.pallas import tpu as pltpu

NEG_SLOPE = 0.01  # torch.nn.LeakyReLU default negative_slope


def _round_up(x, m):
    return ((x + m - 1) // m) * m


def _mlp_kernel(x_ref, *refs, matmul_dtype):
    """Transposed MLP: activations are (features, batch_tile) -> batch on lanes.

    refs = (w0, b0, w1, b1, ..., w_last, b_last, out_ref)
      w0     : (hidden, input_size)   torch (out, in) layout
      w_l    : (hidden, hidden)       hidden layers (possibly pre-cast to bf16)
      w_last : (hidden, 1)            last-layer weight stored as a column
      b_l    : (out_l, 1)             float32
      out_ref: (1, batch_tile)        lane-dense output slab
    """
    out_ref = refs[-1]
    param_refs = refs[:-1]
    n_layers = len(param_refs) // 2

    # ---- layer 0: input_size -> hidden -----------------------------------
    w0 = param_refs[0][...].astype(jnp.float32)       # (H, in)
    b0 = param_refs[1][...].astype(jnp.float32)       # (H, 1)
    xt = x_ref[...].astype(jnp.float32)               # (in, T)
    if xt.shape[0] == 1:
        # K == 1: the "matmul" is an outer product -> VPU broadcast multiply.
        h = w0 * xt + b0                               # (H,1)*(1,T)+(H,1) -> (H,T)
    else:
        h = jnp.dot(w0, xt, preferred_element_type=jnp.float32) + b0
    h = jnp.where(h >= 0, h, NEG_SLOPE * h)

    # ---- hidden layers: hidden -> hidden (MXU) ----------------------------
    # NOTE: intentionally an unrolled Python loop; do not convert to a visible
    # non-unrolled fori_loop.
    for l in range(1, n_layers - 1):
        w = param_refs[2 * l][...]                     # (H, H), f32 or bf16
        b = param_refs[2 * l + 1][...].astype(jnp.float32)
        h = jnp.dot(w, h.astype(matmul_dtype),
                    preferred_element_type=jnp.float32) + b
        h = jnp.where(h >= 0, h, NEG_SLOPE * h)

    # ---- last layer: hidden -> 1 (VPU multiply + sublane reduce, lane-dense)
    w_last = param_refs[2 * (n_layers - 1)][...].astype(jnp.float32)      # (H, 1)
    b_last = param_refs[2 * (n_layers - 1) + 1][...].astype(jnp.float32)  # (1, 1)
    out_row = jnp.sum(w_last * h, axis=0, keepdims=True) + b_last         # (1, T)
    out_ref[...] = out_row.astype(out_ref.dtype)


def _prep_params(params, matmul_dtype):
    """params: torch layout [(W (out,in), b (out,)), ...] -> kernel layout."""
    n = len(params)
    prepped = []
    for l, (w, b) in enumerate(params):
        w = jnp.asarray(w, jnp.float32)
        b = jnp.asarray(b, jnp.float32).reshape(-1, 1)    # (out, 1)
        if l == n - 1:
            w = w.reshape(-1, 1)                          # (1, H) -> (H, 1) column
        elif l > 0 and matmul_dtype != jnp.float32:
            w = w.astype(matmul_dtype)                    # pre-cast: halves weight DMA
        prepped.append((w, b))
    return prepped


def regression_var_depth_forward(x, params, *, batch_tile=None,
                                 matmul_dtype=jnp.float32):
    """x: (B, input_size) f32; params: torch layout [(W (out,in), b (out,)), ...].

    Returns (B, 1) float32, matching RegressionVarDepth.forward.
    """
    x = jnp.asarray(x, jnp.float32)
    B, in_size = x.shape
    n_layers = len(params)
    assert n_layers >= 2
    hidden = params[0][0].shape[0]

    # Batch lives on lanes -> tiles are multiples of 128.  512 (multiple of 256,
    # matching the v6e/v7x MXU) for big batches; tiny/ragged batches pad up to a
    # single 128-aligned tile (grid=(1,)).
    if batch_tile is None:
        batch_tile = min(512, _round_up(B, 128))
    assert batch_tile % 128 == 0, "batch_tile must be a multiple of 128 (lane width)"
    b_pad = _round_up(B, batch_tile)
    num_tiles = b_pad // batch_tile

    # Transpose + zero-pad the batch: kernel input is (input_size, b_pad).
    xt = jnp.zeros((in_size, b_pad), jnp.float32).at[:, :B].set(x.T)

    prepped = _prep_params(params, matmul_dtype)
    flat_params = [t for wb in prepped for t in wb]

    # ---- VMEM budgeting (matters on v7x: 64 MiB physical / 32 MiB default scoped).
    def param_bytes(buffers):
        return sum(buffers * (w.size * w.dtype.itemsize + b.size * 4)
                   for w, b in prepped)

    io_bytes = 2 * (in_size + 1) * batch_tile * 4    # double-buffered x / out tiles
    act_bytes = 2 * hidden * batch_tile * 4          # live activations (rough)

    def build_specs(weight_buffers):
        in_specs = [pl.BlockSpec((in_size, batch_tile), lambda i: (0, i))]
        for w, b in prepped:
            for arr in (w, b):
                if weight_buffers == 1:
                    # Same block every grid step -> no double buffering needed.
                    spec = pl.BlockSpec(arr.shape, lambda i: (0, 0),
                                        pipeline_mode=pl.Buffered(1))
                else:
                    spec = pl.BlockSpec(arr.shape, lambda i: (0, 0))
                in_specs.append(spec)
        return in_specs

    out_spec = pl.BlockSpec((1, batch_tile), lambda i: (0, i))
    out_shape = jax.ShapeDtypeStruct((1, b_pad), jnp.float32)
    kernel = functools.partial(_mlp_kernel, matmul_dtype=matmul_dtype)

    def run(weight_buffers):
        vmem_est = io_bytes + act_bytes + param_bytes(weight_buffers)
        compiler_kwargs = dict(dimension_semantics=("parallel",))
        if vmem_est > 32 * 1024 * 1024:
            # v7x only has 64 MiB physical VMEM per TensorCore; never ask for more than ~60.
            compiler_kwargs["vmem_limit_bytes"] = int(min(vmem_est * 5 // 4,
                                                          60 * 1024 * 1024))
        return pl.pallas_call(
            kernel,
            out_shape=out_shape,
            grid_spec=pltpu.PrefetchScalarGridSpec(
                num_scalar_prefetch=0,
                grid=(num_tiles,),
                in_specs=build_specs(weight_buffers),
                out_specs=out_spec,
            ),
            compiler_params=pltpu.CompilerParams(**compiler_kwargs),
        )(xt, *flat_params)

    try:
        out_t = run(weight_buffers=1)     # single-buffered resident weights
    except Exception:
        out_t = run(weight_buffers=2)     # fallback: default double buffering

    return out_t[0, :B].reshape(B, 1)


def init_params(key, input_size=1, hidden_size=256, depth=3):
    """torch.nn.Linear-style init; weights kept in torch (out_features, in_features) layout."""
    dims = [input_size] + [hidden_size] * depth + [1]
    params = []
    for fan_in, fan_out in zip(dims[:-1], dims[1:]):
        key, kw, kb = jax.random.split(key, 3)
        bound = 1.0 / float(fan_in) ** 0.5
        w = jax.random.uniform(kw, (fan_out, fan_in), jnp.float32, -bound, bound)
        b = jax.random.uniform(kb, (fan_out,), jnp.float32, -bound, bound)
        params.append((w, b))
    return params


def reference_forward(x, params):
    """Plain-JAX mirror of RegressionVarDepth.forward (f32, high-precision matmuls)."""
    h = x
    n = len(params)
    for l, (w, b) in enumerate(params):
        h = jnp.dot(h, w.T, precision=jax.lax.Precision.HIGHEST) + b
        if l < n - 1:
            h = jnp.where(h >= 0, h, NEG_SLOPE * h)
    return h


if __name__ == "__main__":
    key = jax.random.PRNGKey(0)
    k_params, k_x = jax.random.split(key)

    # Small shapes consistent with the module (hidden scaled down from 1024 for the test).
    INPUT_SIZE, HIDDEN, DEPTH, BATCH = 1, 256, 3, 16
    params = init_params(k_params, INPUT_SIZE, HIDDEN, DEPTH)
    x = jax.random.normal(k_x, (BATCH, INPUT_SIZE), jnp.float32)

    ref = reference_forward(x, params)

    # f32 path (exact semantics of the torch module).
    out = regression_var_depth_forward(x, params)
    out = jax.block_until_ready(out)
    assert out.shape == (BATCH, 1)
    assert jnp.allclose(out, ref, atol=1e-4, rtol=1e-4), "f32 kernel mismatch vs reference"

    # bf16 hidden-matmul path (recommended on v6e/v7x); f32 accumulation, looser check.
    out_bf16 = regression_var_depth_forward(x, params, matmul_dtype=jnp.bfloat16)
    out_bf16 = jax.block_until_ready(out_bf16)
    assert jnp.allclose(out_bf16, ref, atol=1e-1, rtol=1e-1), "bf16 kernel mismatch vs reference"

    print("KERNEL_OK")
</pallas_src>

<mosaic_0001>
module attributes {stable_mosaic.version = 11 : i64} {
  func.func @_mlp_kernel(%arg0: i32, %arg1: memref<1x128xf32, #tpu.memory_space<vmem>>, %arg2: memref<256x1xf32, #tpu.memory_space<vmem>>, %arg3: memref<256x1xf32, #tpu.memory_space<vmem>>, %arg4: memref<256x256xf32, #tpu.memory_space<vmem>>, %arg5: memref<256x1xf32, #tpu.memory_space<vmem>>, %arg6: memref<256x256xf32, #tpu.memory_space<vmem>>, %arg7: memref<256x1xf32, #tpu.memory_space<vmem>>, %arg8: memref<256x1xf32, #tpu.memory_space<vmem>>, %arg9: memref<1x1xf32, #tpu.memory_space<vmem>>, %arg10: memref<1x128xf32, #tpu.memory_space<vmem>>) attributes {dimension_semantics = [#tpu.dimension_semantics<parallel>], iteration_bounds = array<i64: 1>, scalar_prefetch = 0 : i64, scratch_operands = 0 : i64, tpu.core_type = #tpu.core_type<tc>, window_params = [{transform_indices = @transform_0, window_bounds = array<i64: 1, 128>}, {pipeline_mode = #tpu.pipeline_mode<synchronous>, transform_indices = @transform_1, window_bounds = array<i64: 256, 1>}, {pipeline_mode = #tpu.pipeline_mode<synchronous>, transform_indices = @transform_2, window_bounds = array<i64: 256, 1>}, {pipeline_mode = #tpu.pipeline_mode<synchronous>, transform_indices = @transform_3, window_bounds = array<i64: 256, 256>}, {pipeline_mode = #tpu.pipeline_mode<synchronous>, transform_indices = @transform_4, window_bounds = array<i64: 256, 1>}, {pipeline_mode = #tpu.pipeline_mode<synchronous>, transform_indices = @transform_5, window_bounds = array<i64: 256, 256>}, {pipeline_mode = #tpu.pipeline_mode<synchronous>, transform_indices = @transform_6, window_bounds = array<i64: 256, 1>}, {pipeline_mode = #tpu.pipeline_mode<synchronous>, transform_indices = @transform_7, window_bounds = array<i64: 256, 1>}, {pipeline_mode = #tpu.pipeline_mode<synchronous>, transform_indices = @transform_8, window_bounds = array<i64: 1, 1>}, {transform_indices = @transform_9, window_bounds = array<i64: 1, 128>}]} {
    %c0 = arith.constant 0 : index
    %c0_0 = arith.constant 0 : index
    %0 = vector.load %arg2[%c0, %c0_0] : memref<256x1xf32, #tpu.memory_space<vmem>>, vector<256x1xf32>
    %c0_1 = arith.constant 0 : index
    %c0_2 = arith.constant 0 : index
    %1 = vector.load %arg3[%c0_1, %c0_2] : memref<256x1xf32, #tpu.memory_space<vmem>>, vector<256x1xf32>
    %c0_3 = arith.constant 0 : index
    %c0_4 = arith.constant 0 : index
    %2 = vector.load %arg1[%c0_3, %c0_4] : memref<1x128xf32, #tpu.memory_space<vmem>>, vector<1x128xf32>
    %3 = vector.broadcast %0 : vector<256x1xf32> to vector<256x128xf32>
    %4 = vector.broadcast %2 : vector<1x128xf32> to vector<256x128xf32>
    %5 = arith.mulf %3, %4 : vector<256x128xf32>
    %6 = vector.broadcast %1 : vector<256x1xf32> to vector<256x128xf32>
    %7 = arith.addf %5, %6 : vector<256x128xf32>
    %cst = arith.constant 0.000000e+00 : f32
    %8 = vector.broadcast %cst : f32 to vector<256x128xf32>
    %9 = arith.cmpf oge, %7, %8 : vector<256x128xf32>
    %cst_5 = arith.constant 0.00999999977 : f32
    %10 = vector.broadcast %cst_5 : f32 to vector<256x128xf32>
    %11 = arith.mulf %10, %7 : vector<256x128xf32>
    %12 = arith.select %9, %7, %11 : vector<256x128xi1>, vector<256x128xf32>
    %c0_6 = arith.constant 0 : index
    %c0_7 = arith.constant 0 : index
    %13 = vector.load %arg4[%c0_6, %c0_7] : memref<256x256xf32, #tpu.memory_space<vmem>>, vector<256x256xf32>
    %c0_8 = arith.constant 0 : index
    %c0_9 = arith.constant 0 : index
    %14 = vector.load %arg5[%c0_8, %c0_9] : memref<256x1xf32, #tpu.memory_space<vmem>>, vector<256x1xf32>
    %cst_10 = arith.constant dense<0.000000e+00> : vector<256x128xf32>
    %15 = tpu.matmul %13, %12, %cst_10 {dimension_numbers = #tpu.dot_dimension_numbers<[1], [0], [0], [1], [0, 0, 1, 1], [], []>} : vector<256x256xf32>, vector<256x128xf32>, vector<256x128xf32> -> vector<256x128xf32>
    %16 = vector.broadcast %14 : vector<256x1xf32> to vector<256x128xf32>
    %17 = arith.addf %15, %16 : vector<256x128xf32>
    %cst_11 = arith.constant 0.000000e+00 : f32
    %18 = vector.broadcast %cst_11 : f32 to vector<256x128xf32>
    %19 = arith.cmpf oge, %17, %18 : vector<256x128xf32>
    %cst_12 = arith.constant 0.00999999977 : f32
    %20 = vector.broadcast %cst_12 : f32 to vector<256x128xf32>
    %21 = arith.mulf %20, %17 : vector<256x128xf32>
    %22 = arith.select %19, %17, %21 : vector<256x128xi1>, vector<256x128xf32>
    %c0_13 = arith.constant 0 : index
    %c0_14 = arith.constant 0 : index
    %23 = vector.load %arg6[%c0_13, %c0_14] : memref<256x256xf32, #tpu.memory_space<vmem>>, vector<256x256xf32>
    %c0_15 = arith.constant 0 : index
    %c0_16 = arith.constant 0 : index
    %24 = vector.load %arg7[%c0_15, %c0_16] : memref<256x1xf32, #tpu.memory_space<vmem>>, vector<256x1xf32>
    %cst_17 = arith.constant dense<0.000000e+00> : vector<256x128xf32>
    %25 = tpu.matmul %23, %22, %cst_17 {dimension_numbers = #tpu.dot_dimension_numbers<[1], [0], [0], [1], [0, 0, 1, 1], [], []>} : vector<256x256xf32>, vector<256x128xf32>, vector<256x128xf32> -> vector<256x128xf32>
    %26 = vector.broadcast %24 : vector<256x1xf32> to vector<256x128xf32>
    %27 = arith.addf %25, %26 : vector<256x128xf32>
    %cst_18 = arith.constant 0.000000e+00 : f32
    %28 = vector.broadcast %cst_18 : f32 to vector<256x128xf32>
    %29 = arith.cmpf oge, %27, %28 : vector<256x128xf32>
    %cst_19 = arith.constant 0.00999999977 : f32
    %30 = vector.broadcast %cst_19 : f32 to vector<256x128xf32>
    %31 = arith.mulf %30, %27 : vector<256x128xf32>
    %32 = arith.select %29, %27, %31 : vector<256x128xi1>, vector<256x128xf32>
    %c0_20 = arith.constant 0 : index
    %c0_21 = arith.constant 0 : index
    %33 = vector.load %arg8[%c0_20, %c0_21] : memref<256x1xf32, #tpu.memory_space<vmem>>, vector<256x1xf32>
    %c0_22 = arith.constant 0 : index
    %c0_23 = arith.constant 0 : index
    %34 = vector.load %arg9[%c0_22, %c0_23] : memref<1x1xf32, #tpu.memory_space<vmem>>, vector<1x1xf32>
    %35 = vector.broadcast %33 : vector<256x1xf32> to vector<256x128xf32>
    %36 = arith.mulf %35, %32 : vector<256x128xf32>
    %cst_24 = arith.constant dense<0.000000e+00> : vector<128xf32>
    %37 = vector.multi_reduction <add>, %36, %cst_24 [0] : vector<256x128xf32> to vector<128xf32>
    %38 = vector.shape_cast %37 : vector<128xf32> to vector<1x128xf32>
    %39 = vector.broadcast %34 : vector<1x1xf32> to vector<1x128xf32>
    %40 = arith.addf %38, %39 : vector<1x128xf32>
    %c0_25 = arith.constant 0 : index
    %c0_26 = arith.constant 0 : index
    %41 = vector.load %arg10[%c0_25, %c0_26] : memref<1x128xf32, #tpu.memory_space<vmem>>, vector<1x128xf32>
    tpu.vector_store %arg10[%c0_25, %c0_26], %40 {strides = array<i32>} : memref<1x128xf32, #tpu.memory_space<vmem>>, vector<1x128xf32>,
    return
  }
  func.func @transform_0(%arg0: i32) -> (i32, i32) {
    %c0_i32 = arith.constant 0 : i32
    %c0_i32_0 = arith.constant 0 : i32
    return %c0_i32, %arg0 : i32, i32
  }
  func.func @transform_1(%arg0: i32) -> (i32, i32) {
    %c0_i32 = arith.constant 0 : i32
    %c0_i32_0 = arith.constant 0 : i32
    %c0_i32_1 = arith.constant 0 : i32
    return %c0_i32, %c0_i32_0 : i32, i32
  }
  func.func @transform_2(%arg0: i32) -> (i32, i32) {
    %c0_i32 = arith.constant 0 : i32
    %c0_i32_0 = arith.constant 0 : i32
    %c0_i32_1 = arith.constant 0 : i32
    return %c0_i32, %c0_i32_0 : i32, i32
  }
  func.func @transform_3(%arg0: i32) -> (i32, i32) {
    %c0_i32 = arith.constant 0 : i32
    %c0_i32_0 = arith.constant 0 : i32
    %c0_i32_1 = arith.constant 0 : i32
    return %c0_i32, %c0_i32_0 : i32, i32
  }
  func.func @transform_4(%arg0: i32) -> (i32, i32) {
    %c0_i32 = arith.constant 0 : i32
    %c0_i32_0 = arith.constant 0 : i32
    %c0_i32_1 = arith.constant 0 : i32
    return %c0_i32, %c0_i32_0 : i32, i32
  }
  func.func @transform_5(%arg0: i32) -> (i32, i32) {
    %c0_i32 = arith.constant 0 : i32
    %c0_i32_0 = arith.constant 0 : i32
    %c0_i32_1 = arith.constant 0 : i32
    return %c0_i32, %c0_i32_0 : i32, i32
  }
  func.func @transform_6(%arg0: i32) -> (i32, i32) {
    %c0_i32 = arith.constant 0 : i32
    %c0_i32_0 = arith.constant 0 : i32
    %c0_i32_1 = arith.constant 0 : i32
    return %c0_i32, %c0_i32_0 : i32, i32
  }
  func.func @transform_7(%arg0: i32) -> (i32, i32) {
    %c0_i32 = arith.constant 0 : i32
    %c0_i32_0 = arith.constant 0 : i32
    %c0_i32_1 = arith.constant 0 : i32
    return %c0_i32, %c0_i32_0 : i32, i32
  }
  func.func @transform_8(%arg0: i32) -> (i32, i32) {
    %c0_i32 = arith.constant 0 : i32
    %c0_i32_0 = arith.constant 0 : i32
    %c0_i32_1 = arith.constant 0 : i32
    return %c0_i32, %c0_i32_0 : i32, i32
  }
  func.func @transform_9(%arg0: i32) -> (i32, i32) {
    %c0_i32 = arith.constant 0 : i32
    %c0_i32_0 = arith.constant 0 : i32
    return %c0_i32, %arg0 : i32, i32
  }
}

module attributes {stable_mosaic.version = 11 : i64} {
  func.func @_mlp_kernel(%arg0: i32, %arg1: memref<1x128xf32, #tpu.memory_space<vmem>>, %arg2: memref<256x1xf32, #tpu.memory_space<vmem>>, %arg3: memref<256x1xf32, #tpu.memory_space<vmem>>, %arg4: memref<256x256xf32, #tpu.memory_space<vmem>>, %arg5: memref<256x1xf32, #tpu.memory_space<vmem>>, %arg6: memref<256x256xf32, #tpu.memory_space<vmem>>, %arg7: memref<256x1xf32, #tpu.memory_space<vmem>>, %arg8: memref<256x1xf32, #tpu.memory_space<vmem>>, %arg9: memref<1x1xf32, #tpu.memory_space<vmem>>, %arg10: memref<1x128xf32, #tpu.memory_space<vmem>>) attributes {dimension_semantics = [#tpu.dimension_semantics<parallel>], iteration_bounds = array<i64: 1>, scalar_prefetch = 0 : i64, scratch_operands = 0 : i64, tpu.core_type = #tpu.core_type<tc>, window_params = [{transform_indices = @transform_0, window_bounds = array<i64: 1, 128>}, {pipeline_mode = #tpu.pipeline_mode<synchronous>, transform_indices = @transform_1, window_bounds = array<i64: 256, 1>}, {pipeline_mode = #tpu.pipeline_mode<synchronous>, transform_indices = @transform_2, window_bounds = array<i64: 256, 1>}, {pipeline_mode = #tpu.pipeline_mode<synchronous>, transform_indices = @transform_3, window_bounds = array<i64: 256, 256>}, {pipeline_mode = #tpu.pipeline_mode<synchronous>, transform_indices = @transform_4, window_bounds = array<i64: 256, 1>}, {pipeline_mode = #tpu.pipeline_mode<synchronous>, transform_indices = @transform_5, window_bounds = array<i64: 256, 256>}, {pipeline_mode = #tpu.pipeline_mode<synchronous>, transform_indices = @transform_6, window_bounds = array<i64: 256, 1>}, {pipeline_mode = #tpu.pipeline_mode<synchronous>, transform_indices = @transform_7, window_bounds = array<i64: 256, 1>}, {pipeline_mode = #tpu.pipeline_mode<synchronous>, transform_indices = @transform_8, window_bounds = array<i64: 1, 1>}, {transform_indices = @transform_9, window_bounds = array<i64: 1, 128>}]} {
    %c0 = arith.constant 0 : index
    %c0_0 = arith.constant 0 : index
    %0 = vector.load %arg2[%c0, %c0_0] : memref<256x1xf32, #tpu.memory_space<vmem>>, vector<256x1xf32>
    %c0_1 = arith.constant 0 : index
    %c0_2 = arith.constant 0 : index
    %1 = vector.load %arg3[%c0_1, %c0_2] : memref<256x1xf32, #tpu.memory_space<vmem>>, vector<256x1xf32>
    %c0_3 = arith.constant 0 : index
    %c0_4 = arith.constant 0 : index
    %2 = vector.load %arg1[%c0_3, %c0_4] : memref<1x128xf32, #tpu.memory_space<vmem>>, vector<1x128xf32>
    %3 = vector.broadcast %0 : vector<256x1xf32> to vector<256x128xf32>
    %4 = vector.broadcast %2 : vector<1x128xf32> to vector<256x128xf32>
    %5 = arith.mulf %3, %4 : vector<256x128xf32>
    %6 = vector.broadcast %1 : vector<256x1xf32> to vector<256x128xf32>
    %7 = arith.addf %5, %6 : vector<256x128xf32>
    %cst = arith.constant 0.000000e+00 : f32
    %8 = vector.broadcast %cst : f32 to vector<256x128xf32>
    %9 = arith.cmpf oge, %7, %8 : vector<256x128xf32>
    %cst_5 = arith.constant 0.00999999977 : f32
    %10 = vector.broadcast %cst_5 : f32 to vector<256x128xf32>
    %11 = arith.mulf %10, %7 : vector<256x128xf32>
    %12 = arith.select %9, %7, %11 : vector<256x128xi1>, vector<256x128xf32>
    %c0_6 = arith.constant 0 : index
    %c0_7 = arith.constant 0 : index
    %13 = vector.load %arg4[%c0_6, %c0_7] : memref<256x256xf32, #tpu.memory_space<vmem>>, vector<256x256xf32>
    %c0_8 = arith.constant 0 : index
    %c0_9 = arith.constant 0 : index
    %14 = vector.load %arg5[%c0_8, %c0_9] : memref<256x1xf32, #tpu.memory_space<vmem>>, vector<256x1xf32>
    %cst_10 = arith.constant dense<0.000000e+00> : vector<256x128xf32>
    %15 = tpu.matmul %13, %12, %cst_10 {dimension_numbers = #tpu.dot_dimension_numbers<[1], [0], [0], [1], [0, 0, 1, 1], [], []>} : vector<256x256xf32>, vector<256x128xf32>, vector<256x128xf32> -> vector<256x128xf32>
    %16 = vector.broadcast %14 : vector<256x1xf32> to vector<256x128xf32>
    %17 = arith.addf %15, %16 : vector<256x128xf32>
    %cst_11 = arith.constant 0.000000e+00 : f32
    %18 = vector.broadcast %cst_11 : f32 to vector<256x128xf32>
    %19 = arith.cmpf oge, %17, %18 : vector<256x128xf32>
    %cst_12 = arith.constant 0.00999999977 : f32
    %20 = vector.broadcast %cst_12 : f32 to vector<256x128xf32>
    %21 = arith.mulf %20, %17 : vector<256x128xf32>
    %22 = arith.select %19, %17, %21 : vector<256x128xi1>, vector<256x128xf32>
    %c0_13 = arith.constant 0 : index
    %c0_14 = arith.constant 0 : index
    %23 = vector.load %arg6[%c0_13, %c0_14] : memref<256x256xf32, #tpu.memory_space<vmem>>, vector<256x256xf32>
    %c0_15 = arith.constant 0 : index
    %c0_16 = arith.constant 0 : index
    %24 = vector.load %arg7[%c0_15, %c0_16] : memref<256x1xf32, #tpu.memory_space<vmem>>, vector<256x1xf32>
    %cst_17 = arith.constant dense<0.000000e+00> : vector<256x128xf32>
    %25 = tpu.matmul %23, %22, %cst_17 {dimension_numbers = #tpu.dot_dimension_numbers<[1], [0], [0], [1], [0, 0, 1, 1], [], []>} : vector<256x256xf32>, vector<256x128xf32>, vector<256x128xf32> -> vector<256x128xf32>
    %26 = vector.broadcast %24 : vector<256x1xf32> to vector<256x128xf32>
    %27 = arith.addf %25, %26 : vector<256x128xf32>
    %cst_18 = arith.constant 0.000000e+00 : f32
    %28 = vector.broadcast %cst_18 : f32 to vector<256x128xf32>
    %29 = arith.cmpf oge, %27, %28 : vector<256x128xf32>
    %cst_19 = arith.constant 0.00999999977 : f32
    %30 = vector.broadcast %cst_19 : f32 to vector<256x128xf32>
    %31 = arith.mulf %30, %27 : vector<256x128xf32>
    %32 = arith.select %29, %27, %31 : vector<256x128xi1>, vector<256x128xf32>
    %c0_20 = arith.constant 0 : index
    %c0_21 = arith.constant 0 : index
    %33 = vector.load %arg8[%c0_20, %c0_21] : memref<256x1xf32, #tpu.memory_space<vmem>>, vector<256x1xf32>
    %c0_22 = arith.constant 0 : index
    %c0_23 = arith.constant 0 : index
    %34 = vector.load %arg9[%c0_22, %c0_23] : memref<1x1xf32, #tpu.memory_space<vmem>>, vector<1x1xf32>
    %35 = vector.broadcast %33 : vector<256x1xf32> to vector<256x128xf32>
    %36 = arith.mulf %35, %32 : vector<256x128xf32>
    %cst_24 = arith.constant dense<0.000000e+00> : vector<128xf32>
    %37 = vector.multi_reduction <add>, %36, %cst_24 [0] : vector<256x128xf32> to vector<128xf32>
    %38 = vector.shape_cast %37 : vector<128xf32> to vector<1x128xf32>
    %39 = vector.broadcast %34 : vector<1x1xf32> to vector<1x128xf32>
    %40 = arith.addf %38, %39 : vector<1x128xf32>
    %c0_25 = arith.constant 0 : index
    %c0_26 = arith.constant 0 : index
    %41 = vector.load %arg10[%c0_25, %c0_26] : memref<1x128xf32, #tpu.memory_space<vmem>>, vector<1x128xf32>
    tpu.vector_store %arg10[%c0_25, %c0_26], %40 {strides = array<i32>} : memref<1x128xf32, #tpu.memory_space<vmem>>, vector<1x128xf32>,
    return
  }
  func.func @transform_0(%arg0: i32) -> (i32, i32) {
    %c0_i32 = arith.constant 0 : i32
    %c0_i32_0 = arith.constant 0 : i32
    return %c0_i32, %arg0 : i32, i32
  }
  func.func @transform_1(%arg0: i32) -> (i32, i32) {
    %c0_i32 = arith.constant 0 : i32
    %c0_i32_0 = arith.constant 0 : i32
    %c0_i32_1 = arith.constant 0 : i32
    return %c0_i32, %c0_i32_0 : i32, i32
  }
  func.func @transform_2(%arg0: i32) -> (i32, i32) {
    %c0_i32 = arith.constant 0 : i32
    %c0_i32_0 = arith.constant 0 : i32
    %c0_i32_1 = arith.constant 0 : i32
    return %c0_i32, %c0_i32_0 : i32, i32
  }
  func.func @transform_3(%arg0: i32) -> (i32, i32) {
    %c0_i32 = arith.constant 0 : i32
    %c0_i32_0 = arith.constant 0 : i32
    %c0_i32_1 = arith.constant 0 : i32
    return %c0_i32, %c0_i32_0 : i32, i32
  }
  func.func @transform_4(%arg0: i32) -> (i32, i32) {
    %c0_i32 = arith.constant 0 : i32
    %c0_i32_0 = arith.constant 0 : i32
    %c0_i32_1 = arith.constant 0 : i32
    return %c0_i32, %c0_i32_0 : i32, i32
  }
  func.func @transform_5(%arg0: i32) -> (i32, i32) {
    %c0_i32 = arith.constant 0 : i32
    %c0_i32_0 = arith.constant 0 : i32
    %c0_i32_1 = arith.constant 0 : i32
    return %c0_i32, %c0_i32_0 : i32, i32
  }
  func.func @transform_6(%arg0: i32) -> (i32, i32) {
    %c0_i32 = arith.constant 0 : i32
    %c0_i32_0 = arith.constant 0 : i32
    %c0_i32_1 = arith.constant 0 : i32
    return %c0_i32, %c0_i32_0 : i32, i32
  }
  func.func @transform_7(%arg0: i32) -> (i32, i32) {
    %c0_i32 = arith.constant 0 : i32
    %c0_i32_0 = arith.constant 0 : i32
    %c0_i32_1 = arith.constant 0 : i32
    return %c0_i32, %c0_i32_0 : i32, i32
  }
  func.func @transform_8(%arg0: i32) -> (i32, i32) {
    %c0_i32 = arith.constant 0 : i32
    %c0_i32_0 = arith.constant 0 : i32
    %c0_i32_1 = arith.constant 0 : i32
    return %c0_i32, %c0_i32_0 : i32, i32
  }
  func.func @transform_9(%arg0: i32) -> (i32, i32) {
    %c0_i32 = arith.constant 0 : i32
    %c0_i32_0 = arith.constant 0 : i32
    return %c0_i32, %arg0 : i32, i32
  }
}

</mosaic_0001>

<llo_original>
// kernel: tpu_custom_call.1
$region0: #{tpu_custom_call.1}
  #allocation0 [shape = 'u32[]', space=smem, size = 0x4, offset = 0x4, fixed_abs, tag = 'smem constant byte address 0x4 - core index']
  #allocation1 [shape = 'u32[72,128]{1,0:T(1,128)}', space=vmem, size = 0x9000, scoped, tag = 'internal scratch']
  #allocation2 [shape = 'f32[1,1]{1,0:T(1,128)S(1)}', space=vmem, size = 0x200, scoped, tag = 'scoped memory for tpu_custom_call.1']
  %s0 = inlined_call_operand.vmem [shape: f32[1,128], index: 0, kind: input, shape index: {}]
  %s1 = inlined_call_operand.vmem [shape: f32[256,1], index: 1, kind: input, shape index: {}]
  %s2 = inlined_call_operand.vmem [shape: f32[256,1], index: 2, kind: input, shape index: {}]
  %s3 = inlined_call_operand.vmem [shape: f32[256,256], index: 3, kind: input, shape index: {}]
  %s4 = inlined_call_operand.vmem [shape: f32[256,1], index: 4, kind: input, shape index: {}]
  %s5 = inlined_call_operand.vmem [shape: f32[256,256], index: 5, kind: input, shape index: {}]
  %s6 = inlined_call_operand.vmem [shape: f32[256,1], index: 6, kind: input, shape index: {}]
  %s7 = inlined_call_operand.vmem [shape: f32[256,1], index: 7, kind: input, shape index: {}]
  %s8 = inlined_call_operand.<no memory space> [shape: f32[1,1], index: 8, kind: input, shape index: {}]
  %s9 = inlined_call_operand.hbm [shape: f32[1,128], index: 9, kind: output, shape index: {}]
  %s10 = sld [smem:[#allocation0]]
  $region46: #{tpu_custom_call.1} parent=0
    _
  %s12 = ssub.s32 1, %s10
  %s13 = scalar_select 0, %s12, %s10
  %v14 = vstv %s8
  %15 = vst [vmem:[#allocation2] sm:$0x1] %v14
  $region1: #{tpu_custom_call.1} parent=0
    #allocation3 [shape = 'u8[512]{0}', space=vmem, size = 0x400, scoped, tag = 'output window, operand 0, single buffered']
    #allocation4 [shape = 's32[1]{0}', space=sflag, size = 0x4, scoped, tag = 'scoped memory for tpu_custom_call.1']
    %16 = vsyncpa [#allocation4], 0
    // Predicated region
    $region2: #{tpu_custom_call.1} parent=1 // pred_check
      _
    $region3: #{tpu_custom_call.1} parent=1 // pred_check_branch
      %18 = sbr.rel (0) target = $region5
    $region4: #{tpu_custom_call.1} parent=1 // pred_region
      _
    $region5: #{tpu_custom_call.1} parent=1 // pred_fallthru
      _
    // Predicated region
    $region6: #{tpu_custom_call.1} parent=1 // pred_check
      _
    $region7: #{tpu_custom_call.1} parent=1 // pred_check_branch
      %20 = sbr.rel (0) target = $region9
    $region8: #{tpu_custom_call.1} parent=1 // pred_region
      _
    $region9: #{tpu_custom_call.1} parent=1 // pred_fallthru
      _
    // Predicated region
    $region10: #{tpu_custom_call.1} parent=1 // pred_check
      _
    $region11: #{tpu_custom_call.1} parent=1 // pred_check_branch
      %22 = sbr.rel (0) target = $region13
    $region12: #{tpu_custom_call.1} parent=1 // pred_region
      _
    $region13: #{tpu_custom_call.1} parent=1 // pred_fallthru
      _
    // Predicated region
    $region14: #{tpu_custom_call.1} parent=1 // pred_check
      _
    $region15: #{tpu_custom_call.1} parent=1 // pred_check_branch
      %24 = sbr.rel (0) target = $region17
    $region16: #{tpu_custom_call.1} parent=1 // pred_region
      _
    $region17: #{tpu_custom_call.1} parent=1 // pred_fallthru
      _
    // Predicated region
    $region18: #{tpu_custom_call.1} parent=1 // pred_check
      _
    $region19: #{tpu_custom_call.1} parent=1 // pred_check_branch
      %26 = sbr.rel (0) target = $region21
    $region20: #{tpu_custom_call.1} parent=1 // pred_region
      _
    $region21: #{tpu_custom_call.1} parent=1 // pred_fallthru
      _
    // Predicated region
    $region22: #{tpu_custom_call.1} parent=1 // pred_check
      _
    $region23: #{tpu_custom_call.1} parent=1 // pred_check_branch
      %28 = sbr.rel (0) target = $region25
    $region24: #{tpu_custom_call.1} parent=1 // pred_region
      _
    $region25: #{tpu_custom_call.1} parent=1 // pred_fallthru
      _
    // Predicated region
    $region26: #{tpu_custom_call.1} parent=1 // pred_check
      _
    $region27: #{tpu_custom_call.1} parent=1 // pred_check_branch
      %30 = sbr.rel (0) target = $region29
    $region28: #{tpu_custom_call.1} parent=1 // pred_region
      _
    $region29: #{tpu_custom_call.1} parent=1 // pred_fallthru
      _
    // Predicated region
    $region30: #{tpu_custom_call.1} parent=1 // pred_check
      _
    $region31: #{tpu_custom_call.1} parent=1 // pred_check_branch
      %32 = sbr.rel (0) target = $region33
    $region32: #{tpu_custom_call.1} parent=1 // pred_region
      _
    $region33: #{tpu_custom_call.1} parent=1 // pred_fallthru
      _
    // Predicated region
    $region34: #{tpu_custom_call.1} parent=1 // pred_check
      _
    $region35: #{tpu_custom_call.1} parent=1 // pred_check_branch
      %34 = sbr.rel (0) target = $region37
    $region36: #{tpu_custom_call.1} parent=1 // pred_region
      _
    $region37: #{tpu_custom_call.1} parent=1 // pred_fallthru
      _
    %v35 = vld [vmem:[%s1] sm:$0xff]
    %v36 = vld [vmem:[%s1 + $0x8] sm:$0xff]
    %v37 = vld [vmem:[%s1 + $0x10] sm:$0xff]
    %v38 = vld [vmem:[%s1 + $0x18] sm:$0xff]
    %v39 = vld [vmem:[%s1 + $0x20] sm:$0xff]
    %v40 = vld [vmem:[%s1 + $0x28] sm:$0xff]
    %v41 = vld [vmem:[%s1 + $0x30] sm:$0xff]
    %v42 = vld [vmem:[%s1 + $0x38] sm:$0xff]
    %v43 = vld [vmem:[%s1 + $0x40] sm:$0xff]
    %v44 = vld [vmem:[%s1 + $0x48] sm:$0xff]
    %v45 = vld [vmem:[%s1 + $0x50] sm:$0xff]
    %v46 = vld [vmem:[%s1 + $0x58] sm:$0xff]
    %v47 = vld [vmem:[%s1 + $0x60] sm:$0xff]
    %v48 = vld [vmem:[%s1 + $0x68] sm:$0xff]
    %v49 = vld [vmem:[%s1 + $0x70] sm:$0xff]
    %v50 = vld [vmem:[%s1 + $0x78] sm:$0xff]
    %v51 = vld [vmem:[%s1 + $0x80] sm:$0xff]
    %v52 = vld [vmem:[%s1 + $0x88] sm:$0xff]
    %v53 = vld [vmem:[%s1 + $0x90] sm:$0xff]
    %v54 = vld [vmem:[%s1 + $0x98] sm:$0xff]
    %v55 = vld [vmem:[%s1 + $0xa0] sm:$0xff]
    %v56 = vld [vmem:[%s1 + $0xa8] sm:$0xff]
    %v57 = vld [vmem:[%s1 + $0xb0] sm:$0xff]
    %v58 = vld [vmem:[%s1 + $0xb8] sm:$0xff]
    %v59 = vld [vmem:[%s1 + $0xc0] sm:$0xff]
    %v60 = vld [vmem:[%s1 + $0xc8] sm:$0xff]
    %v61 = vld [vmem:[%s1 + $0xd0] sm:$0xff]
    %v62 = vld [vmem:[%s1 + $0xd8] sm:$0xff]
    %v63 = vld [vmem:[%s1 + $0xe0] sm:$0xff]
    %v64 = vld [vmem:[%s1 + $0xe8] sm:$0xff]
    %v65 = vld [vmem:[%s1 + $0xf0] sm:$0xff]
    %v66 = vld [vmem:[%s1 + $0xf8] sm:$0xff]
    %v67 = vld [vmem:[%s2] sm:$0xff]
    %v68 = vld [vmem:[%s2 + $0x8] sm:$0xff]
    %v69 = vld [vmem:[%s2 + $0x10] sm:$0xff]
    %v70 = vld [vmem:[%s2 + $0x18] sm:$0xff]
    %v71 = vld [vmem:[%s2 + $0x20] sm:$0xff]
    %v72 = vld [vmem:[%s2 + $0x28] sm:$0xff]
    %v73 = vld [vmem:[%s2 + $0x30] sm:$0xff]
    %v74 = vld [vmem:[%s2 + $0x38] sm:$0xff]
    %v75 = vld [vmem:[%s2 + $0x40] sm:$0xff]
    %v76 = vld [vmem:[%s2 + $0x48] sm:$0xff]
    %v77 = vld [vmem:[%s2 + $0x50] sm:$0xff]
    %v78 = vld [vmem:[%s2 + $0x58] sm:$0xff]
    %v79 = vld [vmem:[%s2 + $0x60] sm:$0xff]
    %v80 = vld [vmem:[%s2 + $0x68] sm:$0xff]
    %v81 = vld [vmem:[%s2 + $0x70] sm:$0xff]
    %v82 = vld [vmem:[%s2 + $0x78] sm:$0xff]
    %v83 = vld [vmem:[%s2 + $0x80] sm:$0xff]
    %v84 = vld [vmem:[%s2 + $0x88] sm:$0xff]
    %v85 = vld [vmem:[%s2 + $0x90] sm:$0xff]
    %v86 = vld [vmem:[%s2 + $0x98] sm:$0xff]
    %v87 = vld [vmem:[%s2 + $0xa0] sm:$0xff]
    %v88 = vld [vmem:[%s2 + $0xa8] sm:$0xff]
    %v89 = vld [vmem:[%s2 + $0xb0] sm:$0xff]
    %v90 = vld [vmem:[%s2 + $0xb8] sm:$0xff]
    %v91 = vld [vmem:[%s2 + $0xc0] sm:$0xff]
    %v92 = vld [vmem:[%s2 + $0xc8] sm:$0xff]
    %v93 = vld [vmem:[%s2 + $0xd0] sm:$0xff]
    %v94 = vld [vmem:[%s2 + $0xd8] sm:$0xff]
    %v95 = vld [vmem:[%s2 + $0xe0] sm:$0xff]
    %v96 = vld [vmem:[%s2 + $0xe8] sm:$0xff]
    %v97 = vld [vmem:[%s2 + $0xf0] sm:$0xff]
    %v98 = vld [vmem:[%s2 + $0xf8] sm:$0xff]
    %v99 = vld [vmem:[%s0] sm:$0x1]
    %101 = vset.pattern.permute.xlu0 0
    %102 = vperm.xlu0 %101, %v35
    %v103 = vpop.permute.xlu0 %102
    %106 = vset.pattern.permute.xlu0 0
    %107 = vperm.xlu0 %106, %v36
    %v108 = vpop.permute.xlu0 %107
    %111 = vset.pattern.permute.xlu0 0
    %112 = vperm.xlu0 %111, %v37
    %v113 = vpop.permute.xlu0 %112
    %116 = vset.pattern.permute.xlu0 0
    %117 = vperm.xlu0 %116, %v38
    %v118 = vpop.permute.xlu0 %117
    %121 = vset.pattern.permute.xlu0 0
    %122 = vperm.xlu0 %121, %v39
    %v123 = vpop.permute.xlu0 %122
    %126 = vset.pattern.permute.xlu0 0
    %127 = vperm.xlu0 %126, %v40
    %v128 = vpop.permute.xlu0 %127
    %131 = vset.pattern.permute.xlu0 0
    %132 = vperm.xlu0 %131, %v41
    %v133 = vpop.permute.xlu0 %132
    %136 = vset.pattern.permute.xlu0 0
    %137 = vperm.xlu0 %136, %v42
    %v138 = vpop.permute.xlu0 %137
    %141 = vset.pattern.permute.xlu0 0
    %142 = vperm.xlu0 %141, %v43
    %v143 = vpop.permute.xlu0 %142
    %146 = vset.pattern.permute.xlu0 0
    %147 = vperm.xlu0 %146, %v44
    %v148 = vpop.permute.xlu0 %147
    %151 = vset.pattern.permute.xlu0 0
    %152 = vperm.xlu0 %151, %v45
    %v153 = vpop.permute.xlu0 %152
    %156 = vset.pattern.permute.xlu0 0
    %157 = vperm.xlu0 %156, %v46
    %v158 = vpop.permute.xlu0 %157
    %161 = vset.pattern.permute.xlu0 0
    %162 = vperm.xlu0 %161, %v47
    %v163 = vpop.permute.xlu0 %162
    %166 = vset.pattern.permute.xlu0 0
    %167 = vperm.xlu0 %166, %v48
    %v168 = vpop.permute.xlu0 %167
    %171 = vset.pattern.permute.xlu0 0
    %172 = vperm.xlu0 %171, %v49
    %v173 = vpop.permute.xlu0 %172
    %176 = vset.pattern.permute.xlu0 0
    %177 = vperm.xlu0 %176, %v50
    %v178 = vpop.permute.xlu0 %177
    %181 = vset.pattern.permute.xlu0 0
    %182 = vperm.xlu0 %181, %v51
    %v183 = vpop.permute.xlu0 %182
    %186 = vset.pattern.permute.xlu0 0
    %187 = vperm.xlu0 %186, %v52
    %v188 = vpop.permute.xlu0 %187
    %191 = vset.pattern.permute.xlu0 0
    %192 = vperm.xlu0 %191, %v53
    %v193 = vpop.permute.xlu0 %192
    %196 = vset.pattern.permute.xlu0 0
    %197 = vperm.xlu0 %196, %v54
    %v198 = vpop.permute.xlu0 %197
    %201 = vset.pattern.permute.xlu0 0
    %202 = vperm.xlu0 %201, %v55
    %v203 = vpop.permute.xlu0 %202
    %206 = vset.pattern.permute.xlu0 0
    %207 = vperm.xlu0 %206, %v56
    %v208 = vpop.permute.xlu0 %207
    %211 = vset.pattern.permute.xlu0 0
    %212 = vperm.xlu0 %211, %v57
    %v213 = vpop.permute.xlu0 %212
    %216 = vset.pattern.permute.xlu0 0
    %217 = vperm.xlu0 %216, %v58
    %v218 = vpop.permute.xlu0 %217
    %221 = vset.pattern.permute.xlu0 0
    %222 = vperm.xlu0 %221, %v59
    %v223 = vpop.permute.xlu0 %222
    %226 = vset.pattern.permute.xlu0 0
    %227 = vperm.xlu0 %226, %v60
    %v228 = vpop.permute.xlu0 %227
    %231 = vset.pattern.permute.xlu0 0
    %232 = vperm.xlu0 %231, %v61
    %v233 = vpop.permute.xlu0 %232
    %236 = vset.pattern.permute.xlu0 0
    %237 = vperm.xlu0 %236, %v62
    %v238 = vpop.permute.xlu0 %237
    %241 = vset.pattern.permute.xlu0 0
    %242 = vperm.xlu0 %241, %v63
    %v243 = vpop.permute.xlu0 %242
    %246 = vset.pattern.permute.xlu0 0
    %247 = vperm.xlu0 %246, %v64
    %v248 = vpop.permute.xlu0 %247
    %251 = vset.pattern.permute.xlu0 0
    %252 = vperm.xlu0 %251, %v65
    %v253 = vpop.permute.xlu0 %252
    %256 = vset.pattern.permute.xlu0 0
    %257 = vperm.xlu0 %256, %v66
    %v258 = vpop.permute.xlu0 %257
    %v261 = vperm.slane %v99, 0
    %v263 = vmul.f32 %v103, %v261
    %v264 = vmul.f32 %v108, %v261
    %v265 = vmul.f32 %v113, %v261
    %v266 = vmul.f32 %v118, %v261
    %v267 = vmul.f32 %v123, %v261
    %v268 = vmul.f32 %v128, %v261
    %v269 = vmul.f32 %v133, %v261
    %v270 = vmul.f32 %v138, %v261
    %v271 = vmul.f32 %v143, %v261
    %v272 = vmul.f32 %v148, %v261
    %v273 = vmul.f32 %v153, %v261
    %v274 = vmul.f32 %v158, %v261
    %v275 = vmul.f32 %v163, %v261
    %v276 = vmul.f32 %v168, %v261
    %v277 = vmul.f32 %v173, %v261
    %v278 = vmul.f32 %v178, %v261
    %v279 = vmul.f32 %v183, %v261
    %v280 = vmul.f32 %v188, %v261
    %v281 = vmul.f32 %v193, %v261
    %v282 = vmul.f32 %v198, %v261
    %v283 = vmul.f32 %v203, %v261
    %v284 = vmul.f32 %v208, %v261
    %v285 = vmul.f32 %v213, %v261
    %v286 = vmul.f32 %v218, %v261
    %v287 = vmul.f32 %v223, %v261
    %v288 = vmul.f32 %v228, %v261
    %v289 = vmul.f32 %v233, %v261
    %v290 = vmul.f32 %v238, %v261
    %v291 = vmul.f32 %v243, %v261
    %v292 = vmul.f32 %v248, %v261
    %v293 = vmul.f32 %v253, %v261
    %v294 = vmul.f32 %v258, %v261
    %296 = vset.pattern.permute.xlu0 0
    %297 = vperm.xlu0 %296, %v67
    %v298 = vpop.permute.xlu0 %297
    %301 = vset.pattern.permute.xlu0 0
    %302 = vperm.xlu0 %301, %v68
    %v303 = vpop.permute.xlu0 %302
    %306 = vset.pattern.permute.xlu0 0
    %307 = vperm.xlu0 %306, %v69
    %v308 = vpop.permute.xlu0 %307
    %311 = vset.pattern.permute.xlu0 0
    %312 = vperm.xlu0 %311, %v70
    %v313 = vpop.permute.xlu0 %312
    %316 = vset.pattern.permute.xlu0 0
    %317 = vperm.xlu0 %316, %v71
    %v318 = vpop.permute.xlu0 %317
    %321 = vset.pattern.permute.xlu0 0
    %322 = vperm.xlu0 %321, %v72
    %v323 = vpop.permute.xlu0 %322
    %326 = vset.pattern.permute.xlu0 0
    %327 = vperm.xlu0 %326, %v73
    %v328 = vpop.permute.xlu0 %327
    %331 = vset.pattern.permute.xlu0 0
    %332 = vperm.xlu0 %331, %v74
    %v333 = vpop.permute.xlu0 %332
    %336 = vset.pattern.permute.xlu0 0
    %337 = vperm.xlu0 %336, %v75
    %v338 = vpop.permute.xlu0 %337
    %341 = vset.pattern.permute.xlu0 0
    %342 = vperm.xlu0 %341, %v76
    %v343 = vpop.permute.xlu0 %342
    %346 = vset.pattern.permute.xlu0 0
    %347 = vperm.xlu0 %346, %v77
    %v348 = vpop.permute.xlu0 %347
    %351 = vset.pattern.permute.xlu0 0
    %352 = vperm.xlu0 %351, %v78
    %v353 = vpop.permute.xlu0 %352
    %356 = vset.pattern.permute.xlu0 0
    %357 = vperm.xlu0 %356, %v79
    %v358 = vpop.permute.xlu0 %357
    %361 = vset.pattern.permute.xlu0 0
    %362 = vperm.xlu0 %361, %v80
    %v363 = vpop.permute.xlu0 %362
    %366 = vset.pattern.permute.xlu0 0
    %367 = vperm.xlu0 %366, %v81
    %v368 = vpop.permute.xlu0 %367
    %371 = vset.pattern.permute.xlu0 0
    %372 = vperm.xlu0 %371, %v82
    %v373 = vpop.permute.xlu0 %372
    %376 = vset.pattern.permute.xlu0 0
    %377 = vperm.xlu0 %376, %v83
    %v378 = vpop.permute.xlu0 %377
    %381 = vset.pattern.permute.xlu0 0
    %382 = vperm.xlu0 %381, %v84
    %v383 = vpop.permute.xlu0 %382
    %386 = vset.pattern.permute.xlu0 0
    %387 = vperm.xlu0 %386, %v85
    %v388 = vpop.permute.xlu0 %387
    %391 = vset.pattern.permute.xlu0 0
    %392 = vperm.xlu0 %391, %v86
    %v393 = vpop.permute.xlu0 %392
    %396 = vset.pattern.permute.xlu0 0
    %397 = vperm.xlu0 %396, %v87
    %v398 = vpop.permute.xlu0 %397
    %401 = vset.pattern.permute.xlu0 0
    %402 = vperm.xlu0 %401, %v88
    %v403 = vpop.permute.xlu0 %402
    %406 = vset.pattern.permute.xlu0 0
    %407 = vperm.xlu0 %406, %v89
    %v408 = vpop.permute.xlu0 %407
    %411 = vset.pattern.permute.xlu0 0
    %412 = vperm.xlu0 %411, %v90
    %v413 = vpop.permute.xlu0 %412
    %416 = vset.pattern.permute.xlu0 0
    %417 = vperm.xlu0 %416, %v91
    %v418 = vpop.permute.xlu0 %417
    %421 = vset.pattern.permute.xlu0 0
    %422 = vperm.xlu0 %421, %v92
    %v423 = vpop.permute.xlu0 %422
    %426 = vset.pattern.permute.xlu0 0
    %427 = vperm.xlu0 %426, %v93
    %v428 = vpop.permute.xlu0 %427
    %431 = vset.pattern.permute.xlu0 0
    %432 = vperm.xlu0 %431, %v94
    %v433 = vpop.permute.xlu0 %432
    %436 = vset.pattern.permute.xlu0 0
    %437 = vperm.xlu0 %436, %v95
    %v438 = vpop.permute.xlu0 %437
    %441 = vset.pattern.permute.xlu0 0
    %442 = vperm.xlu0 %441, %v96
    %v443 = vpop.permute.xlu0 %442
    %446 = vset.pattern.permute.xlu0 0
    %447 = vperm.xlu0 %446, %v97
    %v448 = vpop.permute.xlu0 %447
    %451 = vset.pattern.permute.xlu0 0
    %452 = vperm.xlu0 %451, %v98
    %v453 = vpop.permute.xlu0 %452
    %v455 = vadd.f32 %v263, %v298
    %v456 = vadd.f32 %v264, %v303
    %v457 = vadd.f32 %v265, %v308
    %v458 = vadd.f32 %v266, %v313
    %v459 = vadd.f32 %v267, %v318
    %v460 = vadd.f32 %v268, %v323
    %v461 = vadd.f32 %v269, %v328
    %v462 = vadd.f32 %v270, %v333
    %v463 = vadd.f32 %v271, %v338
    %v464 = vadd.f32 %v272, %v343
    %v465 = vadd.f32 %v273, %v348
    %v466 = vadd.f32 %v274, %v353
    %v467 = vadd.f32 %v275, %v358
    %v468 = vadd.f32 %v276, %v363
    %v469 = vadd.f32 %v277, %v368
    %v470 = vadd.f32 %v278, %v373
    %v471 = vadd.f32 %v279, %v378
    %v472 = vadd.f32 %v280, %v383
    %v473 = vadd.f32 %v281, %v388
    %v474 = vadd.f32 %v282, %v393
    %v475 = vadd.f32 %v283, %v398
    %v476 = vadd.f32 %v284, %v403
    %v477 = vadd.f32 %v285, %v408
    %v478 = vadd.f32 %v286, %v413
    %v479 = vadd.f32 %v287, %v418
    %v480 = vadd.f32 %v288, %v423
    %v481 = vadd.f32 %v289, %v428
    %v482 = vadd.f32 %v290, %v433
    %v483 = vadd.f32 %v291, %v438
    %v484 = vadd.f32 %v292, %v443
    %v485 = vadd.f32 %v293, %v448
    %v486 = vadd.f32 %v294, %v453
    %vm487 = vcmp.ge.f32.partialorder %v455, 0.0
    %vm488 = vcmp.ge.f32.partialorder %v456, 0.0
    %vm489 = vcmp.ge.f32.partialorder %v457, 0.0
    %vm490 = vcmp.ge.f32.partialorder %v458, 0.0
    %vm491 = vcmp.ge.f32.partialorder %v459, 0.0
    %vm492 = vcmp.ge.f32.partialorder %v460, 0.0
    %vm493 = vcmp.ge.f32.partialorder %v461, 0.0
    %vm494 = vcmp.ge.f32.partialorder %v462, 0.0
    %vm495 = vcmp.ge.f32.partialorder %v463, 0.0
    %vm496 = vcmp.ge.f32.partialorder %v464, 0.0
    %vm497 = vcmp.ge.f32.partialorder %v465, 0.0
    %vm498 = vcmp.ge.f32.partialorder %v466, 0.0
    %vm499 = vcmp.ge.f32.partialorder %v467, 0.0
    %vm500 = vcmp.ge.f32.partialorder %v468, 0.0
    %vm501 = vcmp.ge.f32.partialorder %v469, 0.0
    %vm502 = vcmp.ge.f32.partialorder %v470, 0.0
    %vm503 = vcmp.ge.f32.partialorder %v471, 0.0
    %vm504 = vcmp.ge.f32.partialorder %v472, 0.0
    %vm505 = vcmp.ge.f32.partialorder %v473, 0.0
    %vm506 = vcmp.ge.f32.partialorder %v474, 0.0
    %vm507 = vcmp.ge.f32.partialorder %v475, 0.0
    %vm508 = vcmp.ge.f32.partialorder %v476, 0.0
    %vm509 = vcmp.ge.f32.partialorder %v477, 0.0
    %vm510 = vcmp.ge.f32.partialorder %v478, 0.0
    %vm511 = vcmp.ge.f32.partialorder %v479, 0.0
    %vm512 = vcmp.ge.f32.partialorder %v480, 0.0
    %vm513 = vcmp.ge.f32.partialorder %v481, 0.0
    %vm514 = vcmp.ge.f32.partialorder %v482, 0.0
    %vm515 = vcmp.ge.f32.partialorder %v483, 0.0
    %vm516 = vcmp.ge.f32.partialorder %v484, 0.0
    %vm517 = vcmp.ge.f32.partialorder %v485, 0.0
    %vm518 = vcmp.ge.f32.partialorder %v486, 0.0
    %v519 = vmul.f32 %v455, 0.01
    %v520 = vmul.f32 %v456, 0.01
    %v521 = vmul.f32 %v457, 0.01
    %v522 = vmul.f32 %v458, 0.01
    %v523 = vmul.f32 %v459, 0.01
    %v524 = vmul.f32 %v460, 0.01
    %v525 = vmul.f32 %v461, 0.01
    %v526 = vmul.f32 %v462, 0.01
    %v527 = vmul.f32 %v463, 0.01
    %v528 = vmul.f32 %v464, 0.01
    %v529 = vmul.f32 %v465, 0.01
    %v530 = vmul.f32 %v466, 0.01
    %v531 = vmul.f32 %v467, 0.01
    %v532 = vmul.f32 %v468, 0.01
    %v533 = vmul.f32 %v469, 0.01
    %v534 = vmul.f32 %v470, 0.01
    %v535 = vmul.f32 %v471, 0.01
    %v536 = vmul.f32 %v472, 0.01
    %v537 = vmul.f32 %v473, 0.01
    %v538 = vmul.f32 %v474, 0.01
    %v539 = vmul.f32 %v475, 0.01
    %v540 = vmul.f32 %v476, 0.01
    %v541 = vmul.f32 %v477, 0.01
    %v542 = vmul.f32 %v478, 0.01
    %v543 = vmul.f32 %v479, 0.01
    %v544 = vmul.f32 %v480, 0.01
    %v545 = vmul.f32 %v481, 0.01
    %v546 = vmul.f32 %v482, 0.01
    %v547 = vmul.f32 %v483, 0.01
    %v548 = vmul.f32 %v484, 0.01
    %v549 = vmul.f32 %v485, 0.01
    %v550 = vmul.f32 %v486, 0.01
    %v551 = vsel %vm487, %v455, %v519
    %v552 = vsel %vm488, %v456, %v520
    %v553 = vsel %vm489, %v457, %v521
    %v554 = vsel %vm490, %v458, %v522
    %v555 = vsel %vm491, %v459, %v523
    %v556 = vsel %vm492, %v460, %v524
    %v557 = vsel %vm493, %v461, %v525
    %v558 = vsel %vm494, %v462, %v526
    %v559 = vsel %vm495, %v463, %v527
    %v560 = vsel %vm496, %v464, %v528
    %v561 = vsel %vm497, %v465, %v529
    %v562 = vsel %vm498, %v466, %v530
    %v563 = vsel %vm499, %v467, %v531
    %v564 = vsel %vm500, %v468, %v532
    %v565 = vsel %vm501, %v469, %v533
    %v566 = vsel %vm502, %v470, %v534
    %v567 = vsel %vm503, %v471, %v535
    %v568 = vsel %vm504, %v472, %v536
    %v569 = vsel %vm505, %v473, %v537
    %v570 = vsel %vm506, %v474, %v538
    %v571 = vsel %vm507, %v475, %v539
    %v572 = vsel %vm508, %v476, %v540
    %v573 = vsel %vm509, %v477, %v541
    %v574 = vsel %vm510, %v478, %v542
    %v575 = vsel %vm511, %v479, %v543
    %v576 = vsel %vm512, %v480, %v544
    %v577 = vsel %vm513, %v481, %v545
    %v578 = vsel %vm514, %v482, %v546
    %v579 = vsel %vm515, %v483, %v547
    %v580 = vsel %vm516, %v484, %v548
    %v581 = vsel %vm517, %v485, %v549
    %v582 = vsel %vm518, %v486, %v550
    %v583 = vld [vmem:[%s3] sm:$0xff]
    %v584 = vld [vmem:[%s3 + $0x8] sm:$0xff]
    %v585 = vld [vmem:[%s3 + $0x10] sm:$0xff]
    %v586 = vld [vmem:[%s3 + $0x18] sm:$0xff]
    %v587 = vld [vmem:[%s3 + $0x20] sm:$0xff]
    %v588 = vld [vmem:[%s3 + $0x28] sm:$0xff]
    %v589 = vld [vmem:[%s3 + $0x30] sm:$0xff]
    %v590 = vld [vmem:[%s3 + $0x38] sm:$0xff]
    %v591 = vld [vmem:[%s3 + $0x40] sm:$0xff]
    %v592 = vld [vmem:[%s3 + $0x48] sm:$0xff]
    %v593 = vld [vmem:[%s3 + $0x50] sm:$0xff]
    %v594 = vld [vmem:[%s3 + $0x58] sm:$0xff]
    %v595 = vld [vmem:[%s3 + $0x60] sm:$0xff]
    %v596 = vld [vmem:[%s3 + $0x68] sm:$0xff]
    %v597 = vld [vmem:[%s3 + $0x70] sm:$0xff]
    %v598 = vld [vmem:[%s3 + $0x78] sm:$0xff]
    %v599 = vld [vmem:[%s3 + $0x80] sm:$0xff]
    %v600 = vld [vmem:[%s3 + $0x88] sm:$0xff]
    %v601 = vld [vmem:[%s3 + $0x90] sm:$0xff]
    %v602 = vld [vmem:[%s3 + $0x98] sm:$0xff]
    %v603 = vld [vmem:[%s3 + $0xa0] sm:$0xff]
    %v604 = vld [vmem:[%s3 + $0xa8] sm:$0xff]
    %v605 = vld [vmem:[%s3 + $0xb0] sm:$0xff]
    %v606 = vld [vmem:[%s3 + $0xb8] sm:$0xff]
    %v607 = vld [vmem:[%s3 + $0xc0] sm:$0xff]
    %v608 = vld [vmem:[%s3 + $0xc8] sm:$0xff]
    %v609 = vld [vmem:[%s3 + $0xd0] sm:$0xff]
    %v610 = vld [vmem:[%s3 + $0xd8] sm:$0xff]
    %v611 = vld [vmem:[%s3 + $0xe0] sm:$0xff]
    %v612 = vld [vmem:[%s3 + $0xe8] sm:$0xff]
    %v613 = vld [vmem:[%s3 + $0xf0] sm:$0xff]
    %v614 = vld [vmem:[%s3 + $0xf8] sm:$0xff]
    %v615 = vld [vmem:[%s3 + $0x100] sm:$0xff]
    %v616 = vld [vmem:[%s3 + $0x108] sm:$0xff]
    %v617 = vld [vmem:[%s3 + $0x110] sm:$0xff]
    %v618 = vld [vmem:[%s3 + $0x118] sm:$0xff]
    %v619 = vld [vmem:[%s3 + $0x120] sm:$0xff]
    %v620 = vld [vmem:[%s3 + $0x128] sm:$0xff]
    %v621 = vld [vmem:[%s3 + $0x130] sm:$0xff]
    %v622 = vld [vmem:[%s3 + $0x138] sm:$0xff]
    %v623 = vld [vmem:[%s3 + $0x140] sm:$0xff]
    %v624 = vld [vmem:[%s3 + $0x148] sm:$0xff]
    %v625 = vld [vmem:[%s3 + $0x150] sm:$0xff]
    %v626 = vld [vmem:[%s3 + $0x158] sm:$0xff]
    %v627 = vld [vmem:[%s3 + $0x160] sm:$0xff]
    %v628 = vld [vmem:[%s3 + $0x168] sm:$0xff]
    %v629 = vld [vmem:[%s3 + $0x170] sm:$0xff]
    %v630 = vld [vmem:[%s3 + $0x178] sm:$0xff]
    %v631 = vld [vmem:[%s3 + $0x180] sm:$0xff]
    %v632 = vld [vmem:[%s3 + $0x188] sm:$0xff]
    %v633 = vld [vmem:[%s3 + $0x190] sm:$0xff]
    %v634 = vld [vmem:[%s3 + $0x198] sm:$0xff]
    %v635 = vld [vmem:[%s3 + $0x1a0] sm:$0xff]
    %v636 = vld [vmem:[%s3 + $0x1a8] sm:$0xff]
    %v637 = vld [vmem:[%s3 + $0x1b0] sm:$0xff]
    %v638 = vld [vmem:[%s3 + $0x1b8] sm:$0xff]
    %v639 = vld [vmem:[%s3 + $0x1c0] sm:$0xff]
    %v640 = vld [vmem:[%s3 + $0x1c8] sm:$0xff]
    %v641 = vld [vmem:[%s3 + $0x1d0] sm:$0xff]
    %v642 = vld [vmem:[%s3 + $0x1d8] sm:$0xff]
    %v643 = vld [vmem:[%s3 + $0x1e0] sm:$0xff]
    %v644 = vld [vmem:[%s3 + $0x1e8] sm:$0xff]
    %v645 = vld [vmem:[%s3 + $0x1f0] sm:$0xff]
    %v646 = vld [vmem:[%s3 + $0x1f8] sm:$0xff]
    %v647 = vld [vmem:[%s4] sm:$0xff]
    %v648 = vld [vmem:[%s4 + $0x8] sm:$0xff]
    %v649 = vld [vmem:[%s4 + $0x10] sm:$0xff]
    %v650 = vld [vmem:[%s4 + $0x18] sm:$0xff]
    %v651 = vld [vmem:[%s4 + $0x20] sm:$0xff]
    %v652 = vld [vmem:[%s4 + $0x28] sm:$0xff]
    %v653 = vld [vmem:[%s4 + $0x30] sm:$0xff]
    %v654 = vld [vmem:[%s4 + $0x38] sm:$0xff]
    %v655 = vld [vmem:[%s4 + $0x40] sm:$0xff]
    %v656 = vld [vmem:[%s4 + $0x48] sm:$0xff]
    %v657 = vld [vmem:[%s4 + $0x50] sm:$0xff]
    %v658 = vld [vmem:[%s4 + $0x58] sm:$0xff]
    %v659 = vld [vmem:[%s4 + $0x60] sm:$0xff]
    %v660 = vld [vmem:[%s4 + $0x68] sm:$0xff]
    %v661 = vld [vmem:[%s4 + $0x70] sm:$0xff]
    %v662 = vld [vmem:[%s4 + $0x78] sm:$0xff]
    %v663 = vld [vmem:[%s4 + $0x80] sm:$0xff]
    %v664 = vld [vmem:[%s4 + $0x88] sm:$0xff]
    %v665 = vld [vmem:[%s4 + $0x90] sm:$0xff]
    %v666 = vld [vmem:[%s4 + $0x98] sm:$0xff]
    %v667 = vld [vmem:[%s4 + $0xa0] sm:$0xff]
    %v668 = vld [vmem:[%s4 + $0xa8] sm:$0xff]
    %v669 = vld [vmem:[%s4 + $0xb0] sm:$0xff]
    %v670 = vld [vmem:[%s4 + $0xb8] sm:$0xff]
    %v671 = vld [vmem:[%s4 + $0xc0] sm:$0xff]
    %v672 = vld [vmem:[%s4 + $0xc8] sm:$0xff]
    %v673 = vld [vmem:[%s4 + $0xd0] sm:$0xff]
    %v674 = vld [vmem:[%s4 + $0xd8] sm:$0xff]
    %v675 = vld [vmem:[%s4 + $0xe0] sm:$0xff]
    %v676 = vld [vmem:[%s4 + $0xe8] sm:$0xff]
    %v677 = vld [vmem:[%s4 + $0xf0] sm:$0xff]
    %v678 = vld [vmem:[%s4 + $0xf8] sm:$0xff]
    %680 = vset.pattern.permute.xlu0 0
    %681 = vperm.xlu0 %680, %v647
    %v682 = vpop.permute.xlu0 %681
    %685 = vset.pattern.permute.xlu0 0
    %686 = vperm.xlu0 %685, %v648
    %v687 = vpop.permute.xlu0 %686
    %690 = vset.pattern.permute.xlu0 0
    %691 = vperm.xlu0 %690, %v649
    %v692 = vpop.permute.xlu0 %691
    %695 = vset.pattern.permute.xlu0 0
    %696 = vperm.xlu0 %695, %v650
    %v697 = vpop.permute.xlu0 %696
    %700 = vset.pattern.permute.xlu0 0
    %701 = vperm.xlu0 %700, %v651
    %v702 = vpop.permute.xlu0 %701
    %705 = vset.pattern.permute.xlu0 0
    %706 = vperm.xlu0 %705, %v652
    %v707 = vpop.permute.xlu0 %706
    %710 = vset.pattern.permute.xlu0 0
    %711 = vperm.xlu0 %710, %v653
    %v712 = vpop.permute.xlu0 %711
    %715 = vset.pattern.permute.xlu0 0
    %716 = vperm.xlu0 %715, %v654
    %v717 = vpop.permute.xlu0 %716
    %720 = vset.pattern.permute.xlu0 0
    %721 = vperm.xlu0 %720, %v655
    %v722 = vpop.permute.xlu0 %721
    %725 = vset.pattern.permute.xlu0 0
    %726 = vperm.xlu0 %725, %v656
    %v727 = vpop.permute.xlu0 %726
    %730 = vset.pattern.permute.xlu0 0
    %731 = vperm.xlu0 %730, %v657
    %v732 = vpop.permute.xlu0 %731
    %735 = vset.pattern.permute.xlu0 0
    %736 = vperm.xlu0 %735, %v658
    %v737 = vpop.permute.xlu0 %736
    %740 = vset.pattern.permute.xlu0 0
    %741 = vperm.xlu0 %740, %v659
    %v742 = vpop.permute.xlu0 %741
    %745 = vset.pattern.permute.xlu0 0
    %746 = vperm.xlu0 %745, %v660
    %v747 = vpop.permute.xlu0 %746
    %750 = vset.pattern.permute.xlu0 0
    %751 = vperm.xlu0 %750, %v661
    %v752 = vpop.permute.xlu0 %751
    %755 = vset.pattern.permute.xlu0 0
    %756 = vperm.xlu0 %755, %v662
    %v757 = vpop.permute.xlu0 %756
    %760 = vset.pattern.permute.xlu0 0
    %761 = vperm.xlu0 %760, %v663
    %v762 = vpop.permute.xlu0 %761
    %765 = vset.pattern.permute.xlu0 0
    %766 = vperm.xlu0 %765, %v664
    %v767 = vpop.permute.xlu0 %766
    %770 = vset.pattern.permute.xlu0 0
    %771 = vperm.xlu0 %770, %v665
    %v772 = vpop.permute.xlu0 %771
    %775 = vset.pattern.permute.xlu0 0
    %776 = vperm.xlu0 %775, %v666
    %v777 = vpop.permute.xlu0 %776
    %780 = vset.pattern.permute.xlu0 0
    %781 = vperm.xlu0 %780, %v667
    %v782 = vpop.permute.xlu0 %781
    %785 = vset.pattern.permute.xlu0 0
    %786 = vperm.xlu0 %785, %v668
    %v787 = vpop.permute.xlu0 %786
    %790 = vset.pattern.permute.xlu0 0
    %791 = vperm.xlu0 %790, %v669
    %v792 = vpop.permute.xlu0 %791
    %795 = vset.pattern.permute.xlu0 0
    %796 = vperm.xlu0 %795, %v670
    %v797 = vpop.permute.xlu0 %796
    %800 = vset.pattern.permute.xlu0 0
    %801 = vperm.xlu0 %800, %v671
    %v802 = vpop.permute.xlu0 %801
    %805 = vset.pattern.permute.xlu0 0
    %806 = vperm.xlu0 %805, %v672
    %v807 = vpop.permute.xlu0 %806
    %810 = vset.pattern.permute.xlu0 0
    %811 = vperm.xlu0 %810, %v673
    %v812 = vpop.permute.xlu0 %811
    %815 = vset.pattern.permute.xlu0 0
    %816 = vperm.xlu0 %815, %v674
    %v817 = vpop.permute.xlu0 %816
    %820 = vset.pattern.permute.xlu0 0
    %821 = vperm.xlu0 %820, %v675
    %v822 = vpop.permute.xlu0 %821
    %825 = vset.pattern.permute.xlu0 0
    %826 = vperm.xlu0 %825, %v676
    %v827 = vpop.permute.xlu0 %826
    %830 = vset.pattern.permute.xlu0 0
    %831 = vperm.xlu0 %830, %v677
    %v832 = vpop.permute.xlu0 %831
    %835 = vset.pattern.permute.xlu0 0
    %836 = vperm.xlu0 %835, %v678
    %v837 = vpop.permute.xlu0 %836
    %839 = vmatpush.msra.mxu0 %v566
    %840 = vmatpush.msra.mxu0 %v565
    %841 = vmatpush.msra.mxu0 %v564
    %842 = vmatpush.msra.mxu0 %v563
    %843 = vmatpush.msra.mxu0 %v562
    %844 = vmatpush.msra.mxu0 %v561
    %845 = vmatpush.msra.mxu0 %v560
    %846 = vmatpush.msra.mxu0 %v559
    %847 = vmatpush.msra.mxu0 %v558
    %848 = vmatpush.msra.mxu0 %v557
    %849 = vmatpush.msra.mxu0 %v556
    %850 = vmatpush.msra.mxu0 %v555
    %851 = vmatpush.msra.mxu0 %v554
    %852 = vmatpush.msra.mxu0 %v553
    %853 = vmatpush.msra.mxu0 %v552
    %854 = vmatpush.msra.mxu0 %v551
    %855 = vmatmul.f32.gmra.mxu0 %v583
    %v856 = vpop.f32.mrf.mxu0
    %v857 = vadd.f32 %v682, %v856
    %858 = vmatmul.f32.gmra.mxu0 %v585
    %v859 = vpop.f32.mrf.mxu0
    %v860 = vadd.f32 %v687, %v859
    %861 = vmatmul.f32.gmra.mxu0 %v587
    %v862 = vpop.f32.mrf.mxu0
    %v863 = vadd.f32 %v692, %v862
    %864 = vmatmul.f32.gmra.mxu0 %v589
    %v865 = vpop.f32.mrf.mxu0
    %v866 = vadd.f32 %v697, %v865
    %867 = vmatmul.f32.gmra.mxu0 %v591
    %v868 = vpop.f32.mrf.mxu0
    %v869 = vadd.f32 %v702, %v868
    %870 = vmatmul.f32.gmra.mxu0 %v593
    %v871 = vpop.f32.mrf.mxu0
    %v872 = vadd.f32 %v707, %v871
    %873 = vmatmul.f32.gmra.mxu0 %v595
    %v874 = vpop.f32.mrf.mxu0
    %v875 = vadd.f32 %v712, %v874
    %876 = vmatmul.f32.gmra.mxu0 %v597
    %v877 = vpop.f32.mrf.mxu0
    %v878 = vadd.f32 %v717, %v877
    %879 = vmatmul.f32.gmra.mxu0 %v599
    %v880 = vpop.f32.mrf.mxu0
    %v881 = vadd.f32 %v722, %v880
    %882 = vmatmul.f32.gmra.mxu0 %v601
    %v883 = vpop.f32.mrf.mxu0
    %v884 = vadd.f32 %v727, %v883
    %885 = vmatmul.f32.gmra.mxu0 %v603
    %v886 = vpop.f32.mrf.mxu0
    %v887 = vadd.f32 %v732, %v886
    %888 = vmatmul.f32.gmra.mxu0 %v605
    %v889 = vpop.f32.mrf.mxu0
    %v890 = vadd.f32 %v737, %v889
    %891 = vmatmul.f32.gmra.mxu0 %v607
    %v892 = vpop.f32.mrf.mxu0
    %v893 = vadd.f32 %v742, %v892
    %894 = vmatmul.f32.gmra.mxu0 %v609
    %v895 = vpop.f32.mrf.mxu0
    %v896 = vadd.f32 %v747, %v895
    %897 = vmatmul.f32.gmra.mxu0 %v611
    %v898 = vpop.f32.mrf.mxu0
    %v899 = vadd.f32 %v752, %v898
    %900 = vmatmul.f32.gmra.mxu0 %v613
    %v901 = vpop.f32.mrf.mxu0
    %v902 = vadd.f32 %v757, %v901
    %903 = vmatmul.f32.gmra.mxu0 %v615
    %v904 = vpop.f32.mrf.mxu0
    %v905 = vadd.f32 %v762, %v904
    %906 = vmatmul.f32.gmra.mxu0 %v617
    %v907 = vpop.f32.mrf.mxu0
    %v908 = vadd.f32 %v767, %v907
    %909 = vmatmul.f32.gmra.mxu0 %v619
    %v910 = vpop.f32.mrf.mxu0
    %v911 = vadd.f32 %v772, %v910
    %912 = vmatmul.f32.gmra.mxu0 %v621
    %v913 = vpop.f32.mrf.mxu0
    %v914 = vadd.f32 %v777, %v913
    %915 = vmatmul.f32.gmra.mxu0 %v623
    %v916 = vpop.f32.mrf.mxu0
    %v917 = vadd.f32 %v782, %v916
    %918 = vmatmul.f32.gmra.mxu0 %v625
    %v919 = vpop.f32.mrf.mxu0
    %v920 = vadd.f32 %v787, %v919
    %921 = vmatmul.f32.gmra.mxu0 %v627
    %v922 = vpop.f32.mrf.mxu0
    %v923 = vadd.f32 %v792, %v922
    %924 = vmatmul.f32.gmra.mxu0 %v629
    %v925 = vpop.f32.mrf.mxu0
    %v926 = vadd.f32 %v797, %v925
    %927 = vmatmul.f32.gmra.mxu0 %v631
    %v928 = vpop.f32.mrf.mxu0
    %v929 = vadd.f32 %v802, %v928
    %930 = vmatmul.f32.gmra.mxu0 %v633
    %v931 = vpop.f32.mrf.mxu0
    %v932 = vadd.f32 %v807, %v931
    %933 = vmatmul.f32.gmra.mxu0 %v635
    %v934 = vpop.f32.mrf.mxu0
    %v935 = vadd.f32 %v812, %v934
    %936 = vmatmul.f32.gmra.mxu0 %v637
    %v937 = vpop.f32.mrf.mxu0
    %v938 = vadd.f32 %v817, %v937
    %939 = vmatmul.f32.gmra.mxu0 %v639
    %v940 = vpop.f32.mrf.mxu0
    %v941 = vadd.f32 %v822, %v940
    %942 = vmatmul.f32.gmra.mxu0 %v641
    %v943 = vpop.f32.mrf.mxu0
    %v944 = vadd.f32 %v827, %v943
    %945 = vmatmul.f32.gmra.mxu0 %v643
    %v946 = vpop.f32.mrf.mxu0
    %v947 = vadd.f32 %v832, %v946
    %948 = vmatmul.f32.gmra.mxu0 %v645
    %v949 = vpop.f32.mrf.mxu0
    %v950 = vadd.f32 %v837, %v949
    %951 = vdwg.mxu0
    %952 = vmatpush.msra.mxu0 %v582
    %953 = vmatpush.msra.mxu0 %v581
    %954 = vmatpush.msra.mxu0 %v580
    %955 = vmatpush.msra.mxu0 %v579
    %956 = vmatpush.msra.mxu0 %v578
    %957 = vmatpush.msra.mxu0 %v577
    %958 = vmatpush.msra.mxu0 %v576
    %959 = vmatpush.msra.mxu0 %v575
    %960 = vmatpush.msra.mxu0 %v574
    %961 = vmatpush.msra.mxu0 %v573
    %962 = vmatpush.msra.mxu0 %v572
    %963 = vmatpush.msra.mxu0 %v571
    %964 = vmatpush.msra.mxu0 %v570
    %965 = vmatpush.msra.mxu0 %v569
    %966 = vmatpush.msra.mxu0 %v568
    %967 = vmatpush.msra.mxu0 %v567
    %968 = vmatmul.f32.gmra.mxu0 %v584
    %v969 = vpop.f32.mrf.mxu0
    %v970 = vadd.f32 %v857, %v969
    %971 = vmatmul.f32.gmra.mxu0 %v586
    %v972 = vpop.f32.mrf.mxu0
    %v973 = vadd.f32 %v860, %v972
    %974 = vmatmul.f32.gmra.mxu0 %v588
    %v975 = vpop.f32.mrf.mxu0
    %v976 = vadd.f32 %v863, %v975
    %977 = vmatmul.f32.gmra.mxu0 %v590
    %v978 = vpop.f32.mrf.mxu0
    %v979 = vadd.f32 %v866, %v978
    %980 = vmatmul.f32.gmra.mxu0 %v592
    %v981 = vpop.f32.mrf.mxu0
    %v982 = vadd.f32 %v869, %v981
    %983 = vmatmul.f32.gmra.mxu0 %v594
    %v984 = vpop.f32.mrf.mxu0
    %v985 = vadd.f32 %v872, %v984
    %986 = vmatmul.f32.gmra.mxu0 %v596
    %v987 = vpop.f32.mrf.mxu0
    %v988 = vadd.f32 %v875, %v987
    %989 = vmatmul.f32.gmra.mxu0 %v598
    %v990 = vpop.f32.mrf.mxu0
    %v991 = vadd.f32 %v878, %v990
    %992 = vmatmul.f32.gmra.mxu0 %v600
    %v993 = vpop.f32.mrf.mxu0
    %v994 = vadd.f32 %v881, %v993
    %995 = vmatmul.f32.gmra.mxu0 %v602
    %v996 = vpop.f32.mrf.mxu0
    %v997 = vadd.f32 %v884, %v996
    %998 = vmatmul.f32.gmra.mxu0 %v604
    %v999 = vpop.f32.mrf.mxu0
    %v1000 = vadd.f32 %v887, %v999
    %1001 = vmatmul.f32.gmra.mxu0 %v606
    %v1002 = vpop.f32.mrf.mxu0
    %v1003 = vadd.f32 %v890, %v1002
    %1004 = vmatmul.f32.gmra.mxu0 %v608
    %v1005 = vpop.f32.mrf.mxu0
    %v1006 = vadd.f32 %v893, %v1005
    %1007 = vmatmul.f32.gmra.mxu0 %v610
    %v1008 = vpop.f32.mrf.mxu0
    %v1009 = vadd.f32 %v896, %v1008
    %1010 = vmatmul.f32.gmra.mxu0 %v612
    %v1011 = vpop.f32.mrf.mxu0
    %v1012 = vadd.f32 %v899, %v1011
    %1013 = vmatmul.f32.gmra.mxu0 %v614
    %v1014 = vpop.f32.mrf.mxu0
    %v1015 = vadd.f32 %v902, %v1014
    %1016 = vmatmul.f32.gmra.mxu0 %v616
    %v1017 = vpop.f32.mrf.mxu0
    %v1018 = vadd.f32 %v905, %v1017
    %1019 = vmatmul.f32.gmra.mxu0 %v618
    %v1020 = vpop.f32.mrf.mxu0
    %v1021 = vadd.f32 %v908, %v1020
    %1022 = vmatmul.f32.gmra.mxu0 %v620
    %v1023 = vpop.f32.mrf.mxu0
    %v1024 = vadd.f32 %v911, %v1023
    %1025 = vmatmul.f32.gmra.mxu0 %v622
    %v1026 = vpop.f32.mrf.mxu0
    %v1027 = vadd.f32 %v914, %v1026
    %1028 = vmatmul.f32.gmra.mxu0 %v624
    %v1029 = vpop.f32.mrf.mxu0
    %v1030 = vadd.f32 %v917, %v1029
    %1031 = vmatmul.f32.gmra.mxu0 %v626
    %v1032 = vpop.f32.mrf.mxu0
    %v1033 = vadd.f32 %v920, %v1032
    %1034 = vmatmul.f32.gmra.mxu0 %v628
    %v1035 = vpop.f32.mrf.mxu0
    %v1036 = vadd.f32 %v923, %v1035
    %1037 = vmatmul.f32.gmra.mxu0 %v630
    %v1038 = vpop.f32.mrf.mxu0
    %v1039 = vadd.f32 %v926, %v1038
    %1040 = vmatmul.f32.gmra.mxu0 %v632
    %v1041 = vpop.f32.mrf.mxu0
    %v1042 = vadd.f32 %v929, %v1041
    %1043 = vmatmul.f32.gmra.mxu0 %v634
    %v1044 = vpop.f32.mrf.mxu0
    %v1045 = vadd.f32 %v932, %v1044
    %1046 = vmatmul.f32.gmra.mxu0 %v636
    %v1047 = vpop.f32.mrf.mxu0
    %v1048 = vadd.f32 %v935, %v1047
    %1049 = vmatmul.f32.gmra.mxu0 %v638
    %v1050 = vpop.f32.mrf.mxu0
    %v1051 = vadd.f32 %v938, %v1050
    %1052 = vmatmul.f32.gmra.mxu0 %v640
    %v1053 = vpop.f32.mrf.mxu0
    %v1054 = vadd.f32 %v941, %v1053
    %1055 = vmatmul.f32.gmra.mxu0 %v642
    %v1056 = vpop.f32.mrf.mxu0
    %v1057 = vadd.f32 %v944, %v1056
    %1058 = vmatmul.f32.gmra.mxu0 %v644
    %v1059 = vpop.f32.mrf.mxu0
    %v1060 = vadd.f32 %v947, %v1059
    %1061 = vmatmul.f32.gmra.mxu0 %v646
    %v1062 = vpop.f32.mrf.mxu0
    %v1063 = vadd.f32 %v950, %v1062
    %1064 = vdwg.mxu0
    %vm1065 = vcmp.ge.f32.partialorder %v970, 0.0
    %vm1066 = vcmp.ge.f32.partialorder %v973, 0.0
    %vm1067 = vcmp.ge.f32.partialorder %v976, 0.0
    %vm1068 = vcmp.ge.f32.partialorder %v979, 0.0
    %vm1069 = vcmp.ge.f32.partialorder %v982, 0.0
    %vm1070 = vcmp.ge.f32.partialorder %v985, 0.0
    %vm1071 = vcmp.ge.f32.partialorder %v988, 0.0
    %vm1072 = vcmp.ge.f32.partialorder %v991, 0.0
    %vm1073 = vcmp.ge.f32.partialorder %v994, 0.0
    %vm1074 = vcmp.ge.f32.partialorder %v997, 0.0
    %vm1075 = vcmp.ge.f32.partialorder %v1000, 0.0
    %vm1076 = vcmp.ge.f32.partialorder %v1003, 0.0
    %vm1077 = vcmp.ge.f32.partialorder %v1006, 0.0
    %vm1078 = vcmp.ge.f32.partialorder %v1009, 0.0
    %vm1079 = vcmp.ge.f32.partialorder %v1012, 0.0
    %vm1080 = vcmp.ge.f32.partialorder %v1015, 0.0
    %vm1081 = vcmp.ge.f32.partialorder %v1018, 0.0
    %vm1082 = vcmp.ge.f32.partialorder %v1021, 0.0
    %vm1083 = vcmp.ge.f32.partialorder %v1024, 0.0
    %vm1084 = vcmp.ge.f32.partialorder %v1027, 0.0
    %vm1085 = vcmp.ge.f32.partialorder %v1030, 0.0
    %vm1086 = vcmp.ge.f32.partialorder %v1033, 0.0
    %vm1087 = vcmp.ge.f32.partialorder %v1036, 0.0
    %vm1088 = vcmp.ge.f32.partialorder %v1039, 0.0
    %vm1089 = vcmp.ge.f32.partialorder %v1042, 0.0
    %vm1090 = vcmp.ge.f32.partialorder %v1045, 0.0
    %vm1091 = vcmp.ge.f32.partialorder %v1048, 0.0
    %vm1092 = vcmp.ge.f32.partialorder %v1051, 0.0
    %vm1093 = vcmp.ge.f32.partialorder %v1054, 0.0
    %vm1094 = vcmp.ge.f32.partialorder %v1057, 0.0
    %vm1095 = vcmp.ge.f32.partialorder %v1060, 0.0
    %vm1096 = vcmp.ge.f32.partialorder %v1063, 0.0
    %v1097 = vmul.f32 %v970, 0.01
    %v1098 = vmul.f32 %v973, 0.01
    %v1099 = vmul.f32 %v976, 0.01
    %v1100 = vmul.f32 %v979, 0.01
    %v1101 = vmul.f32 %v982, 0.01
    %v1102 = vmul.f32 %v985, 0.01
    %v1103 = vmul.f32 %v988, 0.01
    %v1104 = vmul.f32 %v991, 0.01
    %v1105 = vmul.f32 %v994, 0.01
    %v1106 = vmul.f32 %v997, 0.01
    %v1107 = vmul.f32 %v1000, 0.01
    %v1108 = vmul.f32 %v1003, 0.01
    %v1109 = vmul.f32 %v1006, 0.01
    %v1110 = vmul.f32 %v1009, 0.01
    %v1111 = vmul.f32 %v1012, 0.01
    %v1112 = vmul.f32 %v1015, 0.01
    %v1113 = vmul.f32 %v1018, 0.01
    %v1114 = vmul.f32 %v1021, 0.01
    %v1115 = vmul.f32 %v1024, 0.01
    %v1116 = vmul.f32 %v1027, 0.01
    %v1117 = vmul.f32 %v1030, 0.01
    %v1118 = vmul.f32 %v1033, 0.01
    %v1119 = vmul.f32 %v1036, 0.01
    %v1120 = vmul.f32 %v1039, 0.01
    %v1121 = vmul.f32 %v1042, 0.01
    %v1122 = vmul.f32 %v1045, 0.01
    %v1123 = vmul.f32 %v1048, 0.01
    %v1124 = vmul.f32 %v1051, 0.01
    %v1125 = vmul.f32 %v1054, 0.01
    %v1126 = vmul.f32 %v1057, 0.01
    %v1127 = vmul.f32 %v1060, 0.01
    %v1128 = vmul.f32 %v1063, 0.01
    %v1129 = vsel %vm1065, %v970, %v1097
    %v1130 = vsel %vm1066, %v973, %v1098
    %v1131 = vsel %vm1067, %v976, %v1099
    %v1132 = vsel %vm1068, %v979, %v1100
    %v1133 = vsel %vm1069, %v982, %v1101
    %v1134 = vsel %vm1070, %v985, %v1102
    %v1135 = vsel %vm1071, %v988, %v1103
    %v1136 = vsel %vm1072, %v991, %v1104
    %v1137 = vsel %vm1073, %v994, %v1105
    %v1138 = vsel %vm1074, %v997, %v1106
    %v1139 = vsel %vm1075, %v1000, %v1107
    %v1140 = vsel %vm1076, %v1003, %v1108
    %v1141 = vsel %vm1077, %v1006, %v1109
    %v1142 = vsel %vm1078, %v1009, %v1110
    %v1143 = vsel %vm1079, %v1012, %v1111
    %v1144 = vsel %vm1080, %v1015, %v1112
    %v1145 = vsel %vm1081, %v1018, %v1113
    %v1146 = vsel %vm1082, %v1021, %v1114
    %v1147 = vsel %vm1083, %v1024, %v1115
    %v1148 = vsel %vm1084, %v1027, %v1116
    %v1149 = vsel %vm1085, %v1030, %v1117
    %v1150 = vsel %vm1086, %v1033, %v1118
    %v1151 = vsel %vm1087, %v1036, %v1119
    %v1152 = vsel %vm1088, %v1039, %v1120
    %v1153 = vsel %vm1089, %v1042, %v1121
    %v1154 = vsel %vm1090, %v1045, %v1122
    %v1155 = vsel %vm1091, %v1048, %v1123
    %v1156 = vsel %vm1092, %v1051, %v1124
    %v1157 = vsel %vm1093, %v1054, %v1125
    %v1158 = vsel %vm1094, %v1057, %v1126
    %v1159 = vsel %vm1095, %v1060, %v1127
    %v1160 = vsel %vm1096, %v1063, %v1128
    %v1161 = vld [vmem:[%s5] sm:$0xff]
    %v1162 = vld [vmem:[%s5 + $0x8] sm:$0xff]
    %v1163 = vld [vmem:[%s5 + $0x10] sm:$0xff]
    %v1164 = vld [vmem:[%s5 + $0x18] sm:$0xff]
    %v1165 = vld [vmem:[%s5 + $0x20] sm:$0xff]
    %v1166 = vld [vmem:[%s5 + $0x28] sm:$0xff]
    %v1167 = vld [vmem:[%s5 + $0x30] sm:$0xff]
    %v1168 = vld [vmem:[%s5 + $0x38] sm:$0xff]
    %v1169 = vld [vmem:[%s5 + $0x40] sm:$0xff]
    %v1170 = vld [vmem:[%s5 + $0x48] sm:$0xff]
    %v1171 = vld [vmem:[%s5 + $0x50] sm:$0xff]
    %v1172 = vld [vmem:[%s5 + $0x58] sm:$0xff]
    %v1173 = vld [vmem:[%s5 + $0x60] sm:$0xff]
    %v1174 = vld [vmem:[%s5 + $0x68] sm:$0xff]
    %v1175 = vld [vmem:[%s5 + $0x70] sm:$0xff]
    %v1176 = vld [vmem:[%s5 + $0x78] sm:$0xff]
    %v1177 = vld [vmem:[%s5 + $0x80] sm:$0xff]
    %v1178 = vld [vmem:[%s5 + $0x88] sm:$0xff]
    %v1179 = vld [vmem:[%s5 + $0x90] sm:$0xff]
    %v1180 = vld [vmem:[%s5 + $0x98] sm:$0xff]
    %v1181 = vld [vmem:[%s5 + $0xa0] sm:$0xff]
    %v1182 = vld [vmem:[%s5 + $0xa8] sm:$0xff]
    %v1183 = vld [vmem:[%s5 + $0xb0] sm:$0xff]
    %v1184 = vld [vmem:[%s5 + $0xb8] sm:$0xff]
    %v1185 = vld [vmem:[%s5 + $0xc0] sm:$0xff]
    %v1186 = vld [vmem:[%s5 + $0xc8] sm:$0xff]
    %v1187 = vld [vmem:[%s5 + $0xd0] sm:$0xff]
    %v1188 = vld [vmem:[%s5 + $0xd8] sm:$0xff]
    %v1189 = vld [vmem:[%s5 + $0xe0] sm:$0xff]
    %v1190 = vld [vmem:[%s5 + $0xe8] sm:$0xff]
    %v1191 = vld [vmem:[%s5 + $0xf0] sm:$0xff]
    %v1192 = vld [vmem:[%s5 + $0xf8] sm:$0xff]
    %v1193 = vld [vmem:[%s5 + $0x100] sm:$0xff]
    %v1194 = vld [vmem:[%s5 + $0x108] sm:$0xff]
    %v1195 = vld [vmem:[%s5 + $0x110] sm:$0xff]
    %v1196 = vld [vmem:[%s5 + $0x118] sm:$0xff]
    %v1197 = vld [vmem:[%s5 + $0x120] sm:$0xff]
    %v1198 = vld [vmem:[%s5 + $0x128] sm:$0xff]
    %v1199 = vld [vmem:[%s5 + $0x130] sm:$0xff]
    %v1200 = vld [vmem:[%s5 + $0x138] sm:$0xff]
    %v1201 = vld [vmem:[%s5 + $0x140] sm:$0xff]
    %v1202 = vld [vmem:[%s5 + $0x148] sm:$0xff]
    %v1203 = vld [vmem:[%s5 + $0x150] sm:$0xff]
    %v1204 = vld [vmem:[%s5 + $0x158] sm:$0xff]
    %v1205 = vld [vmem:[%s5 + $0x160] sm:$0xff]
    %v1206 = vld [vmem:[%s5 + $0x168] sm:$0xff]
    %v1207 = vld [vmem:[%s5 + $0x170] sm:$0xff]
    %v1208 = vld [vmem:[%s5 + $0x178] sm:$0xff]
    %v1209 = vld [vmem:[%s5 + $0x180] sm:$0xff]
    %v1210 = vld [vmem:[%s5 + $0x188] sm:$0xff]
    %v1211 = vld [vmem:[%s5 + $0x190] sm:$0xff]
    %v1212 = vld [vmem:[%s5 + $0x198] sm:$0xff]
    %v1213 = vld [vmem:[%s5 + $0x1a0] sm:$0xff]
    %v1214 = vld [vmem:[%s5 + $0x1a8] sm:$0xff]
    %v1215 = vld [vmem:[%s5 + $0x1b0] sm:$0xff]
    %v1216 = vld [vmem:[%s5 + $0x1b8] sm:$0xff]
    %v1217 = vld [vmem:[%s5 + $0x1c0] sm:$0xff]
    %v1218 = vld [vmem:[%s5 + $0x1c8] sm:$0xff]
    %v1219 = vld [vmem:[%s5 + $0x1d0] sm:$0xff]
    %v1220 = vld [vmem:[%s5 + $0x1d8] sm:$0xff]
    %v1221 = vld [vmem:[%s5 + $0x1e0] sm:$0xff]
    %v1222 = vld [vmem:[%s5 + $0x1e8] sm:$0xff]
    %v1223 = vld [vmem:[%s5 + $0x1f0] sm:$0xff]
    %v1224 = vld [vmem:[%s5 + $0x1f8] sm:$0xff]
    %v1225 = vld [vmem:[%s6] sm:$0xff]
    %v1226 = vld [vmem:[%s6 + $0x8] sm:$0xff]
    %v1227 = vld [vmem:[%s6 + $0x10] sm:$0xff]
    %v1228 = vld [vmem:[%s6 + $0x18] sm:$0xff]
    %v1229 = vld [vmem:[%s6 + $0x20] sm:$0xff]
    %v1230 = vld [vmem:[%s6 + $0x28] sm:$0xff]
    %v1231 = vld [vmem:[%s6 + $0x30] sm:$0xff]
    %v1232 = vld [vmem:[%s6 + $0x38] sm:$0xff]
    %v1233 = vld [vmem:[%s6 + $0x40] sm:$0xff]
    %v1234 = vld [vmem:[%s6 + $0x48] sm:$0xff]
    %v1235 = vld [vmem:[%s6 + $0x50] sm:$0xff]
    %v1236 = vld [vmem:[%s6 + $0x58] sm:$0xff]
    %v1237 = vld [vmem:[%s6 + $0x60] sm:$0xff]
    %v1238 = vld [vmem:[%s6 + $0x68] sm:$0xff]
    %v1239 = vld [vmem:[%s6 + $0x70] sm:$0xff]
    %v1240 = vld [vmem:[%s6 + $0x78] sm:$0xff]
    %v1241 = vld [vmem:[%s6 + $0x80] sm:$0xff]
    %v1242 = vld [vmem:[%s6 + $0x88] sm:$0xff]
    %v1243 = vld [vmem:[%s6 + $0x90] sm:$0xff]
    %v1244 = vld [vmem:[%s6 + $0x98] sm:$0xff]
    %v1245 = vld [vmem:[%s6 + $0xa0] sm:$0xff]
    %v1246 = vld [vmem:[%s6 + $0xa8] sm:$0xff]
    %v1247 = vld [vmem:[%s6 + $0xb0] sm:$0xff]
    %v1248 = vld [vmem:[%s6 + $0xb8] sm:$0xff]
    %v1249 = vld [vmem:[%s6 + $0xc0] sm:$0xff]
    %v1250 = vld [vmem:[%s6 + $0xc8] sm:$0xff]
    %v1251 = vld [vmem:[%s6 + $0xd0] sm:$0xff]
    %v1252 = vld [vmem:[%s6 + $0xd8] sm:$0xff]
    %v1253 = vld [vmem:[%s6 + $0xe0] sm:$0xff]
    %v1254 = vld [vmem:[%s6 + $0xe8] sm:$0xff]
    %v1255 = vld [vmem:[%s6 + $0xf0] sm:$0xff]
    %v1256 = vld [vmem:[%s6 + $0xf8] sm:$0xff]
    %1258 = vset.pattern.permute.xlu0 0
    %1259 = vperm.xlu0 %1258, %v1225
    %v1260 = vpop.permute.xlu0 %1259
    %1263 = vset.pattern.permute.xlu0 0
    %1264 = vperm.xlu0 %1263, %v1226
    %v1265 = vpop.permute.xlu0 %1264
    %1268 = vset.pattern.permute.xlu0 0
    %1269 = vperm.xlu0 %1268, %v1227
    %v1270 = vpop.permute.xlu0 %1269
    %1273 = vset.pattern.permute.xlu0 0
    %1274 = vperm.xlu0 %1273, %v1228
    %v1275 = vpop.permute.xlu0 %1274
    %1278 = vset.pattern.permute.xlu0 0
    %1279 = vperm.xlu0 %1278, %v1229
    %v1280 = vpop.permute.xlu0 %1279
    %1283 = vset.pattern.permute.xlu0 0
    %1284 = vperm.xlu0 %1283, %v1230
    %v1285 = vpop.permute.xlu0 %1284
    %1288 = vset.pattern.permute.xlu0 0
    %1289 = vperm.xlu0 %1288, %v1231
    %v1290 = vpop.permute.xlu0 %1289
    %1293 = vset.pattern.permute.xlu0 0
    %1294 = vperm.xlu0 %1293, %v1232
    %v1295 = vpop.permute.xlu0 %1294
    %1298 = vset.pattern.permute.xlu0 0
    %1299 = vperm.xlu0 %1298, %v1233
    %v1300 = vpop.permute.xlu0 %1299
    %1303 = vset.pattern.permute.xlu0 0
    %1304 = vperm.xlu0 %1303, %v1234
    %v1305 = vpop.permute.xlu0 %1304
    %1308 = vset.pattern.permute.xlu0 0
    %1309 = vperm.xlu0 %1308, %v1235
    %v1310 = vpop.permute.xlu0 %1309
    %1313 = vset.pattern.permute.xlu0 0
    %1314 = vperm.xlu0 %1313, %v1236
    %v1315 = vpop.permute.xlu0 %1314
    %1318 = vset.pattern.permute.xlu0 0
    %1319 = vperm.xlu0 %1318, %v1237
    %v1320 = vpop.permute.xlu0 %1319
    %1323 = vset.pattern.permute.xlu0 0
    %1324 = vperm.xlu0 %1323, %v1238
    %v1325 = vpop.permute.xlu0 %1324
    %1328 = vset.pattern.permute.xlu0 0
    %1329 = vperm.xlu0 %1328, %v1239
    %v1330 = vpop.permute.xlu0 %1329
    %1333 = vset.pattern.permute.xlu0 0
    %1334 = vperm.xlu0 %1333, %v1240
    %v1335 = vpop.permute.xlu0 %1334
    %1338 = vset.pattern.permute.xlu0 0
    %1339 = vperm.xlu0 %1338, %v1241
    %v1340 = vpop.permute.xlu0 %1339
    %1343 = vset.pattern.permute.xlu0 0
    %1344 = vperm.xlu0 %1343, %v1242
    %v1345 = vpop.permute.xlu0 %1344
    %1348 = vset.pattern.permute.xlu0 0
    %1349 = vperm.xlu0 %1348, %v1243
    %v1350 = vpop.permute.xlu0 %1349
    %1353 = vset.pattern.permute.xlu0 0
    %1354 = vperm.xlu0 %1353, %v1244
    %v1355 = vpop.permute.xlu0 %1354
    %1358 = vset.pattern.permute.xlu0 0
    %1359 = vperm.xlu0 %1358, %v1245
    %v1360 = vpop.permute.xlu0 %1359
    %1363 = vset.pattern.permute.xlu0 0
    %1364 = vperm.xlu0 %1363, %v1246
    %v1365 = vpop.permute.xlu0 %1364
    %1368 = vset.pattern.permute.xlu0 0
    %1369 = vperm.xlu0 %1368, %v1247
    %v1370 = vpop.permute.xlu0 %1369
    %1373 = vset.pattern.permute.xlu0 0
    %1374 = vperm.xlu0 %1373, %v1248
    %v1375 = vpop.permute.xlu0 %1374
    %1378 = vset.pattern.permute.xlu0 0
    %1379 = vperm.xlu0 %1378, %v1249
    %v1380 = vpop.permute.xlu0 %1379
    %1383 = vset.pattern.permute.xlu0 0
    %1384 = vperm.xlu0 %1383, %v1250
    %v1385 = vpop.permute.xlu0 %1384
    %1388 = vset.pattern.permute.xlu0 0
    %1389 = vperm.xlu0 %1388, %v1251
    %v1390 = vpop.permute.xlu0 %1389
    %1393 = vset.pattern.permute.xlu0 0
    %1394 = vperm.xlu0 %1393, %v1252
    %v1395 = vpop.permute.xlu0 %1394
    %1398 = vset.pattern.permute.xlu0 0
    %1399 = vperm.xlu0 %1398, %v1253
    %v1400 = vpop.permute.xlu0 %1399
    %1403 = vset.pattern.permute.xlu0 0
    %1404 = vperm.xlu0 %1403, %v1254
    %v1405 = vpop.permute.xlu0 %1404
    %1408 = vset.pattern.permute.xlu0 0
    %1409 = vperm.xlu0 %1408, %v1255
    %v1410 = vpop.permute.xlu0 %1409
    %1413 = vset.pattern.permute.xlu0 0
    %1414 = vperm.xlu0 %1413, %v1256
    %v1415 = vpop.permute.xlu0 %1414
    %1417 = vmatpush.msra.mxu0 %v1144
    %1418 = vmatpush.msra.mxu0 %v1143
    %1419 = vmatpush.msra.mxu0 %v1142
    %1420 = vmatpush.msra.mxu0 %v1141
    %1421 = vmatpush.msra.mxu0 %v1140
    %1422 = vmatpush.msra.mxu0 %v1139
    %1423 = vmatpush.msra.mxu0 %v1138
    %1424 = vmatpush.msra.mxu0 %v1137
    %1425 = vmatpush.msra.mxu0 %v1136
    %1426 = vmatpush.msra.mxu0 %v1135
    %1427 = vmatpush.msra.mxu0 %v1134
    %1428 = vmatpush.msra.mxu0 %v1133
    %1429 = vmatpush.msra.mxu0 %v1132
    %1430 = vmatpush.msra.mxu0 %v1131
    %1431 = vmatpush.msra.mxu0 %v1130
    %1432 = vmatpush.msra.mxu0 %v1129
    %1433 = vmatmul.f32.gmra.mxu0 %v1161
    %v1434 = vpop.f32.mrf.mxu0
    %v1435 = vadd.f32 %v1260, %v1434
    %1436 = vmatmul.f32.gmra.mxu0 %v1163
    %v1437 = vpop.f32.mrf.mxu0
    %v1438 = vadd.f32 %v1265, %v1437
    %1439 = vmatmul.f32.gmra.mxu0 %v1165
    %v1440 = vpop.f32.mrf.mxu0
    %v1441 = vadd.f32 %v1270, %v1440
    %1442 = vmatmul.f32.gmra.mxu0 %v1167
    %v1443 = vpop.f32.mrf.mxu0
    %v1444 = vadd.f32 %v1275, %v1443
    %1445 = vmatmul.f32.gmra.mxu0 %v1169
    %v1446 = vpop.f32.mrf.mxu0
    %v1447 = vadd.f32 %v1280, %v1446
    %1448 = vmatmul.f32.gmra.mxu0 %v1171
    %v1449 = vpop.f32.mrf.mxu0
    %v1450 = vadd.f32 %v1285, %v1449
    %1451 = vmatmul.f32.gmra.mxu0 %v1173
    %v1452 = vpop.f32.mrf.mxu0
    %v1453 = vadd.f32 %v1290, %v1452
    %1454 = vmatmul.f32.gmra.mxu0 %v1175
    %v1455 = vpop.f32.mrf.mxu0
    %v1456 = vadd.f32 %v1295, %v1455
    %1457 = vmatmul.f32.gmra.mxu0 %v1177
    %v1458 = vpop.f32.mrf.mxu0
    %v1459 = vadd.f32 %v1300, %v1458
    %1460 = vmatmul.f32.gmra.mxu0 %v1179
    %v1461 = vpop.f32.mrf.mxu0
    %v1462 = vadd.f32 %v1305, %v1461
    %1463 = vmatmul.f32.gmra.mxu0 %v1181
    %v1464 = vpop.f32.mrf.mxu0
    %v1465 = vadd.f32 %v1310, %v1464
    %1466 = vmatmul.f32.gmra.mxu0 %v1183
    %v1467 = vpop.f32.mrf.mxu0
    %v1468 = vadd.f32 %v1315, %v1467
    %1469 = vmatmul.f32.gmra.mxu0 %v1185
    %v1470 = vpop.f32.mrf.mxu0
    %v1471 = vadd.f32 %v1320, %v1470
    %1472 = vmatmul.f32.gmra.mxu0 %v1187
    %v1473 = vpop.f32.mrf.mxu0
    %v1474 = vadd.f32 %v1325, %v1473
    %1475 = vmatmul.f32.gmra.mxu0 %v1189
    %v1476 = vpop.f32.mrf.mxu0
    %v1477 = vadd.f32 %v1330, %v1476
    %1478 = vmatmul.f32.gmra.mxu0 %v1191
    %v1479 = vpop.f32.mrf.mxu0
    %v1480 = vadd.f32 %v1335, %v1479
    %1481 = vmatmul.f32.gmra.mxu0 %v1193
    %v1482 = vpop.f32.mrf.mxu0
    %v1483 = vadd.f32 %v1340, %v1482
    %1484 = vmatmul.f32.gmra.mxu0 %v1195
    %v1485 = vpop.f32.mrf.mxu0
    %v1486 = vadd.f32 %v1345, %v1485
    %1487 = vmatmul.f32.gmra.mxu0 %v1197
    %v1488 = vpop.f32.mrf.mxu0
    %v1489 = vadd.f32 %v1350, %v1488
    %1490 = vmatmul.f32.gmra.mxu0 %v1199
    %v1491 = vpop.f32.mrf.mxu0
    %v1492 = vadd.f32 %v1355, %v1491
    %1493 = vmatmul.f32.gmra.mxu0 %v1201
    %v1494 = vpop.f32.mrf.mxu0
    %v1495 = vadd.f32 %v1360, %v1494
    %1496 = vmatmul.f32.gmra.mxu0 %v1203
    %v1497 = vpop.f32.mrf.mxu0
    %v1498 = vadd.f32 %v1365, %v1497
    %1499 = vmatmul.f32.gmra.mxu0 %v1205
    %v1500 = vpop.f32.mrf.mxu0
    %v1501 = vadd.f32 %v1370, %v1500
    %1502 = vmatmul.f32.gmra.mxu0 %v1207
    %v1503 = vpop.f32.mrf.mxu0
    %v1504 = vadd.f32 %v1375, %v1503
    %1505 = vmatmul.f32.gmra.mxu0 %v1209
    %v1506 = vpop.f32.mrf.mxu0
    %v1507 = vadd.f32 %v1380, %v1506
    %1508 = vmatmul.f32.gmra.mxu0 %v1211
    %v1509 = vpop.f32.mrf.mxu0
    %v1510 = vadd.f32 %v1385, %v1509
    %1511 = vmatmul.f32.gmra.mxu0 %v1213
    %v1512 = vpop.f32.mrf.mxu0
    %v1513 = vadd.f32 %v1390, %v1512
    %1514 = vmatmul.f32.gmra.mxu0 %v1215
    %v1515 = vpop.f32.mrf.mxu0
    %v1516 = vadd.f32 %v1395, %v1515
    %1517 = vmatmul.f32.gmra.mxu0 %v1217
    %v1518 = vpop.f32.mrf.mxu0
    %v1519 = vadd.f32 %v1400, %v1518
    %1520 = vmatmul.f32.gmra.mxu0 %v1219
    %v1521 = vpop.f32.mrf.mxu0
    %v1522 = vadd.f32 %v1405, %v1521
    %1523 = vmatmul.f32.gmra.mxu0 %v1221
    %v1524 = vpop.f32.mrf.mxu0
    %v1525 = vadd.f32 %v1410, %v1524
    %1526 = vmatmul.f32.gmra.mxu0 %v1223
    %v1527 = vpop.f32.mrf.mxu0
    %v1528 = vadd.f32 %v1415, %v1527
    %1529 = vdwg.mxu0
    %1530 = vmatpush.msra.mxu0 %v1160
    %1531 = vmatpush.msra.mxu0 %v1159
    %1532 = vmatpush.msra.mxu0 %v1158
    %1533 = vmatpush.msra.mxu0 %v1157
    %1534 = vmatpush.msra.mxu0 %v1156
    %1535 = vmatpush.msra.mxu0 %v1155
    %1536 = vmatpush.msra.mxu0 %v1154
    %1537 = vmatpush.msra.mxu0 %v1153
    %1538 = vmatpush.msra.mxu0 %v1152
    %1539 = vmatpush.msra.mxu0 %v1151
    %1540 = vmatpush.msra.mxu0 %v1150
    %1541 = vmatpush.msra.mxu0 %v1149
    %1542 = vmatpush.msra.mxu0 %v1148
    %1543 = vmatpush.msra.mxu0 %v1147
    %1544 = vmatpush.msra.mxu0 %v1146
    %1545 = vmatpush.msra.mxu0 %v1145
    %1546 = vmatmul.f32.gmra.mxu0 %v1162
    %v1547 = vpop.f32.mrf.mxu0
    %v1548 = vadd.f32 %v1435, %v1547
    %1549 = vmatmul.f32.gmra.mxu0 %v1164
    %v1550 = vpop.f32.mrf.mxu0
    %v1551 = vadd.f32 %v1438, %v1550
    %1552 = vmatmul.f32.gmra.mxu0 %v1166
    %v1553 = vpop.f32.mrf.mxu0
    %v1554 = vadd.f32 %v1441, %v1553
    %1555 = vmatmul.f32.gmra.mxu0 %v1168
    %v1556 = vpop.f32.mrf.mxu0
    %v1557 = vadd.f32 %v1444, %v1556
    %1558 = vmatmul.f32.gmra.mxu0 %v1170
    %v1559 = vpop.f32.mrf.mxu0
    %v1560 = vadd.f32 %v1447, %v1559
    %1561 = vmatmul.f32.gmra.mxu0 %v1172
    %v1562 = vpop.f32.mrf.mxu0
    %v1563 = vadd.f32 %v1450, %v1562
    %1564 = vmatmul.f32.gmra.mxu0 %v1174
    %v1565 = vpop.f32.mrf.mxu0
    %v1566 = vadd.f32 %v1453, %v1565
    %1567 = vmatmul.f32.gmra.mxu0 %v1176
    %v1568 = vpop.f32.mrf.mxu0
    %v1569 = vadd.f32 %v1456, %v1568
    %1570 = vmatmul.f32.gmra.mxu0 %v1178
    %v1571 = vpop.f32.mrf.mxu0
    %v1572 = vadd.f32 %v1459, %v1571
    %1573 = vmatmul.f32.gmra.mxu0 %v1180
    %v1574 = vpop.f32.mrf.mxu0
    %v1575 = vadd.f32 %v1462, %v1574
    %1576 = vmatmul.f32.gmra.mxu0 %v1182
    %v1577 = vpop.f32.mrf.mxu0
    %v1578 = vadd.f32 %v1465, %v1577
    %1579 = vmatmul.f32.gmra.mxu0 %v1184
    %v1580 = vpop.f32.mrf.mxu0
    %v1581 = vadd.f32 %v1468, %v1580
    %1582 = vmatmul.f32.gmra.mxu0 %v1186
    %v1583 = vpop.f32.mrf.mxu0
    %v1584 = vadd.f32 %v1471, %v1583
    %1585 = vmatmul.f32.gmra.mxu0 %v1188
    %v1586 = vpop.f32.mrf.mxu0
    %v1587 = vadd.f32 %v1474, %v1586
    %1588 = vmatmul.f32.gmra.mxu0 %v1190
    %v1589 = vpop.f32.mrf.mxu0
    %v1590 = vadd.f32 %v1477, %v1589
    %1591 = vmatmul.f32.gmra.mxu0 %v1192
    %v1592 = vpop.f32.mrf.mxu0
    %v1593 = vadd.f32 %v1480, %v1592
    %1594 = vmatmul.f32.gmra.mxu0 %v1194
    %v1595 = vpop.f32.mrf.mxu0
    %v1596 = vadd.f32 %v1483, %v1595
    %1597 = vmatmul.f32.gmra.mxu0 %v1196
    %v1598 = vpop.f32.mrf.mxu0
    %v1599 = vadd.f32 %v1486, %v1598
    %1600 = vmatmul.f32.gmra.mxu0 %v1198
    %v1601 = vpop.f32.mrf.mxu0
    %v1602 = vadd.f32 %v1489, %v1601
    %1603 = vmatmul.f32.gmra.mxu0 %v1200
    %v1604 = vpop.f32.mrf.mxu0
    %v1605 = vadd.f32 %v1492, %v1604
    %1606 = vmatmul.f32.gmra.mxu0 %v1202
    %v1607 = vpop.f32.mrf.mxu0
    %v1608 = vadd.f32 %v1495, %v1607
    %1609 = vmatmul.f32.gmra.mxu0 %v1204
    %v1610 = vpop.f32.mrf.mxu0
    %v1611 = vadd.f32 %v1498, %v1610
    %1612 = vmatmul.f32.gmra.mxu0 %v1206
    %v1613 = vpop.f32.mrf.mxu0
    %v1614 = vadd.f32 %v1501, %v1613
    %1615 = vmatmul.f32.gmra.mxu0 %v1208
    %v1616 = vpop.f32.mrf.mxu0
    %v1617 = vadd.f32 %v1504, %v1616
    %1618 = vmatmul.f32.gmra.mxu0 %v1210
    %v1619 = vpop.f32.mrf.mxu0
    %v1620 = vadd.f32 %v1507, %v1619
    %1621 = vmatmul.f32.gmra.mxu0 %v1212
    %v1622 = vpop.f32.mrf.mxu0
    %v1623 = vadd.f32 %v1510, %v1622
    %1624 = vmatmul.f32.gmra.mxu0 %v1214
    %v1625 = vpop.f32.mrf.mxu0
    %v1626 = vadd.f32 %v1513, %v1625
    %1627 = vmatmul.f32.gmra.mxu0 %v1216
    %v1628 = vpop.f32.mrf.mxu0
    %v1629 = vadd.f32 %v1516, %v1628
    %1630 = vmatmul.f32.gmra.mxu0 %v1218
    %v1631 = vpop.f32.mrf.mxu0
    %v1632 = vadd.f32 %v1519, %v1631
    %1633 = vmatmul.f32.gmra.mxu0 %v1220
    %v1634 = vpop.f32.mrf.mxu0
    %v1635 = vadd.f32 %v1522, %v1634
    %1636 = vmatmul.f32.gmra.mxu0 %v1222
    %v1637 = vpop.f32.mrf.mxu0
    %v1638 = vadd.f32 %v1525, %v1637
    %1639 = vmatmul.f32.gmra.mxu0 %v1224
    %v1640 = vpop.f32.mrf.mxu0
    %v1641 = vadd.f32 %v1528, %v1640
    %1642 = vdwg.mxu0
    %vm1643 = vcmp.ge.f32.partialorder %v1548, 0.0
    %vm1644 = vcmp.ge.f32.partialorder %v1551, 0.0
    %vm1645 = vcmp.ge.f32.partialorder %v1554, 0.0
    %vm1646 = vcmp.ge.f32.partialorder %v1557, 0.0
    %vm1647 = vcmp.ge.f32.partialorder %v1560, 0.0
    %vm1648 = vcmp.ge.f32.partialorder %v1563, 0.0
    %vm1649 = vcmp.ge.f32.partialorder %v1566, 0.0
    %vm1650 = vcmp.ge.f32.partialorder %v1569, 0.0
    %vm1651 = vcmp.ge.f32.partialorder %v1572, 0.0
    %vm1652 = vcmp.ge.f32.partialorder %v1575, 0.0
    %vm1653 = vcmp.ge.f32.partialorder %v1578, 0.0
    %vm1654 = vcmp.ge.f32.partialorder %v1581, 0.0
    %vm1655 = vcmp.ge.f32.partialorder %v1584, 0.0
    %vm1656 = vcmp.ge.f32.partialorder %v1587, 0.0
    %vm1657 = vcmp.ge.f32.partialorder %v1590, 0.0
    %vm1658 = vcmp.ge.f32.partialorder %v1593, 0.0
    %vm1659 = vcmp.ge.f32.partialorder %v1596, 0.0
    %vm1660 = vcmp.ge.f32.partialorder %v1599, 0.0
    %vm1661 = vcmp.ge.f32.partialorder %v1602, 0.0
    %vm1662 = vcmp.ge.f32.partialorder %v1605, 0.0
    %vm1663 = vcmp.ge.f32.partialorder %v1608, 0.0
    %vm1664 = vcmp.ge.f32.partialorder %v1611, 0.0
    %vm1665 = vcmp.ge.f32.partialorder %v1614, 0.0
    %vm1666 = vcmp.ge.f32.partialorder %v1617, 0.0
    %vm1667 = vcmp.ge.f32.partialorder %v1620, 0.0
    %vm1668 = vcmp.ge.f32.partialorder %v1623, 0.0
    %vm1669 = vcmp.ge.f32.partialorder %v1626, 0.0
    %vm1670 = vcmp.ge.f32.partialorder %v1629, 0.0
    %vm1671 = vcmp.ge.f32.partialorder %v1632, 0.0
    %vm1672 = vcmp.ge.f32.partialorder %v1635, 0.0
    %vm1673 = vcmp.ge.f32.partialorder %v1638, 0.0
    %vm1674 = vcmp.ge.f32.partialorder %v1641, 0.0
    %v1675 = vmul.f32 %v1548, 0.01
    %v1676 = vmul.f32 %v1551, 0.01
    %v1677 = vmul.f32 %v1554, 0.01
    %v1678 = vmul.f32 %v1557, 0.01
    %v1679 = vmul.f32 %v1560, 0.01
    %v1680 = vmul.f32 %v1563, 0.01
    %v1681 = vmul.f32 %v1566, 0.01
    %v1682 = vmul.f32 %v1569, 0.01
    %v1683 = vmul.f32 %v1572, 0.01
    %v1684 = vmul.f32 %v1575, 0.01
    %v1685 = vmul.f32 %v1578, 0.01
    %v1686 = vmul.f32 %v1581, 0.01
    %v1687 = vmul.f32 %v1584, 0.01
    %v1688 = vmul.f32 %v1587, 0.01
    %v1689 = vmul.f32 %v1590, 0.01
    %v1690 = vmul.f32 %v1593, 0.01
    %v1691 = vmul.f32 %v1596, 0.01
    %v1692 = vmul.f32 %v1599, 0.01
    %v1693 = vmul.f32 %v1602, 0.01
    %v1694 = vmul.f32 %v1605, 0.01
    %v1695 = vmul.f32 %v1608, 0.01
    %v1696 = vmul.f32 %v1611, 0.01
    %v1697 = vmul.f32 %v1614, 0.01
    %v1698 = vmul.f32 %v1617, 0.01
    %v1699 = vmul.f32 %v1620, 0.01
    %v1700 = vmul.f32 %v1623, 0.01
    %v1701 = vmul.f32 %v1626, 0.01
    %v1702 = vmul.f32 %v1629, 0.01
    %v1703 = vmul.f32 %v1632, 0.01
    %v1704 = vmul.f32 %v1635, 0.01
    %v1705 = vmul.f32 %v1638, 0.01
    %v1706 = vmul.f32 %v1641, 0.01
    %v1707 = vsel %vm1643, %v1548, %v1675
    %v1708 = vsel %vm1644, %v1551, %v1676
    %v1709 = vsel %vm1645, %v1554, %v1677
    %v1710 = vsel %vm1646, %v1557, %v1678
    %v1711 = vsel %vm1647, %v1560, %v1679
    %v1712 = vsel %vm1648, %v1563, %v1680
    %v1713 = vsel %vm1649, %v1566, %v1681
    %v1714 = vsel %vm1650, %v1569, %v1682
    %v1715 = vsel %vm1651, %v1572, %v1683
    %v1716 = vsel %vm1652, %v1575, %v1684
    %v1717 = vsel %vm1653, %v1578, %v1685
    %v1718 = vsel %vm1654, %v1581, %v1686
    %v1719 = vsel %vm1655, %v1584, %v1687
    %v1720 = vsel %vm1656, %v1587, %v1688
    %v1721 = vsel %vm1657, %v1590, %v1689
    %v1722 = vsel %vm1658, %v1593, %v1690
    %v1723 = vsel %vm1659, %v1596, %v1691
    %v1724 = vsel %vm1660, %v1599, %v1692
    %v1725 = vsel %vm1661, %v1602, %v1693
    %v1726 = vsel %vm1662, %v1605, %v1694
    %v1727 = vsel %vm1663, %v1608, %v1695
    %v1728 = vsel %vm1664, %v1611, %v1696
    %v1729 = vsel %vm1665, %v1614, %v1697
    %v1730 = vsel %vm1666, %v1617, %v1698
    %v1731 = vsel %vm1667, %v1620, %v1699
    %v1732 = vsel %vm1668, %v1623, %v1700
    %v1733 = vsel %vm1669, %v1626, %v1701
    %v1734 = vsel %vm1670, %v1629, %v1702
    %v1735 = vsel %vm1671, %v1632, %v1703
    %v1736 = vsel %vm1672, %v1635, %v1704
    %v1737 = vsel %vm1673, %v1638, %v1705
    %v1738 = vsel %vm1674, %v1641, %v1706
    %v1739 = vld [vmem:[%s7] sm:$0xff]
    %v1740 = vld [vmem:[%s7 + $0x8] sm:$0xff]
    %v1741 = vld [vmem:[%s7 + $0x10] sm:$0xff]
    %v1742 = vld [vmem:[%s7 + $0x18] sm:$0xff]
    %v1743 = vld [vmem:[%s7 + $0x20] sm:$0xff]
    %v1744 = vld [vmem:[%s7 + $0x28] sm:$0xff]
    %v1745 = vld [vmem:[%s7 + $0x30] sm:$0xff]
    %v1746 = vld [vmem:[%s7 + $0x38] sm:$0xff]
    %v1747 = vld [vmem:[%s7 + $0x40] sm:$0xff]
    %v1748 = vld [vmem:[%s7 + $0x48] sm:$0xff]
    %v1749 = vld [vmem:[%s7 + $0x50] sm:$0xff]
    %v1750 = vld [vmem:[%s7 + $0x58] sm:$0xff]
    %v1751 = vld [vmem:[%s7 + $0x60] sm:$0xff]
    %v1752 = vld [vmem:[%s7 + $0x68] sm:$0xff]
    %v1753 = vld [vmem:[%s7 + $0x70] sm:$0xff]
    %v1754 = vld [vmem:[%s7 + $0x78] sm:$0xff]
    %v1755 = vld [vmem:[%s7 + $0x80] sm:$0xff]
    %v1756 = vld [vmem:[%s7 + $0x88] sm:$0xff]
    %v1757 = vld [vmem:[%s7 + $0x90] sm:$0xff]
    %v1758 = vld [vmem:[%s7 + $0x98] sm:$0xff]
    %v1759 = vld [vmem:[%s7 + $0xa0] sm:$0xff]
    %v1760 = vld [vmem:[%s7 + $0xa8] sm:$0xff]
    %v1761 = vld [vmem:[%s7 + $0xb0] sm:$0xff]
    %v1762 = vld [vmem:[%s7 + $0xb8] sm:$0xff]
    %v1763 = vld [vmem:[%s7 + $0xc0] sm:$0xff]
    %v1764 = vld [vmem:[%s7 + $0xc8] sm:$0xff]
    %v1765 = vld [vmem:[%s7 + $0xd0] sm:$0xff]
    %v1766 = vld [vmem:[%s7 + $0xd8] sm:$0xff]
    %v1767 = vld [vmem:[%s7 + $0xe0] sm:$0xff]
    %v1768 = vld [vmem:[%s7 + $0xe8] sm:$0xff]
    %v1769 = vld [vmem:[%s7 + $0xf0] sm:$0xff]
    %v1770 = vld [vmem:[%s7 + $0xf8] sm:$0xff]
    %v1771 = vld [vmem:[#allocation2] sm:$0x1]
    %1773 = vset.pattern.permute.xlu0 0
    %1774 = vperm.xlu0 %1773, %v1739
    %v1775 = vpop.permute.xlu0 %1774
    %1778 = vset.pattern.permute.xlu0 0
    %1779 = vperm.xlu0 %1778, %v1740
    %v1780 = vpop.permute.xlu0 %1779
    %1783 = vset.pattern.permute.xlu0 0
    %1784 = vperm.xlu0 %1783, %v1741
    %v1785 = vpop.permute.xlu0 %1784
    %1788 = vset.pattern.permute.xlu0 0
    %1789 = vperm.xlu0 %1788, %v1742
    %v1790 = vpop.permute.xlu0 %1789
    %1793 = vset.pattern.permute.xlu0 0
    %1794 = vperm.xlu0 %1793, %v1743
    %v1795 = vpop.permute.xlu0 %1794
    %1798 = vset.pattern.permute.xlu0 0
    %1799 = vperm.xlu0 %1798, %v1744
    %v1800 = vpop.permute.xlu0 %1799
    %1803 = vset.pattern.permute.xlu0 0
    %1804 = vperm.xlu0 %1803, %v1745
    %v1805 = vpop.permute.xlu0 %1804
    %1808 = vset.pattern.permute.xlu0 0
    %1809 = vperm.xlu0 %1808, %v1746
    %v1810 = vpop.permute.xlu0 %1809
    %1813 = vset.pattern.permute.xlu0 0
    %1814 = vperm.xlu0 %1813, %v1747
    %v1815 = vpop.permute.xlu0 %1814
    %1818 = vset.pattern.permute.xlu0 0
    %1819 = vperm.xlu0 %1818, %v1748
    %v1820 = vpop.permute.xlu0 %1819
    %1823 = vset.pattern.permute.xlu0 0
    %1824 = vperm.xlu0 %1823, %v1749
    %v1825 = vpop.permute.xlu0 %1824
    %1828 = vset.pattern.permute.xlu0 0
    %1829 = vperm.xlu0 %1828, %v1750
    %v1830 = vpop.permute.xlu0 %1829
    %1833 = vset.pattern.permute.xlu0 0
    %1834 = vperm.xlu0 %1833, %v1751
    %v1835 = vpop.permute.xlu0 %1834
    %1838 = vset.pattern.permute.xlu0 0
    %1839 = vperm.xlu0 %1838, %v1752
    %v1840 = vpop.permute.xlu0 %1839
    %1843 = vset.pattern.permute.xlu0 0
    %1844 = vperm.xlu0 %1843, %v1753
    %v1845 = vpop.permute.xlu0 %1844
    %1848 = vset.pattern.permute.xlu0 0
    %1849 = vperm.xlu0 %1848, %v1754
    %v1850 = vpop.permute.xlu0 %1849
    %1853 = vset.pattern.permute.xlu0 0
    %1854 = vperm.xlu0 %1853, %v1755
    %v1855 = vpop.permute.xlu0 %1854
    %1858 = vset.pattern.permute.xlu0 0
    %1859 = vperm.xlu0 %1858, %v1756
    %v1860 = vpop.permute.xlu0 %1859
    %1863 = vset.pattern.permute.xlu0 0
    %1864 = vperm.xlu0 %1863, %v1757
    %v1865 = vpop.permute.xlu0 %1864
    %1868 = vset.pattern.permute.xlu0 0
    %1869 = vperm.xlu0 %1868, %v1758
    %v1870 = vpop.permute.xlu0 %1869
    %1873 = vset.pattern.permute.xlu0 0
    %1874 = vperm.xlu0 %1873, %v1759
    %v1875 = vpop.permute.xlu0 %1874
    %1878 = vset.pattern.permute.xlu0 0
    %1879 = vperm.xlu0 %1878, %v1760
    %v1880 = vpop.permute.xlu0 %1879
    %1883 = vset.pattern.permute.xlu0 0
    %1884 = vperm.xlu0 %1883, %v1761
    %v1885 = vpop.permute.xlu0 %1884
    %1888 = vset.pattern.permute.xlu0 0
    %1889 = vperm.xlu0 %1888, %v1762
    %v1890 = vpop.permute.xlu0 %1889
    %1893 = vset.pattern.permute.xlu0 0
    %1894 = vperm.xlu0 %1893, %v1763
    %v1895 = vpop.permute.xlu0 %1894
    %1898 = vset.pattern.permute.xlu0 0
    %1899 = vperm.xlu0 %1898, %v1764
    %v1900 = vpop.permute.xlu0 %1899
    %1903 = vset.pattern.permute.xlu0 0
    %1904 = vperm.xlu0 %1903, %v1765
    %v1905 = vpop.permute.xlu0 %1904
    %1908 = vset.pattern.permute.xlu0 0
    %1909 = vperm.xlu0 %1908, %v1766
    %v1910 = vpop.permute.xlu0 %1909
    %1913 = vset.pattern.permute.xlu0 0
    %1914 = vperm.xlu0 %1913, %v1767
    %v1915 = vpop.permute.xlu0 %1914
    %1918 = vset.pattern.permute.xlu0 0
    %1919 = vperm.xlu0 %1918, %v1768
    %v1920 = vpop.permute.xlu0 %1919
    %1923 = vset.pattern.permute.xlu0 0
    %1924 = vperm.xlu0 %1923, %v1769
    %v1925 = vpop.permute.xlu0 %1924
    %1928 = vset.pattern.permute.xlu0 0
    %1929 = vperm.xlu0 %1928, %v1770
    %v1930 = vpop.permute.xlu0 %1929
    %v1932 = vmul.f32 %v1775, %v1707
    %v1933 = vmul.f32 %v1780, %v1708
    %v1934 = vmul.f32 %v1785, %v1709
    %v1935 = vmul.f32 %v1790, %v1710
    %v1936 = vmul.f32 %v1795, %v1711
    %v1937 = vmul.f32 %v1800, %v1712
    %v1938 = vmul.f32 %v1805, %v1713
    %v1939 = vmul.f32 %v1810, %v1714
    %v1940 = vmul.f32 %v1815, %v1715
    %v1941 = vmul.f32 %v1820, %v1716
    %v1942 = vmul.f32 %v1825, %v1717
    %v1943 = vmul.f32 %v1830, %v1718
    %v1944 = vmul.f32 %v1835, %v1719
    %v1945 = vmul.f32 %v1840, %v1720
    %v1946 = vmul.f32 %v1845, %v1721
    %v1947 = vmul.f32 %v1850, %v1722
    %v1948 = vmul.f32 %v1855, %v1723
    %v1949 = vmul.f32 %v1860, %v1724
    %v1950 = vmul.f32 %v1865, %v1725
    %v1951 = vmul.f32 %v1870, %v1726
    %v1952 = vmul.f32 %v1875, %v1727
    %v1953 = vmul.f32 %v1880, %v1728
    %v1954 = vmul.f32 %v1885, %v1729
    %v1955 = vmul.f32 %v1890, %v1730
    %v1956 = vmul.f32 %v1895, %v1731
    %v1957 = vmul.f32 %v1900, %v1732
    %v1958 = vmul.f32 %v1905, %v1733
    %v1959 = vmul.f32 %v1910, %v1734
    %v1960 = vmul.f32 %v1915, %v1735
    %v1961 = vmul.f32 %v1920, %v1736
    %v1962 = vmul.f32 %v1925, %v1737
    %v1963 = vmul.f32 %v1930, %v1738
    %v1964 = vadd.f32 %v1932, %v1933
    %v1965 = vadd.f32 %v1964, %v1934
    %v1966 = vadd.f32 %v1965, %v1935
    %v1967 = vadd.f32 %v1966, %v1936
    %v1968 = vadd.f32 %v1967, %v1937
    %v1969 = vadd.f32 %v1968, %v1938
    %v1970 = vadd.f32 %v1969, %v1939
    %v1971 = vadd.f32 %v1970, %v1940
    %v1972 = vadd.f32 %v1971, %v1941
    %v1973 = vadd.f32 %v1972, %v1942
    %v1974 = vadd.f32 %v1973, %v1943
    %v1975 = vadd.f32 %v1974, %v1944
    %v1976 = vadd.f32 %v1975, %v1945
    %v1977 = vadd.f32 %v1976, %v1946
    %v1978 = vadd.f32 %v1977, %v1947
    %v1979 = vadd.f32 %v1978, %v1948
    %v1980 = vadd.f32 %v1979, %v1949
    %v1981 = vadd.f32 %v1980, %v1950
    %v1982 = vadd.f32 %v1981, %v1951
    %v1983 = vadd.f32 %v1982, %v1952
    %v1984 = vadd.f32 %v1983, %v1953
    %v1985 = vadd.f32 %v1984, %v1954
    %v1986 = vadd.f32 %v1985, %v1955
    %v1987 = vadd.f32 %v1986, %v1956
    %v1988 = vadd.f32 %v1987, %v1957
    %v1989 = vadd.f32 %v1988, %v1958
    %v1990 = vadd.f32 %v1989, %v1959
    %v1991 = vadd.f32 %v1990, %v1960
    %v1992 = vadd.f32 %v1991, %v1961
    %v1993 = vadd.f32 %v1992, %v1962
    %v1994 = vadd.f32 %v1993, %v1963
    %v1995 = vrot.slane %v1994, 4
    %v1996 = vadd.f32 %v1994, %v1995
    %v1997 = vrot.slane %v1996, 2
    %v1998 = vadd.f32 %v1996, %v1997
    %v1999 = vrot.slane %v1998, 1
    %v2000 = vadd.f32 %v1998, %v1999
    %2002 = vset.pattern.permute.xlu0 0
    %2003 = vperm.xlu0 %2002, %v1771
    %v2004 = vpop.permute.xlu0 %2003
    %v2006 = vperm.slane %v2004, 0
    %v2007 = vadd.f32 %v2000, %v2006
    %2008 = vst [vmem:[#allocation3] sm:$0x1] %v2007
    // Predicated region
    $region38: #{tpu_custom_call.1} parent=1 // pred_check
      _
    $region39: #{tpu_custom_call.1} parent=1 // pred_check_branch
      %2010 = sbr.rel (0) target = $region41
    $region40: #{tpu_custom_call.1} parent=1 // pred_region
      %2012 = vsyncadd [#allocation4], 0
      %s2014 = sshll.u32 [#allocation3], 4
      %s2015 = int_to_ptr.vmem [resolvable:$true] %s2014
      %s2016 = sshll.u32 %s9, 4
      %s2017 = int_to_ptr.hbm [resolvable:$true] %s2016
      %2019 = dma.vmem_to_hbm [thread:$0]  %s2015, 16, %s2017, [#allocation4]
    $region41: #{tpu_custom_call.1} parent=1 // pred_fallthru
      _
    // Predicated region
    $region42: #{tpu_custom_call.1} parent=1 // pred_check
      _
    $region43: #{tpu_custom_call.1} parent=1 // pred_check_branch
      %2021 = sbr.rel (0) target = $region45
    $region44: #{tpu_custom_call.1} parent=1 // pred_region
      %2023 = dma.done [#allocation4], 16
    $region45: #{tpu_custom_call.1} parent=1 // pred_fallthru
      _
    %2024 = vsyncpa [#allocation4], 1

// kernel: tpu_custom_call.1
$region0: #{tpu_custom_call.1}
  #allocation0 [shape = 'u32[]', space=smem, size = 0x4, offset = 0x4, fixed_abs, tag = 'smem constant byte address 0x4 - core index']
  #allocation1 [shape = 'u32[72,128]{1,0:T(1,128)}', space=vmem, size = 0x9000, scoped, tag = 'internal scratch']
  #allocation2 [shape = 'f32[1,1]{1,0:T(1,128)S(1)}', space=vmem, size = 0x200, scoped, tag = 'scoped memory for tpu_custom_call.1']
  %s0 = inlined_call_operand.vmem [shape: f32[1,128], index: 0, kind: input, shape index: {}]
  %s1 = inlined_call_operand.vmem [shape: f32[256,1], index: 1, kind: input, shape index: {}]
  %s2 = inlined_call_operand.vmem [shape: f32[256,1], index: 2, kind: input, shape index: {}]
  %s3 = inlined_call_operand.vmem [shape: f32[256,256], index: 3, kind: input, shape index: {}]
  %s4 = inlined_call_operand.vmem [shape: f32[256,1], index: 4, kind: input, shape index: {}]
  %s5 = inlined_call_operand.vmem [shape: f32[256,256], index: 5, kind: input, shape index: {}]
  %s6 = inlined_call_operand.vmem [shape: f32[256,1], index: 6, kind: input, shape index: {}]
  %s7 = inlined_call_operand.vmem [shape: f32[256,1], index: 7, kind: input, shape index: {}]
  %s8 = inlined_call_operand.<no memory space> [shape: f32[1,1], index: 8, kind: input, shape index: {}]
  %s9 = inlined_call_operand.hbm [shape: f32[1,128], index: 9, kind: output, shape index: {}]
  %s10 = sld [smem:[#allocation0]]
  $region46: #{tpu_custom_call.1} parent=0
    _
  %s12 = ssub.s32 1, %s10
  %s13 = scalar_select 0, %s12, %s10
  %v14 = vstv %s8
  %15 = vst [vmem:[#allocation2] sm:$0x1] %v14
  $region1: #{tpu_custom_call.1} parent=0
    #allocation3 [shape = 'u8[512]{0}', space=vmem, size = 0x400, scoped, tag = 'output window, operand 0, single buffered']
    #allocation4 [shape = 's32[1]{0}', space=sflag, size = 0x4, scoped, tag = 'scoped memory for tpu_custom_call.1']
    %16 = vsyncpa [#allocation4], 0
    // Predicated region
    $region2: #{tpu_custom_call.1} parent=1 // pred_check
      _
    $region3: #{tpu_custom_call.1} parent=1 // pred_check_branch
      %18 = sbr.rel (0) target = $region5
    $region4: #{tpu_custom_call.1} parent=1 // pred_region
      _
    $region5: #{tpu_custom_call.1} parent=1 // pred_fallthru
      _
    // Predicated region
    $region6: #{tpu_custom_call.1} parent=1 // pred_check
      _
    $region7: #{tpu_custom_call.1} parent=1 // pred_check_branch
      %20 = sbr.rel (0) target = $region9
    $region8: #{tpu_custom_call.1} parent=1 // pred_region
      _
    $region9: #{tpu_custom_call.1} parent=1 // pred_fallthru
      _
    // Predicated region
    $region10: #{tpu_custom_call.1} parent=1 // pred_check
      _
    $region11: #{tpu_custom_call.1} parent=1 // pred_check_branch
      %22 = sbr.rel (0) target = $region13
    $region12: #{tpu_custom_call.1} parent=1 // pred_region
      _
    $region13: #{tpu_custom_call.1} parent=1 // pred_fallthru
      _
    // Predicated region
    $region14: #{tpu_custom_call.1} parent=1 // pred_check
      _
    $region15: #{tpu_custom_call.1} parent=1 // pred_check_branch
      %24 = sbr.rel (0) target = $region17
    $region16: #{tpu_custom_call.1} parent=1 // pred_region
      _
    $region17: #{tpu_custom_call.1} parent=1 // pred_fallthru
      _
    // Predicated region
    $region18: #{tpu_custom_call.1} parent=1 // pred_check
      _
    $region19: #{tpu_custom_call.1} parent=1 // pred_check_branch
      %26 = sbr.rel (0) target = $region21
    $region20: #{tpu_custom_call.1} parent=1 // pred_region
      _
    $region21: #{tpu_custom_call.1} parent=1 // pred_fallthru
      _
    // Predicated region
    $region22: #{tpu_custom_call.1} parent=1 // pred_check
      _
    $region23: #{tpu_custom_call.1} parent=1 // pred_check_branch
      %28 = sbr.rel (0) target = $region25
    $region24: #{tpu_custom_call.1} parent=1 // pred_region
      _
    $region25: #{tpu_custom_call.1} parent=1 // pred_fallthru
      _
    // Predicated region
    $region26: #{tpu_custom_call.1} parent=1 // pred_check
      _
    $region27: #{tpu_custom_call.1} parent=1 // pred_check_branch
      %30 = sbr.rel (0) target = $region29
    $region28: #{tpu_custom_call.1} parent=1 // pred_region
      _
    $region29: #{tpu_custom_call.1} parent=1 // pred_fallthru
      _
    // Predicated region
    $region30: #{tpu_custom_call.1} parent=1 // pred_check
      _
    $region31: #{tpu_custom_call.1} parent=1 // pred_check_branch
      %32 = sbr.rel (0) target = $region33
    $region32: #{tpu_custom_call.1} parent=1 // pred_region
      _
    $region33: #{tpu_custom_call.1} parent=1 // pred_fallthru
      _
    // Predicated region
    $region34: #{tpu_custom_call.1} parent=1 // pred_check
      _
    $region35: #{tpu_custom_call.1} parent=1 // pred_check_branch
      %34 = sbr.rel (0) target = $region37
    $region36: #{tpu_custom_call.1} parent=1 // pred_region
      _
    $region37: #{tpu_custom_call.1} parent=1 // pred_fallthru
      _
    %v35 = vld [vmem:[%s1] sm:$0xff]
    %v36 = vld [vmem:[%s1 + $0x8] sm:$0xff]
    %v37 = vld [vmem:[%s1 + $0x10] sm:$0xff]
    %v38 = vld [vmem:[%s1 + $0x18] sm:$0xff]
    %v39 = vld [vmem:[%s1 + $0x20] sm:$0xff]
    %v40 = vld [vmem:[%s1 + $0x28] sm:$0xff]
    %v41 = vld [vmem:[%s1 + $0x30] sm:$0xff]
    %v42 = vld [vmem:[%s1 + $0x38] sm:$0xff]
    %v43 = vld [vmem:[%s1 + $0x40] sm:$0xff]
    %v44 = vld [vmem:[%s1 + $0x48] sm:$0xff]
    %v45 = vld [vmem:[%s1 + $0x50] sm:$0xff]
    %v46 = vld [vmem:[%s1 + $0x58] sm:$0xff]
    %v47 = vld [vmem:[%s1 + $0x60] sm:$0xff]
    %v48 = vld [vmem:[%s1 + $0x68] sm:$0xff]
    %v49 = vld [vmem:[%s1 + $0x70] sm:$0xff]
    %v50 = vld [vmem:[%s1 + $0x78] sm:$0xff]
    %v51 = vld [vmem:[%s1 + $0x80] sm:$0xff]
    %v52 = vld [vmem:[%s1 + $0x88] sm:$0xff]
    %v53 = vld [vmem:[%s1 + $0x90] sm:$0xff]
    %v54 = vld [vmem:[%s1 + $0x98] sm:$0xff]
    %v55 = vld [vmem:[%s1 + $0xa0] sm:$0xff]
    %v56 = vld [vmem:[%s1 + $0xa8] sm:$0xff]
    %v57 = vld [vmem:[%s1 + $0xb0] sm:$0xff]
    %v58 = vld [vmem:[%s1 + $0xb8] sm:$0xff]
    %v59 = vld [vmem:[%s1 + $0xc0] sm:$0xff]
    %v60 = vld [vmem:[%s1 + $0xc8] sm:$0xff]
    %v61 = vld [vmem:[%s1 + $0xd0] sm:$0xff]
    %v62 = vld [vmem:[%s1 + $0xd8] sm:$0xff]
    %v63 = vld [vmem:[%s1 + $0xe0] sm:$0xff]
    %v64 = vld [vmem:[%s1 + $0xe8] sm:$0xff]
    %v65 = vld [vmem:[%s1 + $0xf0] sm:$0xff]
    %v66 = vld [vmem:[%s1 + $0xf8] sm:$0xff]
    %v67 = vld [vmem:[%s2] sm:$0xff]
    %v68 = vld [vmem:[%s2 + $0x8] sm:$0xff]
    %v69 = vld [vmem:[%s2 + $0x10] sm:$0xff]
    %v70 = vld [vmem:[%s2 + $0x18] sm:$0xff]
    %v71 = vld [vmem:[%s2 + $0x20] sm:$0xff]
    %v72 = vld [vmem:[%s2 + $0x28] sm:$0xff]
    %v73 = vld [vmem:[%s2 + $0x30] sm:$0xff]
    %v74 = vld [vmem:[%s2 + $0x38] sm:$0xff]
    %v75 = vld [vmem:[%s2 + $0x40] sm:$0xff]
    %v76 = vld [vmem:[%s2 + $0x48] sm:$0xff]
    %v77 = vld [vmem:[%s2 + $0x50] sm:$0xff]
    %v78 = vld [vmem:[%s2 + $0x58] sm:$0xff]
    %v79 = vld [vmem:[%s2 + $0x60] sm:$0xff]
    %v80 = vld [vmem:[%s2 + $0x68] sm:$0xff]
    %v81 = vld [vmem:[%s2 + $0x70] sm:$0xff]
    %v82 = vld [vmem:[%s2 + $0x78] sm:$0xff]
    %v83 = vld [vmem:[%s2 + $0x80] sm:$0xff]
    %v84 = vld [vmem:[%s2 + $0x88] sm:$0xff]
    %v85 = vld [vmem:[%s2 + $0x90] sm:$0xff]
    %v86 = vld [vmem:[%s2 + $0x98] sm:$0xff]
    %v87 = vld [vmem:[%s2 + $0xa0] sm:$0xff]
    %v88 = vld [vmem:[%s2 + $0xa8] sm:$0xff]
    %v89 = vld [vmem:[%s2 + $0xb0] sm:$0xff]
    %v90 = vld [vmem:[%s2 + $0xb8] sm:$0xff]
    %v91 = vld [vmem:[%s2 + $0xc0] sm:$0xff]
    %v92 = vld [vmem:[%s2 + $0xc8] sm:$0xff]
    %v93 = vld [vmem:[%s2 + $0xd0] sm:$0xff]
    %v94 = vld [vmem:[%s2 + $0xd8] sm:$0xff]
    %v95 = vld [vmem:[%s2 + $0xe0] sm:$0xff]
    %v96 = vld [vmem:[%s2 + $0xe8] sm:$0xff]
    %v97 = vld [vmem:[%s2 + $0xf0] sm:$0xff]
    %v98 = vld [vmem:[%s2 + $0xf8] sm:$0xff]
    %v99 = vld [vmem:[%s0] sm:$0x1]
    %101 = vset.pattern.permute.xlu0 0
    %102 = vperm.xlu0 %101, %v35
    %v103 = vpop.permute.xlu0 %102
    %106 = vset.pattern.permute.xlu0 0
    %107 = vperm.xlu0 %106, %v36
    %v108 = vpop.permute.xlu0 %107
    %111 = vset.pattern.permute.xlu0 0
    %112 = vperm.xlu0 %111, %v37
    %v113 = vpop.permute.xlu0 %112
    %116 = vset.pattern.permute.xlu0 0
    %117 = vperm.xlu0 %116, %v38
    %v118 = vpop.permute.xlu0 %117
    %121 = vset.pattern.permute.xlu0 0
    %122 = vperm.xlu0 %121, %v39
    %v123 = vpop.permute.xlu0 %122
    %126 = vset.pattern.permute.xlu0 0
    %127 = vperm.xlu0 %126, %v40
    %v128 = vpop.permute.xlu0 %127
    %131 = vset.pattern.permute.xlu0 0
    %132 = vperm.xlu0 %131, %v41
    %v133 = vpop.permute.xlu0 %132
    %136 = vset.pattern.permute.xlu0 0
    %137 = vperm.xlu0 %136, %v42
    %v138 = vpop.permute.xlu0 %137
    %141 = vset.pattern.permute.xlu0 0
    %142 = vperm.xlu0 %141, %v43
    %v143 = vpop.permute.xlu0 %142
    %146 = vset.pattern.permute.xlu0 0
    %147 = vperm.xlu0 %146, %v44
    %v148 = vpop.permute.xlu0 %147
    %151 = vset.pattern.permute.xlu0 0
    %152 = vperm.xlu0 %151, %v45
    %v153 = vpop.permute.xlu0 %152
    %156 = vset.pattern.permute.xlu0 0
    %157 = vperm.xlu0 %156, %v46
    %v158 = vpop.permute.xlu0 %157
    %161 = vset.pattern.permute.xlu0 0
    %162 = vperm.xlu0 %161, %v47
    %v163 = vpop.permute.xlu0 %162
    %166 = vset.pattern.permute.xlu0 0
    %167 = vperm.xlu0 %166, %v48
    %v168 = vpop.permute.xlu0 %167
    %171 = vset.pattern.permute.xlu0 0
    %172 = vperm.xlu0 %171, %v49
    %v173 = vpop.permute.xlu0 %172
    %176 = vset.pattern.permute.xlu0 0
    %177 = vperm.xlu0 %176, %v50
    %v178 = vpop.permute.xlu0 %177
    %181 = vset.pattern.permute.xlu0 0
    %182 = vperm.xlu0 %181, %v51
    %v183 = vpop.permute.xlu0 %182
    %186 = vset.pattern.permute.xlu0 0
    %187 = vperm.xlu0 %186, %v52
    %v188 = vpop.permute.xlu0 %187
    %191 = vset.pattern.permute.xlu0 0
    %192 = vperm.xlu0 %191, %v53
    %v193 = vpop.permute.xlu0 %192
    %196 = vset.pattern.permute.xlu0 0
    %197 = vperm.xlu0 %196, %v54
    %v198 = vpop.permute.xlu0 %197
    %201 = vset.pattern.permute.xlu0 0
    %202 = vperm.xlu0 %201, %v55
    %v203 = vpop.permute.xlu0 %202
    %206 = vset.pattern.permute.xlu0 0
    %207 = vperm.xlu0 %206, %v56
    %v208 = vpop.permute.xlu0 %207
    %211 = vset.pattern.permute.xlu0 0
    %212 = vperm.xlu0 %211, %v57
    %v213 = vpop.permute.xlu0 %212
    %216 = vset.pattern.permute.xlu0 0
    %217 = vperm.xlu0 %216, %v58
    %v218 = vpop.permute.xlu0 %217
    %221 = vset.pattern.permute.xlu0 0
    %222 = vperm.xlu0 %221, %v59
    %v223 = vpop.permute.xlu0 %222
    %226 = vset.pattern.permute.xlu0 0
    %227 = vperm.xlu0 %226, %v60
    %v228 = vpop.permute.xlu0 %227
    %231 = vset.pattern.permute.xlu0 0
    %232 = vperm.xlu0 %231, %v61
    %v233 = vpop.permute.xlu0 %232
    %236 = vset.pattern.permute.xlu0 0
    %237 = vperm.xlu0 %236, %v62
    %v238 = vpop.permute.xlu0 %237
    %241 = vset.pattern.permute.xlu0 0
    %242 = vperm.xlu0 %241, %v63
    %v243 = vpop.permute.xlu0 %242
    %246 = vset.pattern.permute.xlu0 0
    %247 = vperm.xlu0 %246, %v64
    %v248 = vpop.permute.xlu0 %247
    %251 = vset.pattern.permute.xlu0 0
    %252 = vperm.xlu0 %251, %v65
    %v253 = vpop.permute.xlu0 %252
    %256 = vset.pattern.permute.xlu0 0
    %257 = vperm.xlu0 %256, %v66
    %v258 = vpop.permute.xlu0 %257
    %v261 = vperm.slane %v99, 0
    %v263 = vmul.f32 %v103, %v261
    %v264 = vmul.f32 %v108, %v261
    %v265 = vmul.f32 %v113, %v261
    %v266 = vmul.f32 %v118, %v261
    %v267 = vmul.f32 %v123, %v261
    %v268 = vmul.f32 %v128, %v261
    %v269 = vmul.f32 %v133, %v261
    %v270 = vmul.f32 %v138, %v261
    %v271 = vmul.f32 %v143, %v261
    %v272 = vmul.f32 %v148, %v261
    %v273 = vmul.f32 %v153, %v261
    %v274 = vmul.f32 %v158, %v261
    %v275 = vmul.f32 %v163, %v261
    %v276 = vmul.f32 %v168, %v261
    %v277 = vmul.f32 %v173, %v261
    %v278 = vmul.f32 %v178, %v261
    %v279 = vmul.f32 %v183, %v261
    %v280 = vmul.f32 %v188, %v261
    %v281 = vmul.f32 %v193, %v261
    %v282 = vmul.f32 %v198, %v261
    %v283 = vmul.f32 %v203, %v261
    %v284 = vmul.f32 %v208, %v261
    %v285 = vmul.f32 %v213, %v261
    %v286 = vmul.f32 %v218, %v261
    %v287 = vmul.f32 %v223, %v261
    %v288 = vmul.f32 %v228, %v261
    %v289 = vmul.f32 %v233, %v261
    %v290 = vmul.f32 %v238, %v261
    %v291 = vmul.f32 %v243, %v261
    %v292 = vmul.f32 %v248, %v261
    %v293 = vmul.f32 %v253, %v261
    %v294 = vmul.f32 %v258, %v261
    %296 = vset.pattern.permute.xlu0 0
    %297 = vperm.xlu0 %296, %v67
    %v298 = vpop.permute.xlu0 %297
    %301 = vset.pattern.permute.xlu0 0
    %302 = vperm.xlu0 %301, %v68
    %v303 = vpop.permute.xlu0 %302
    %306 = vset.pattern.permute.xlu0 0
    %307 = vperm.xlu0 %306, %v69
    %v308 = vpop.permute.xlu0 %307
    %311 = vset.pattern.permute.xlu0 0
    %312 = vperm.xlu0 %311, %v70
    %v313 = vpop.permute.xlu0 %312
    %316 = vset.pattern.permute.xlu0 0
    %317 = vperm.xlu0 %316, %v71
    %v318 = vpop.permute.xlu0 %317
    %321 = vset.pattern.permute.xlu0 0
    %322 = vperm.xlu0 %321, %v72
    %v323 = vpop.permute.xlu0 %322
    %326 = vset.pattern.permute.xlu0 0
    %327 = vperm.xlu0 %326, %v73
    %v328 = vpop.permute.xlu0 %327
    %331 = vset.pattern.permute.xlu0 0
    %332 = vperm.xlu0 %331, %v74
    %v333 = vpop.permute.xlu0 %332
    %336 = vset.pattern.permute.xlu0 0
    %337 = vperm.xlu0 %336, %v75
    %v338 = vpop.permute.xlu0 %337
    %341 = vset.pattern.permute.xlu0 0
    %342 = vperm.xlu0 %341, %v76
    %v343 = vpop.permute.xlu0 %342
    %346 = vset.pattern.permute.xlu0 0
    %347 = vperm.xlu0 %346, %v77
    %v348 = vpop.permute.xlu0 %347
    %351 = vset.pattern.permute.xlu0 0
    %352 = vperm.xlu0 %351, %v78
    %v353 = vpop.permute.xlu0 %352
    %356 = vset.pattern.permute.xlu0 0
    %357 = vperm.xlu0 %356, %v79
    %v358 = vpop.permute.xlu0 %357
    %361 = vset.pattern.permute.xlu0 0
    %362 = vperm.xlu0 %361, %v80
    %v363 = vpop.permute.xlu0 %362
    %366 = vset.pattern.permute.xlu0 0
    %367 = vperm.xlu0 %366, %v81
    %v368 = vpop.permute.xlu0 %367
    %371 = vset.pattern.permute.xlu0 0
    %372 = vperm.xlu0 %371, %v82
    %v373 = vpop.permute.xlu0 %372
    %376 = vset.pattern.permute.xlu0 0
    %377 = vperm.xlu0 %376, %v83
    %v378 = vpop.permute.xlu0 %377
    %381 = vset.pattern.permute.xlu0 0
    %382 = vperm.xlu0 %381, %v84
    %v383 = vpop.permute.xlu0 %382
    %386 = vset.pattern.permute.xlu0 0
    %387 = vperm.xlu0 %386, %v85
    %v388 = vpop.permute.xlu0 %387
    %391 = vset.pattern.permute.xlu0 0
    %392 = vperm.xlu0 %391, %v86
    %v393 = vpop.permute.xlu0 %392
    %396 = vset.pattern.permute.xlu0 0
    %397 = vperm.xlu0 %396, %v87
    %v398 = vpop.permute.xlu0 %397
    %401 = vset.pattern.permute.xlu0 0
    %402 = vperm.xlu0 %401, %v88
    %v403 = vpop.permute.xlu0 %402
    %406 = vset.pattern.permute.xlu0 0
    %407 = vperm.xlu0 %406, %v89
    %v408 = vpop.permute.xlu0 %407
    %411 = vset.pattern.permute.xlu0 0
    %412 = vperm.xlu0 %411, %v90
    %v413 = vpop.permute.xlu0 %412
    %416 = vset.pattern.permute.xlu0 0
    %417 = vperm.xlu0 %416, %v91
    %v418 = vpop.permute.xlu0 %417
    %421 = vset.pattern.permute.xlu0 0
    %422 = vperm.xlu0 %421, %v92
    %v423 = vpop.permute.xlu0 %422
    %426 = vset.pattern.permute.xlu0 0
    %427 = vperm.xlu0 %426, %v93
    %v428 = vpop.permute.xlu0 %427
    %431 = vset.pattern.permute.xlu0 0
    %432 = vperm.xlu0 %431, %v94
    %v433 = vpop.permute.xlu0 %432
    %436 = vset.pattern.permute.xlu0 0
    %437 = vperm.xlu0 %436, %v95
    %v438 = vpop.permute.xlu0 %437
    %441 = vset.pattern.permute.xlu0 0
    %442 = vperm.xlu0 %441, %v96
    %v443 = vpop.permute.xlu0 %442
    %446 = vset.pattern.permute.xlu0 0
    %447 = vperm.xlu0 %446, %v97
    %v448 = vpop.permute.xlu0 %447
    %451 = vset.pattern.permute.xlu0 0
    %452 = vperm.xlu0 %451, %v98
    %v453 = vpop.permute.xlu0 %452
    %v455 = vadd.f32 %v263, %v298
    %v456 = vadd.f32 %v264, %v303
    %v457 = vadd.f32 %v265, %v308
    %v458 = vadd.f32 %v266, %v313
    %v459 = vadd.f32 %v267, %v318
    %v460 = vadd.f32 %v268, %v323
    %v461 = vadd.f32 %v269, %v328
    %v462 = vadd.f32 %v270, %v333
    %v463 = vadd.f32 %v271, %v338
    %v464 = vadd.f32 %v272, %v343
    %v465 = vadd.f32 %v273, %v348
    %v466 = vadd.f32 %v274, %v353
    %v467 = vadd.f32 %v275, %v358
    %v468 = vadd.f32 %v276, %v363
    %v469 = vadd.f32 %v277, %v368
    %v470 = vadd.f32 %v278, %v373
    %v471 = vadd.f32 %v279, %v378
    %v472 = vadd.f32 %v280, %v383
    %v473 = vadd.f32 %v281, %v388
    %v474 = vadd.f32 %v282, %v393
    %v475 = vadd.f32 %v283, %v398
    %v476 = vadd.f32 %v284, %v403
    %v477 = vadd.f32 %v285, %v408
    %v478 = vadd.f32 %v286, %v413
    %v479 = vadd.f32 %v287, %v418
    %v480 = vadd.f32 %v288, %v423
    %v481 = vadd.f32 %v289, %v428
    %v482 = vadd.f32 %v290, %v433
    %v483 = vadd.f32 %v291, %v438
    %v484 = vadd.f32 %v292, %v443
    %v485 = vadd.f32 %v293, %v448
    %v486 = vadd.f32 %v294, %v453
    %vm487 = vcmp.ge.f32.partialorder %v455, 0.0
    %vm488 = vcmp.ge.f32.partialorder %v456, 0.0
    %vm489 = vcmp.ge.f32.partialorder %v457, 0.0
    %vm490 = vcmp.ge.f32.partialorder %v458, 0.0
    %vm491 = vcmp.ge.f32.partialorder %v459, 0.0
    %vm492 = vcmp.ge.f32.partialorder %v460, 0.0
    %vm493 = vcmp.ge.f32.partialorder %v461, 0.0
    %vm494 = vcmp.ge.f32.partialorder %v462, 0.0
    %vm495 = vcmp.ge.f32.partialorder %v463, 0.0
    %vm496 = vcmp.ge.f32.partialorder %v464, 0.0
    %vm497 = vcmp.ge.f32.partialorder %v465, 0.0
    %vm498 = vcmp.ge.f32.partialorder %v466, 0.0
    %vm499 = vcmp.ge.f32.partialorder %v467, 0.0
    %vm500 = vcmp.ge.f32.partialorder %v468, 0.0
    %vm501 = vcmp.ge.f32.partialorder %v469, 0.0
    %vm502 = vcmp.ge.f32.partialorder %v470, 0.0
    %vm503 = vcmp.ge.f32.partialorder %v471, 0.0
    %vm504 = vcmp.ge.f32.partialorder %v472, 0.0
    %vm505 = vcmp.ge.f32.partialorder %v473, 0.0
    %vm506 = vcmp.ge.f32.partialorder %v474, 0.0
    %vm507 = vcmp.ge.f32.partialorder %v475, 0.0
    %vm508 = vcmp.ge.f32.partialorder %v476, 0.0
    %vm509 = vcmp.ge.f32.partialorder %v477, 0.0
    %vm510 = vcmp.ge.f32.partialorder %v478, 0.0
    %vm511 = vcmp.ge.f32.partialorder %v479, 0.0
    %vm512 = vcmp.ge.f32.partialorder %v480, 0.0
    %vm513 = vcmp.ge.f32.partialorder %v481, 0.0
    %vm514 = vcmp.ge.f32.partialorder %v482, 0.0
    %vm515 = vcmp.ge.f32.partialorder %v483, 0.0
    %vm516 = vcmp.ge.f32.partialorder %v484, 0.0
    %vm517 = vcmp.ge.f32.partialorder %v485, 0.0
    %vm518 = vcmp.ge.f32.partialorder %v486, 0.0
    %v519 = vmul.f32 %v455, 0.01
    %v520 = vmul.f32 %v456, 0.01
    %v521 = vmul.f32 %v457, 0.01
    %v522 = vmul.f32 %v458, 0.01
    %v523 = vmul.f32 %v459, 0.01
    %v524 = vmul.f32 %v460, 0.01
    %v525 = vmul.f32 %v461, 0.01
    %v526 = vmul.f32 %v462, 0.01
    %v527 = vmul.f32 %v463, 0.01
    %v528 = vmul.f32 %v464, 0.01
    %v529 = vmul.f32 %v465, 0.01
    %v530 = vmul.f32 %v466, 0.01
    %v531 = vmul.f32 %v467, 0.01
    %v532 = vmul.f32 %v468, 0.01
    %v533 = vmul.f32 %v469, 0.01
    %v534 = vmul.f32 %v470, 0.01
    %v535 = vmul.f32 %v471, 0.01
    %v536 = vmul.f32 %v472, 0.01
    %v537 = vmul.f32 %v473, 0.01
    %v538 = vmul.f32 %v474, 0.01
    %v539 = vmul.f32 %v475, 0.01
    %v540 = vmul.f32 %v476, 0.01
    %v541 = vmul.f32 %v477, 0.01
    %v542 = vmul.f32 %v478, 0.01
    %v543 = vmul.f32 %v479, 0.01
    %v544 = vmul.f32 %v480, 0.01
    %v545 = vmul.f32 %v481, 0.01
    %v546 = vmul.f32 %v482, 0.01
    %v547 = vmul.f32 %v483, 0.01
    %v548 = vmul.f32 %v484, 0.01
    %v549 = vmul.f32 %v485, 0.01
    %v550 = vmul.f32 %v486, 0.01
    %v551 = vsel %vm487, %v455, %v519
    %v552 = vsel %vm488, %v456, %v520
    %v553 = vsel %vm489, %v457, %v521
    %v554 = vsel %vm490, %v458, %v522
    %v555 = vsel %vm491, %v459, %v523
    %v556 = vsel %vm492, %v460, %v524
    %v557 = vsel %vm493, %v461, %v525
    %v558 = vsel %vm494, %v462, %v526
    %v559 = vsel %vm495, %v463, %v527
    %v560 = vsel %vm496, %v464, %v528
    %v561 = vsel %vm497, %v465, %v529
    %v562 = vsel %vm498, %v466, %v530
    %v563 = vsel %vm499, %v467, %v531
    %v564 = vsel %vm500, %v468, %v532
    %v565 = vsel %vm501, %v469, %v533
    %v566 = vsel %vm502, %v470, %v534
    %v567 = vsel %vm503, %v471, %v535
    %v568 = vsel %vm504, %v472, %v536
    %v569 = vsel %vm505, %v473, %v537
    %v570 = vsel %vm506, %v474, %v538
    %v571 = vsel %vm507, %v475, %v539
    %v572 = vsel %vm508, %v476, %v540
    %v573 = vsel %vm509, %v477, %v541
    %v574 = vsel %vm510, %v478, %v542
    %v575 = vsel %vm511, %v479, %v543
    %v576 = vsel %vm512, %v480, %v544
    %v577 = vsel %vm513, %v481, %v545
    %v578 = vsel %vm514, %v482, %v546
    %v579 = vsel %vm515, %v483, %v547
    %v580 = vsel %vm516, %v484, %v548
    %v581 = vsel %vm517, %v485, %v549
    %v582 = vsel %vm518, %v486, %v550
    %v583 = vld [vmem:[%s3] sm:$0xff]
    %v584 = vld [vmem:[%s3 + $0x8] sm:$0xff]
    %v585 = vld [vmem:[%s3 + $0x10] sm:$0xff]
    %v586 = vld [vmem:[%s3 + $0x18] sm:$0xff]
    %v587 = vld [vmem:[%s3 + $0x20] sm:$0xff]
    %v588 = vld [vmem:[%s3 + $0x28] sm:$0xff]
    %v589 = vld [vmem:[%s3 + $0x30] sm:$0xff]
    %v590 = vld [vmem:[%s3 + $0x38] sm:$0xff]
    %v591 = vld [vmem:[%s3 + $0x40] sm:$0xff]
    %v592 = vld [vmem:[%s3 + $0x48] sm:$0xff]
    %v593 = vld [vmem:[%s3 + $0x50] sm:$0xff]
    %v594 = vld [vmem:[%s3 + $0x58] sm:$0xff]
    %v595 = vld [vmem:[%s3 + $0x60] sm:$0xff]
    %v596 = vld [vmem:[%s3 + $0x68] sm:$0xff]
    %v597 = vld [vmem:[%s3 + $0x70] sm:$0xff]
    %v598 = vld [vmem:[%s3 + $0x78] sm:$0xff]
    %v599 = vld [vmem:[%s3 + $0x80] sm:$0xff]
    %v600 = vld [vmem:[%s3 + $0x88] sm:$0xff]
    %v601 = vld [vmem:[%s3 + $0x90] sm:$0xff]
    %v602 = vld [vmem:[%s3 + $0x98] sm:$0xff]
    %v603 = vld [vmem:[%s3 + $0xa0] sm:$0xff]
    %v604 = vld [vmem:[%s3 + $0xa8] sm:$0xff]
    %v605 = vld [vmem:[%s3 + $0xb0] sm:$0xff]
    %v606 = vld [vmem:[%s3 + $0xb8] sm:$0xff]
    %v607 = vld [vmem:[%s3 + $0xc0] sm:$0xff]
    %v608 = vld [vmem:[%s3 + $0xc8] sm:$0xff]
    %v609 = vld [vmem:[%s3 + $0xd0] sm:$0xff]
    %v610 = vld [vmem:[%s3 + $0xd8] sm:$0xff]
    %v611 = vld [vmem:[%s3 + $0xe0] sm:$0xff]
    %v612 = vld [vmem:[%s3 + $0xe8] sm:$0xff]
    %v613 = vld [vmem:[%s3 + $0xf0] sm:$0xff]
    %v614 = vld [vmem:[%s3 + $0xf8] sm:$0xff]
    %v615 = vld [vmem:[%s3 + $0x100] sm:$0xff]
    %v616 = vld [vmem:[%s3 + $0x108] sm:$0xff]
    %v617 = vld [vmem:[%s3 + $0x110] sm:$0xff]
    %v618 = vld [vmem:[%s3 + $0x118] sm:$0xff]
    %v619 = vld [vmem:[%s3 + $0x120] sm:$0xff]
    %v620 = vld [vmem:[%s3 + $0x128] sm:$0xff]
    %v621 = vld [vmem:[%s3 + $0x130] sm:$0xff]
    %v622 = vld [vmem:[%s3 + $0x138] sm:$0xff]
    %v623 = vld [vmem:[%s3 + $0x140] sm:$0xff]
    %v624 = vld [vmem:[%s3 + $0x148] sm:$0xff]
    %v625 = vld [vmem:[%s3 + $0x150] sm:$0xff]
    %v626 = vld [vmem:[%s3 + $0x158] sm:$0xff]
    %v627 = vld [vmem:[%s3 + $0x160] sm:$0xff]
    %v628 = vld [vmem:[%s3 + $0x168] sm:$0xff]
    %v629 = vld [vmem:[%s3 + $0x170] sm:$0xff]
    %v630 = vld [vmem:[%s3 + $0x178] sm:$0xff]
    %v631 = vld [vmem:[%s3 + $0x180] sm:$0xff]
    %v632 = vld [vmem:[%s3 + $0x188] sm:$0xff]
    %v633 = vld [vmem:[%s3 + $0x190] sm:$0xff]
    %v634 = vld [vmem:[%s3 + $0x198] sm:$0xff]
    %v635 = vld [vmem:[%s3 + $0x1a0] sm:$0xff]
    %v636 = vld [vmem:[%s3 + $0x1a8] sm:$0xff]
    %v637 = vld [vmem:[%s3 + $0x1b0] sm:$0xff]
    %v638 = vld [vmem:[%s3 + $0x1b8] sm:$0xff]
    %v639 = vld [vmem:[%s3 + $0x1c0] sm:$0xff]
    %v640 = vld [vmem:[%s3 + $0x1c8] sm:$0xff]
    %v641 = vld [vmem:[%s3 + $0x1d0] sm:$0xff]
    %v642 = vld [vmem:[%s3 + $0x1d8] sm:$0xff]
    %v643 = vld [vmem:[%s3 + $0x1e0] sm:$0xff]
    %v644 = vld [vmem:[%s3 + $0x1e8] sm:$0xff]
    %v645 = vld [vmem:[%s3 + $0x1f0] sm:$0xff]
    %v646 = vld [vmem:[%s3 + $0x1f8] sm:$0xff]
    %v647 = vld [vmem:[%s4] sm:$0xff]
    %v648 = vld [vmem:[%s4 + $0x8] sm:$0xff]
    %v649 = vld [vmem:[%s4 + $0x10] sm:$0xff]
    %v650 = vld [vmem:[%s4 + $0x18] sm:$0xff]
    %v651 = vld [vmem:[%s4 + $0x20] sm:$0xff]
    %v652 = vld [vmem:[%s4 + $0x28] sm:$0xff]
    %v653 = vld [vmem:[%s4 + $0x30] sm:$0xff]
    %v654 = vld [vmem:[%s4 + $0x38] sm:$0xff]
    %v655 = vld [vmem:[%s4 + $0x40] sm:$0xff]
    %v656 = vld [vmem:[%s4 + $0x48] sm:$0xff]
    %v657 = vld [vmem:[%s4 + $0x50] sm:$0xff]
    %v658 = vld [vmem:[%s4 + $0x58] sm:$0xff]
    %v659 = vld [vmem:[%s4 + $0x60] sm:$0xff]
    %v660 = vld [vmem:[%s4 + $0x68] sm:$0xff]
    %v661 = vld [vmem:[%s4 + $0x70] sm:$0xff]
    %v662 = vld [vmem:[%s4 + $0x78] sm:$0xff]
    %v663 = vld [vmem:[%s4 + $0x80] sm:$0xff]
    %v664 = vld [vmem:[%s4 + $0x88] sm:$0xff]
    %v665 = vld [vmem:[%s4 + $0x90] sm:$0xff]
    %v666 = vld [vmem:[%s4 + $0x98] sm:$0xff]
    %v667 = vld [vmem:[%s4 + $0xa0] sm:$0xff]
    %v668 = vld [vmem:[%s4 + $0xa8] sm:$0xff]
    %v669 = vld [vmem:[%s4 + $0xb0] sm:$0xff]
    %v670 = vld [vmem:[%s4 + $0xb8] sm:$0xff]
    %v671 = vld [vmem:[%s4 + $0xc0] sm:$0xff]
    %v672 = vld [vmem:[%s4 + $0xc8] sm:$0xff]
    %v673 = vld [vmem:[%s4 + $0xd0] sm:$0xff]
    %v674 = vld [vmem:[%s4 + $0xd8] sm:$0xff]
    %v675 = vld [vmem:[%s4 + $0xe0] sm:$0xff]
    %v676 = vld [vmem:[%s4 + $0xe8] sm:$0xff]
    %v677 = vld [vmem:[%s4 + $0xf0] sm:$0xff]
    %v678 = vld [vmem:[%s4 + $0xf8] sm:$0xff]
    %680 = vset.pattern.permute.xlu0 0
    %681 = vperm.xlu0 %680, %v647
    %v682 = vpop.permute.xlu0 %681
    %685 = vset.pattern.permute.xlu0 0
    %686 = vperm.xlu0 %685, %v648
    %v687 = vpop.permute.xlu0 %686
    %690 = vset.pattern.permute.xlu0 0
    %691 = vperm.xlu0 %690, %v649
    %v692 = vpop.permute.xlu0 %691
    %695 = vset.pattern.permute.xlu0 0
    %696 = vperm.xlu0 %695, %v650
    %v697 = vpop.permute.xlu0 %696
    %700 = vset.pattern.permute.xlu0 0
    %701 = vperm.xlu0 %700, %v651
    %v702 = vpop.permute.xlu0 %701
    %705 = vset.pattern.permute.xlu0 0
    %706 = vperm.xlu0 %705, %v652
    %v707 = vpop.permute.xlu0 %706
    %710 = vset.pattern.permute.xlu0 0
    %711 = vperm.xlu0 %710, %v653
    %v712 = vpop.permute.xlu0 %711
    %715 = vset.pattern.permute.xlu0 0
    %716 = vperm.xlu0 %715, %v654
    %v717 = vpop.permute.xlu0 %716
    %720 = vset.pattern.permute.xlu0 0
    %721 = vperm.xlu0 %720, %v655
    %v722 = vpop.permute.xlu0 %721
    %725 = vset.pattern.permute.xlu0 0
    %726 = vperm.xlu0 %725, %v656
    %v727 = vpop.permute.xlu0 %726
    %730 = vset.pattern.permute.xlu0 0
    %731 = vperm.xlu0 %730, %v657
    %v732 = vpop.permute.xlu0 %731
    %735 = vset.pattern.permute.xlu0 0
    %736 = vperm.xlu0 %735, %v658
    %v737 = vpop.permute.xlu0 %736
    %740 = vset.pattern.permute.xlu0 0
    %741 = vperm.xlu0 %740, %v659
    %v742 = vpop.permute.xlu0 %741
    %745 = vset.pattern.permute.xlu0 0
    %746 = vperm.xlu0 %745, %v660
    %v747 = vpop.permute.xlu0 %746
    %750 = vset.pattern.permute.xlu0 0
    %751 = vperm.xlu0 %750, %v661
    %v752 = vpop.permute.xlu0 %751
    %755 = vset.pattern.permute.xlu0 0
    %756 = vperm.xlu0 %755, %v662
    %v757 = vpop.permute.xlu0 %756
    %760 = vset.pattern.permute.xlu0 0
    %761 = vperm.xlu0 %760, %v663
    %v762 = vpop.permute.xlu0 %761
    %765 = vset.pattern.permute.xlu0 0
    %766 = vperm.xlu0 %765, %v664
    %v767 = vpop.permute.xlu0 %766
    %770 = vset.pattern.permute.xlu0 0
    %771 = vperm.xlu0 %770, %v665
    %v772 = vpop.permute.xlu0 %771
    %775 = vset.pattern.permute.xlu0 0
    %776 = vperm.xlu0 %775, %v666
    %v777 = vpop.permute.xlu0 %776
    %780 = vset.pattern.permute.xlu0 0
    %781 = vperm.xlu0 %780, %v667
    %v782 = vpop.permute.xlu0 %781
    %785 = vset.pattern.permute.xlu0 0
    %786 = vperm.xlu0 %785, %v668
    %v787 = vpop.permute.xlu0 %786
    %790 = vset.pattern.permute.xlu0 0
    %791 = vperm.xlu0 %790, %v669
    %v792 = vpop.permute.xlu0 %791
    %795 = vset.pattern.permute.xlu0 0
    %796 = vperm.xlu0 %795, %v670
    %v797 = vpop.permute.xlu0 %796
    %800 = vset.pattern.permute.xlu0 0
    %801 = vperm.xlu0 %800, %v671
    %v802 = vpop.permute.xlu0 %801
    %805 = vset.pattern.permute.xlu0 0
    %806 = vperm.xlu0 %805, %v672
    %v807 = vpop.permute.xlu0 %806
    %810 = vset.pattern.permute.xlu0 0
    %811 = vperm.xlu0 %810, %v673
    %v812 = vpop.permute.xlu0 %811
    %815 = vset.pattern.permute.xlu0 0
    %816 = vperm.xlu0 %815, %v674
    %v817 = vpop.permute.xlu0 %816
    %820 = vset.pattern.permute.xlu0 0
    %821 = vperm.xlu0 %820, %v675
    %v822 = vpop.permute.xlu0 %821
    %825 = vset.pattern.permute.xlu0 0
    %826 = vperm.xlu0 %825, %v676
    %v827 = vpop.permute.xlu0 %826
    %830 = vset.pattern.permute.xlu0 0
    %831 = vperm.xlu0 %830, %v677
    %v832 = vpop.permute.xlu0 %831
    %835 = vset.pattern.permute.xlu0 0
    %836 = vperm.xlu0 %835, %v678
    %v837 = vpop.permute.xlu0 %836
    %839 = vmatpush.msra.mxu0 %v566
    %840 = vmatpush.msra.mxu0 %v565
    %841 = vmatpush.msra.mxu0 %v564
    %842 = vmatpush.msra.mxu0 %v563
    %843 = vmatpush.msra.mxu0 %v562
    %844 = vmatpush.msra.mxu0 %v561
    %845 = vmatpush.msra.mxu0 %v560
    %846 = vmatpush.msra.mxu0 %v559
    %847 = vmatpush.msra.mxu0 %v558
    %848 = vmatpush.msra.mxu0 %v557
    %849 = vmatpush.msra.mxu0 %v556
    %850 = vmatpush.msra.mxu0 %v555
    %851 = vmatpush.msra.mxu0 %v554
    %852 = vmatpush.msra.mxu0 %v553
    %853 = vmatpush.msra.mxu0 %v552
    %854 = vmatpush.msra.mxu0 %v551
    %855 = vmatmul.f32.gmra.mxu0 %v583
    %v856 = vpop.f32.mrf.mxu0
    %v857 = vadd.f32 %v682, %v856
    %858 = vmatmul.f32.gmra.mxu0 %v585
    %v859 = vpop.f32.mrf.mxu0
    %v860 = vadd.f32 %v687, %v859
    %861 = vmatmul.f32.gmra.mxu0 %v587
    %v862 = vpop.f32.mrf.mxu0
    %v863 = vadd.f32 %v692, %v862
    %864 = vmatmul.f32.gmra.mxu0 %v589
    %v865 = vpop.f32.mrf.mxu0
    %v866 = vadd.f32 %v697, %v865
    %867 = vmatmul.f32.gmra.mxu0 %v591
    %v868 = vpop.f32.mrf.mxu0
    %v869 = vadd.f32 %v702, %v868
    %870 = vmatmul.f32.gmra.mxu0 %v593
    %v871 = vpop.f32.mrf.mxu0
    %v872 = vadd.f32 %v707, %v871
    %873 = vmatmul.f32.gmra.mxu0 %v595
    %v874 = vpop.f32.mrf.mxu0
    %v875 = vadd.f32 %v712, %v874
    %876 = vmatmul.f32.gmra.mxu0 %v597
    %v877 = vpop.f32.mrf.mxu0
    %v878 = vadd.f32 %v717, %v877
    %879 = vmatmul.f32.gmra.mxu0 %v599
    %v880 = vpop.f32.mrf.mxu0
    %v881 = vadd.f32 %v722, %v880
    %882 = vmatmul.f32.gmra.mxu0 %v601
    %v883 = vpop.f32.mrf.mxu0
    %v884 = vadd.f32 %v727, %v883
    %885 = vmatmul.f32.gmra.mxu0 %v603
    %v886 = vpop.f32.mrf.mxu0
    %v887 = vadd.f32 %v732, %v886
    %888 = vmatmul.f32.gmra.mxu0 %v605
    %v889 = vpop.f32.mrf.mxu0
    %v890 = vadd.f32 %v737, %v889
    %891 = vmatmul.f32.gmra.mxu0 %v607
    %v892 = vpop.f32.mrf.mxu0
    %v893 = vadd.f32 %v742, %v892
    %894 = vmatmul.f32.gmra.mxu0 %v609
    %v895 = vpop.f32.mrf.mxu0
    %v896 = vadd.f32 %v747, %v895
    %897 = vmatmul.f32.gmra.mxu0 %v611
    %v898 = vpop.f32.mrf.mxu0
    %v899 = vadd.f32 %v752, %v898
    %900 = vmatmul.f32.gmra.mxu0 %v613
    %v901 = vpop.f32.mrf.mxu0
    %v902 = vadd.f32 %v757, %v901
    %903 = vmatmul.f32.gmra.mxu0 %v615
    %v904 = vpop.f32.mrf.mxu0
    %v905 = vadd.f32 %v762, %v904
    %906 = vmatmul.f32.gmra.mxu0 %v617
    %v907 = vpop.f32.mrf.mxu0
    %v908 = vadd.f32 %v767, %v907
    %909 = vmatmul.f32.gmra.mxu0 %v619
    %v910 = vpop.f32.mrf.mxu0
    %v911 = vadd.f32 %v772, %v910
    %912 = vmatmul.f32.gmra.mxu0 %v621
    %v913 = vpop.f32.mrf.mxu0
    %v914 = vadd.f32 %v777, %v913
    %915 = vmatmul.f32.gmra.mxu0 %v623
    %v916 = vpop.f32.mrf.mxu0
    %v917 = vadd.f32 %v782, %v916
    %918 = vmatmul.f32.gmra.mxu0 %v625
    %v919 = vpop.f32.mrf.mxu0
    %v920 = vadd.f32 %v787, %v919
    %921 = vmatmul.f32.gmra.mxu0 %v627
    %v922 = vpop.f32.mrf.mxu0
    %v923 = vadd.f32 %v792, %v922
    %924 = vmatmul.f32.gmra.mxu0 %v629
    %v925 = vpop.f32.mrf.mxu0
    %v926 = vadd.f32 %v797, %v925
    %927 = vmatmul.f32.gmra.mxu0 %v631
    %v928 = vpop.f32.mrf.mxu0
    %v929 = vadd.f32 %v802, %v928
    %930 = vmatmul.f32.gmra.mxu0 %v633
    %v931 = vpop.f32.mrf.mxu0
    %v932 = vadd.f32 %v807, %v931
    %933 = vmatmul.f32.gmra.mxu0 %v635
    %v934 = vpop.f32.mrf.mxu0
    %v935 = vadd.f32 %v812, %v934
    %936 = vmatmul.f32.gmra.mxu0 %v637
    %v937 = vpop.f32.mrf.mxu0
    %v938 = vadd.f32 %v817, %v937
    %939 = vmatmul.f32.gmra.mxu0 %v639
    %v940 = vpop.f32.mrf.mxu0
    %v941 = vadd.f32 %v822, %v940
    %942 = vmatmul.f32.gmra.mxu0 %v641
    %v943 = vpop.f32.mrf.mxu0
    %v944 = vadd.f32 %v827, %v943
    %945 = vmatmul.f32.gmra.mxu0 %v643
    %v946 = vpop.f32.mrf.mxu0
    %v947 = vadd.f32 %v832, %v946
    %948 = vmatmul.f32.gmra.mxu0 %v645
    %v949 = vpop.f32.mrf.mxu0
    %v950 = vadd.f32 %v837, %v949
    %951 = vdwg.mxu0
    %952 = vmatpush.msra.mxu0 %v582
    %953 = vmatpush.msra.mxu0 %v581
    %954 = vmatpush.msra.mxu0 %v580
    %955 = vmatpush.msra.mxu0 %v579
    %956 = vmatpush.msra.mxu0 %v578
    %957 = vmatpush.msra.mxu0 %v577
    %958 = vmatpush.msra.mxu0 %v576
    %959 = vmatpush.msra.mxu0 %v575
    %960 = vmatpush.msra.mxu0 %v574
    %961 = vmatpush.msra.mxu0 %v573
    %962 = vmatpush.msra.mxu0 %v572
    %963 = vmatpush.msra.mxu0 %v571
    %964 = vmatpush.msra.mxu0 %v570
    %965 = vmatpush.msra.mxu0 %v569
    %966 = vmatpush.msra.mxu0 %v568
    %967 = vmatpush.msra.mxu0 %v567
    %968 = vmatmul.f32.gmra.mxu0 %v584
    %v969 = vpop.f32.mrf.mxu0
    %v970 = vadd.f32 %v857, %v969
    %971 = vmatmul.f32.gmra.mxu0 %v586
    %v972 = vpop.f32.mrf.mxu0
    %v973 = vadd.f32 %v860, %v972
    %974 = vmatmul.f32.gmra.mxu0 %v588
    %v975 = vpop.f32.mrf.mxu0
    %v976 = vadd.f32 %v863, %v975
    %977 = vmatmul.f32.gmra.mxu0 %v590
    %v978 = vpop.f32.mrf.mxu0
    %v979 = vadd.f32 %v866, %v978
    %980 = vmatmul.f32.gmra.mxu0 %v592
    %v981 = vpop.f32.mrf.mxu0
    %v982 = vadd.f32 %v869, %v981
    %983 = vmatmul.f32.gmra.mxu0 %v594
    %v984 = vpop.f32.mrf.mxu0
    %v985 = vadd.f32 %v872, %v984
    %986 = vmatmul.f32.gmra.mxu0 %v596
    %v987 = vpop.f32.mrf.mxu0
    %v988 = vadd.f32 %v875, %v987
    %989 = vmatmul.f32.gmra.mxu0 %v598
    %v990 = vpop.f32.mrf.mxu0
    %v991 = vadd.f32 %v878, %v990
    %992 = vmatmul.f32.gmra.mxu0 %v600
    %v993 = vpop.f32.mrf.mxu0
    %v994 = vadd.f32 %v881, %v993
    %995 = vmatmul.f32.gmra.mxu0 %v602
    %v996 = vpop.f32.mrf.mxu0
    %v997 = vadd.f32 %v884, %v996
    %998 = vmatmul.f32.gmra.mxu0 %v604
    %v999 = vpop.f32.mrf.mxu0
    %v1000 = vadd.f32 %v887, %v999
    %1001 = vmatmul.f32.gmra.mxu0 %v606
    %v1002 = vpop.f32.mrf.mxu0
    %v1003 = vadd.f32 %v890, %v1002
    %1004 = vmatmul.f32.gmra.mxu0 %v608
    %v1005 = vpop.f32.mrf.mxu0
    %v1006 = vadd.f32 %v893, %v1005
    %1007 = vmatmul.f32.gmra.mxu0 %v610
    %v1008 = vpop.f32.mrf.mxu0
    %v1009 = vadd.f32 %v896, %v1008
    %1010 = vmatmul.f32.gmra.mxu0 %v612
    %v1011 = vpop.f32.mrf.mxu0
    %v1012 = vadd.f32 %v899, %v1011
    %1013 = vmatmul.f32.gmra.mxu0 %v614
    %v1014 = vpop.f32.mrf.mxu0
    %v1015 = vadd.f32 %v902, %v1014
    %1016 = vmatmul.f32.gmra.mxu0 %v616
    %v1017 = vpop.f32.mrf.mxu0
    %v1018 = vadd.f32 %v905, %v1017
    %1019 = vmatmul.f32.gmra.mxu0 %v618
    %v1020 = vpop.f32.mrf.mxu0
    %v1021 = vadd.f32 %v908, %v1020
    %1022 = vmatmul.f32.gmra.mxu0 %v620
    %v1023 = vpop.f32.mrf.mxu0
    %v1024 = vadd.f32 %v911, %v1023
    %1025 = vmatmul.f32.gmra.mxu0 %v622
    %v1026 = vpop.f32.mrf.mxu0
    %v1027 = vadd.f32 %v914, %v1026
    %1028 = vmatmul.f32.gmra.mxu0 %v624
    %v1029 = vpop.f32.mrf.mxu0
    %v1030 = vadd.f32 %v917, %v1029
    %1031 = vmatmul.f32.gmra.mxu0 %v626
    %v1032 = vpop.f32.mrf.mxu0
    %v1033 = vadd.f32 %v920, %v1032
    %1034 = vmatmul.f32.gmra.mxu0 %v628
    %v1035 = vpop.f32.mrf.mxu0
    %v1036 = vadd.f32 %v923, %v1035
    %1037 = vmatmul.f32.gmra.mxu0 %v630
    %v1038 = vpop.f32.mrf.mxu0
    %v1039 = vadd.f32 %v926, %v1038
    %1040 = vmatmul.f32.gmra.mxu0 %v632
    %v1041 = vpop.f32.mrf.mxu0
    %v1042 = vadd.f32 %v929, %v1041
    %1043 = vmatmul.f32.gmra.mxu0 %v634
    %v1044 = vpop.f32.mrf.mxu0
    %v1045 = vadd.f32 %v932, %v1044
    %1046 = vmatmul.f32.gmra.mxu0 %v636
    %v1047 = vpop.f32.mrf.mxu0
    %v1048 = vadd.f32 %v935, %v1047
    %1049 = vmatmul.f32.gmra.mxu0 %v638
    %v1050 = vpop.f32.mrf.mxu0
    %v1051 = vadd.f32 %v938, %v1050
    %1052 = vmatmul.f32.gmra.mxu0 %v640
    %v1053 = vpop.f32.mrf.mxu0
    %v1054 = vadd.f32 %v941, %v1053
    %1055 = vmatmul.f32.gmra.mxu0 %v642
    %v1056 = vpop.f32.mrf.mxu0
    %v1057 = vadd.f32 %v944, %v1056
    %1058 = vmatmul.f32.gmra.mxu0 %v644
    %v1059 = vpop.f32.mrf.mxu0
    %v1060 = vadd.f32 %v947, %v1059
    %1061 = vmatmul.f32.gmra.mxu0 %v646
    %v1062 = vpop.f32.mrf.mxu0
    %v1063 = vadd.f32 %v950, %v1062
    %1064 = vdwg.mxu0
    %vm1065 = vcmp.ge.f32.partialorder %v970, 0.0
    %vm1066 = vcmp.ge.f32.partialorder %v973, 0.0
    %vm1067 = vcmp.ge.f32.partialorder %v976, 0.0
    %vm1068 = vcmp.ge.f32.partialorder %v979, 0.0
    %vm1069 = vcmp.ge.f32.partialorder %v982, 0.0
    %vm1070 = vcmp.ge.f32.partialorder %v985, 0.0
    %vm1071 = vcmp.ge.f32.partialorder %v988, 0.0
    %vm1072 = vcmp.ge.f32.partialorder %v991, 0.0
    %vm1073 = vcmp.ge.f32.partialorder %v994, 0.0
    %vm1074 = vcmp.ge.f32.partialorder %v997, 0.0
    %vm1075 = vcmp.ge.f32.partialorder %v1000, 0.0
    %vm1076 = vcmp.ge.f32.partialorder %v1003, 0.0
    %vm1077 = vcmp.ge.f32.partialorder %v1006, 0.0
    %vm1078 = vcmp.ge.f32.partialorder %v1009, 0.0
    %vm1079 = vcmp.ge.f32.partialorder %v1012, 0.0
    %vm1080 = vcmp.ge.f32.partialorder %v1015, 0.0
    %vm1081 = vcmp.ge.f32.partialorder %v1018, 0.0
    %vm1082 = vcmp.ge.f32.partialorder %v1021, 0.0
    %vm1083 = vcmp.ge.f32.partialorder %v1024, 0.0
    %vm1084 = vcmp.ge.f32.partialorder %v1027, 0.0
    %vm1085 = vcmp.ge.f32.partialorder %v1030, 0.0
    %vm1086 = vcmp.ge.f32.partialorder %v1033, 0.0
    %vm1087 = vcmp.ge.f32.partialorder %v1036, 0.0
    %vm1088 = vcmp.ge.f32.partialorder %v1039, 0.0
    %vm1089 = vcmp.ge.f32.partialorder %v1042, 0.0
    %vm1090 = vcmp.ge.f32.partialorder %v1045, 0.0
    %vm1091 = vcmp.ge.f32.partialorder %v1048, 0.0
    %vm1092 = vcmp.ge.f32.partialorder %v1051, 0.0
    %vm1093 = vcmp.ge.f32.partialorder %v1054, 0.0
    %vm1094 = vcmp.ge.f32.partialorder %v1057, 0.0
    %vm1095 = vcmp.ge.f32.partialorder %v1060, 0.0
    %vm1096 = vcmp.ge.f32.partialorder %v1063, 0.0
    %v1097 = vmul.f32 %v970, 0.01
    %v1098 = vmul.f32 %v973, 0.01
    %v1099 = vmul.f32 %v976, 0.01
    %v1100 = vmul.f32 %v979, 0.01
    %v1101 = vmul.f32 %v982, 0.01
    %v1102 = vmul.f32 %v985, 0.01
    %v1103 = vmul.f32 %v988, 0.01
    %v1104 = vmul.f32 %v991, 0.01
    %v1105 = vmul.f32 %v994, 0.01
    %v1106 = vmul.f32 %v997, 0.01
    %v1107 = vmul.f32 %v1000, 0.01
    %v1108 = vmul.f32 %v1003, 0.01
    %v1109 = vmul.f32 %v1006, 0.01
    %v1110 = vmul.f32 %v1009, 0.01
    %v1111 = vmul.f32 %v1012, 0.01
    %v1112 = vmul.f32 %v1015, 0.01
    %v1113 = vmul.f32 %v1018, 0.01
    %v1114 = vmul.f32 %v1021, 0.01
    %v1115 = vmul.f32 %v1024, 0.01
    %v1116 = vmul.f32 %v1027, 0.01
    %v1117 = vmul.f32 %v1030, 0.01
    %v1118 = vmul.f32 %v1033, 0.01
    %v1119 = vmul.f32 %v1036, 0.01
    %v1120 = vmul.f32 %v1039, 0.01
    %v1121 = vmul.f32 %v1042, 0.01
    %v1122 = vmul.f32 %v1045, 0.01
    %v1123 = vmul.f32 %v1048, 0.01
    %v1124 = vmul.f32 %v1051, 0.01
    %v1125 = vmul.f32 %v1054, 0.01
    %v1126 = vmul.f32 %v1057, 0.01
    %v1127 = vmul.f32 %v1060, 0.01
    %v1128 = vmul.f32 %v1063, 0.01
    %v1129 = vsel %vm1065, %v970, %v1097
    %v1130 = vsel %vm1066, %v973, %v1098
    %v1131 = vsel %vm1067, %v976, %v1099
    %v1132 = vsel %vm1068, %v979, %v1100
    %v1133 = vsel %vm1069, %v982, %v1101
    %v1134 = vsel %vm1070, %v985, %v1102
    %v1135 = vsel %vm1071, %v988, %v1103
    %v1136 = vsel %vm1072, %v991, %v1104
    %v1137 = vsel %vm1073, %v994, %v1105
    %v1138 = vsel %vm1074, %v997, %v1106
    %v1139 = vsel %vm1075, %v1000, %v1107
    %v1140 = vsel %vm1076, %v1003, %v1108
    %v1141 = vsel %vm1077, %v1006, %v1109
    %v1142 = vsel %vm1078, %v1009, %v1110
    %v1143 = vsel %vm1079, %v1012, %v1111
    %v1144 = vsel %vm1080, %v1015, %v1112
    %v1145 = vsel %vm1081, %v1018, %v1113
    %v1146 = vsel %vm1082, %v1021, %v1114
    %v1147 = vsel %vm1083, %v1024, %v1115
    %v1148 = vsel %vm1084, %v1027, %v1116
    %v1149 = vsel %vm1085, %v1030, %v1117
    %v1150 = vsel %vm1086, %v1033, %v1118
    %v1151 = vsel %vm1087, %v1036, %v1119
    %v1152 = vsel %vm1088, %v1039, %v1120
    %v1153 = vsel %vm1089, %v1042, %v1121
    %v1154 = vsel %vm1090, %v1045, %v1122
    %v1155 = vsel %vm1091, %v1048, %v1123
    %v1156 = vsel %vm1092, %v1051, %v1124
    %v1157 = vsel %vm1093, %v1054, %v1125
    %v1158 = vsel %vm1094, %v1057, %v1126
    %v1159 = vsel %vm1095, %v1060, %v1127
    %v1160 = vsel %vm1096, %v1063, %v1128
    %v1161 = vld [vmem:[%s5] sm:$0xff]
    %v1162 = vld [vmem:[%s5 + $0x8] sm:$0xff]
    %v1163 = vld [vmem:[%s5 + $0x10] sm:$0xff]
    %v1164 = vld [vmem:[%s5 + $0x18] sm:$0xff]
    %v1165 = vld [vmem:[%s5 + $0x20] sm:$0xff]
    %v1166 = vld [vmem:[%s5 + $0x28] sm:$0xff]
    %v1167 = vld [vmem:[%s5 + $0x30] sm:$0xff]
    %v1168 = vld [vmem:[%s5 + $0x38] sm:$0xff]
    %v1169 = vld [vmem:[%s5 + $0x40] sm:$0xff]
    %v1170 = vld [vmem:[%s5 + $0x48] sm:$0xff]
    %v1171 = vld [vmem:[%s5 + $0x50] sm:$0xff]
    %v1172 = vld [vmem:[%s5 + $0x58] sm:$0xff]
    %v1173 = vld [vmem:[%s5 + $0x60] sm:$0xff]
    %v1174 = vld [vmem:[%s5 + $0x68] sm:$0xff]
    %v1175 = vld [vmem:[%s5 + $0x70] sm:$0xff]
    %v1176 = vld [vmem:[%s5 + $0x78] sm:$0xff]
    %v1177 = vld [vmem:[%s5 + $0x80] sm:$0xff]
    %v1178 = vld [vmem:[%s5 + $0x88] sm:$0xff]
    %v1179 = vld [vmem:[%s5 + $0x90] sm:$0xff]
    %v1180 = vld [vmem:[%s5 + $0x98] sm:$0xff]
    %v1181 = vld [vmem:[%s5 + $0xa0] sm:$0xff]
    %v1182 = vld [vmem:[%s5 + $0xa8] sm:$0xff]
    %v1183 = vld [vmem:[%s5 + $0xb0] sm:$0xff]
    %v1184 = vld [vmem:[%s5 + $0xb8] sm:$0xff]
    %v1185 = vld [vmem:[%s5 + $0xc0] sm:$0xff]
    %v1186 = vld [vmem:[%s5 + $0xc8] sm:$0xff]
    %v1187 = vld [vmem:[%s5 + $0xd0] sm:$0xff]
    %v1188 = vld [vmem:[%s5 + $0xd8] sm:$0xff]
    %v1189 = vld [vmem:[%s5 + $0xe0] sm:$0xff]
    %v1190 = vld [vmem:[%s5 + $0xe8] sm:$0xff]
    %v1191 = vld [vmem:[%s5 + $0xf0] sm:$0xff]
    %v1192 = vld [vmem:[%s5 + $0xf8] sm:$0xff]
    %v1193 = vld [vmem:[%s5 + $0x100] sm:$0xff]
    %v1194 = vld [vmem:[%s5 + $0x108] sm:$0xff]
    %v1195 = vld [vmem:[%s5 + $0x110] sm:$0xff]
    %v1196 = vld [vmem:[%s5 + $0x118] sm:$0xff]
    %v1197 = vld [vmem:[%s5 + $0x120] sm:$0xff]
    %v1198 = vld [vmem:[%s5 + $0x128] sm:$0xff]
    %v1199 = vld [vmem:[%s5 + $0x130] sm:$0xff]
    %v1200 = vld [vmem:[%s5 + $0x138] sm:$0xff]
    %v1201 = vld [vmem:[%s5 + $0x140] sm:$0xff]
    %v1202 = vld [vmem:[%s5 + $0x148] sm:$0xff]
    %v1203 = vld [vmem:[%s5 + $0x150] sm:$0xff]
    %v1204 = vld [vmem:[%s5 + $0x158] sm:$0xff]
    %v1205 = vld [vmem:[%s5 + $0x160] sm:$0xff]
    %v1206 = vld [vmem:[%s5 + $0x168] sm:$0xff]
    %v1207 = vld [vmem:[%s5 + $0x170] sm:$0xff]
    %v1208 = vld [vmem:[%s5 + $0x178] sm:$0xff]
    %v1209 = vld [vmem:[%s5 + $0x180] sm:$0xff]
    %v1210 = vld [vmem:[%s5 + $0x188] sm:$0xff]
    %v1211 = vld [vmem:[%s5 + $0x190] sm:$0xff]
    %v1212 = vld [vmem:[%s5 + $0x198] sm:$0xff]
    %v1213 = vld [vmem:[%s5 + $0x1a0] sm:$0xff]
    %v1214 = vld [vmem:[%s5 + $0x1a8] sm:$0xff]
    %v1215 = vld [vmem:[%s5 + $0x1b0] sm:$0xff]
    %v1216 = vld [vmem:[%s5 + $0x1b8] sm:$0xff]
    %v1217 = vld [vmem:[%s5 + $0x1c0] sm:$0xff]
    %v1218 = vld [vmem:[%s5 + $0x1c8] sm:$0xff]
    %v1219 = vld [vmem:[%s5 + $0x1d0] sm:$0xff]
    %v1220 = vld [vmem:[%s5 + $0x1d8] sm:$0xff]
    %v1221 = vld [vmem:[%s5 + $0x1e0] sm:$0xff]
    %v1222 = vld [vmem:[%s5 + $0x1e8] sm:$0xff]
    %v1223 = vld [vmem:[%s5 + $0x1f0] sm:$0xff]
    %v1224 = vld [vmem:[%s5 + $0x1f8] sm:$0xff]
    %v1225 = vld [vmem:[%s6] sm:$0xff]
    %v1226 = vld [vmem:[%s6 + $0x8] sm:$0xff]
    %v1227 = vld [vmem:[%s6 + $0x10] sm:$0xff]
    %v1228 = vld [vmem:[%s6 + $0x18] sm:$0xff]
    %v1229 = vld [vmem:[%s6 + $0x20] sm:$0xff]
    %v1230 = vld [vmem:[%s6 + $0x28] sm:$0xff]
    %v1231 = vld [vmem:[%s6 + $0x30] sm:$0xff]
    %v1232 = vld [vmem:[%s6 + $0x38] sm:$0xff]
    %v1233 = vld [vmem:[%s6 + $0x40] sm:$0xff]
    %v1234 = vld [vmem:[%s6 + $0x48] sm:$0xff]
    %v1235 = vld [vmem:[%s6 + $0x50] sm:$0xff]
    %v1236 = vld [vmem:[%s6 + $0x58] sm:$0xff]
    %v1237 = vld [vmem:[%s6 + $0x60] sm:$0xff]
    %v1238 = vld [vmem:[%s6 + $0x68] sm:$0xff]
    %v1239 = vld [vmem:[%s6 + $0x70] sm:$0xff]
    %v1240 = vld [vmem:[%s6 + $0x78] sm:$0xff]
    %v1241 = vld [vmem:[%s6 + $0x80] sm:$0xff]
    %v1242 = vld [vmem:[%s6 + $0x88] sm:$0xff]
    %v1243 = vld [vmem:[%s6 + $0x90] sm:$0xff]
    %v1244 = vld [vmem:[%s6 + $0x98] sm:$0xff]
    %v1245 = vld [vmem:[%s6 + $0xa0] sm:$0xff]
    %v1246 = vld [vmem:[%s6 + $0xa8] sm:$0xff]
    %v1247 = vld [vmem:[%s6 + $0xb0] sm:$0xff]
    %v1248 = vld [vmem:[%s6 + $0xb8] sm:$0xff]
    %v1249 = vld [vmem:[%s6 + $0xc0] sm:$0xff]
    %v1250 = vld [vmem:[%s6 + $0xc8] sm:$0xff]
    %v1251 = vld [vmem:[%s6 + $0xd0] sm:$0xff]
    %v1252 = vld [vmem:[%s6 + $0xd8] sm:$0xff]
    %v1253 = vld [vmem:[%s6 + $0xe0] sm:$0xff]
    %v1254 = vld [vmem:[%s6 + $0xe8] sm:$0xff]
    %v1255 = vld [vmem:[%s6 + $0xf0] sm:$0xff]
    %v1256 = vld [vmem:[%s6 + $0xf8] sm:$0xff]
    %1258 = vset.pattern.permute.xlu0 0
    %1259 = vperm.xlu0 %1258, %v1225
    %v1260 = vpop.permute.xlu0 %1259
    %1263 = vset.pattern.permute.xlu0 0
    %1264 = vperm.xlu0 %1263, %v1226
    %v1265 = vpop.permute.xlu0 %1264
    %1268 = vset.pattern.permute.xlu0 0
    %1269 = vperm.xlu0 %1268, %v1227
    %v1270 = vpop.permute.xlu0 %1269
    %1273 = vset.pattern.permute.xlu0 0
    %1274 = vperm.xlu0 %1273, %v1228
    %v1275 = vpop.permute.xlu0 %1274
    %1278 = vset.pattern.permute.xlu0 0
    %1279 = vperm.xlu0 %1278, %v1229
    %v1280 = vpop.permute.xlu0 %1279
    %1283 = vset.pattern.permute.xlu0 0
    %1284 = vperm.xlu0 %1283, %v1230
    %v1285 = vpop.permute.xlu0 %1284
    %1288 = vset.pattern.permute.xlu0 0
    %1289 = vperm.xlu0 %1288, %v1231
    %v1290 = vpop.permute.xlu0 %1289
    %1293 = vset.pattern.permute.xlu0 0
    %1294 = vperm.xlu0 %1293, %v1232
    %v1295 = vpop.permute.xlu0 %1294
    %1298 = vset.pattern.permute.xlu0 0
    %1299 = vperm.xlu0 %1298, %v1233
    %v1300 = vpop.permute.xlu0 %1299
    %1303 = vset.pattern.permute.xlu0 0
    %1304 = vperm.xlu0 %1303, %v1234
    %v1305 = vpop.permute.xlu0 %1304
    %1308 = vset.pattern.permute.xlu0 0
    %1309 = vperm.xlu0 %1308, %v1235
    %v1310 = vpop.permute.xlu0 %1309
    %1313 = vset.pattern.permute.xlu0 0
    %1314 = vperm.xlu0 %1313, %v1236
    %v1315 = vpop.permute.xlu0 %1314
    %1318 = vset.pattern.permute.xlu0 0
    %1319 = vperm.xlu0 %1318, %v1237
    %v1320 = vpop.permute.xlu0 %1319
    %1323 = vset.pattern.permute.xlu0 0
    %1324 = vperm.xlu0 %1323, %v1238
    %v1325 = vpop.permute.xlu0 %1324
    %1328 = vset.pattern.permute.xlu0 0
    %1329 = vperm.xlu0 %1328, %v1239
    %v1330 = vpop.permute.xlu0 %1329
    %1333 = vset.pattern.permute.xlu0 0
    %1334 = vperm.xlu0 %1333, %v1240
    %v1335 = vpop.permute.xlu0 %1334
    %1338 = vset.pattern.permute.xlu0 0
    %1339 = vperm.xlu0 %1338, %v1241
    %v1340 = vpop.permute.xlu0 %1339
    %1343 = vset.pattern.permute.xlu0 0
    %1344 = vperm.xlu0 %1343, %v1242
    %v1345 = vpop.permute.xlu0 %1344
    %1348 = vset.pattern.permute.xlu0 0
    %1349 = vperm.xlu0 %1348, %v1243
    %v1350 = vpop.permute.xlu0 %1349
    %1353 = vset.pattern.permute.xlu0 0
    %1354 = vperm.xlu0 %1353, %v1244
    %v1355 = vpop.permute.xlu0 %1354
    %1358 = vset.pattern.permute.xlu0 0
    %1359 = vperm.xlu0 %1358, %v1245
    %v1360 = vpop.permute.xlu0 %1359
    %1363 = vset.pattern.permute.xlu0 0
    %1364 = vperm.xlu0 %1363, %v1246
    %v1365 = vpop.permute.xlu0 %1364
    %1368 = vset.pattern.permute.xlu0 0
    %1369 = vperm.xlu0 %1368, %v1247
    %v1370 = vpop.permute.xlu0 %1369
    %1373 = vset.pattern.permute.xlu0 0
    %1374 = vperm.xlu0 %1373, %v1248
    %v1375 = vpop.permute.xlu0 %1374
    %1378 = vset.pattern.permute.xlu0 0
    %1379 = vperm.xlu0 %1378, %v1249
    %v1380 = vpop.permute.xlu0 %1379
    %1383 = vset.pattern.permute.xlu0 0
    %1384 = vperm.xlu0 %1383, %v1250
    %v1385 = vpop.permute.xlu0 %1384
    %1388 = vset.pattern.permute.xlu0 0
    %1389 = vperm.xlu0 %1388, %v1251
    %v1390 = vpop.permute.xlu0 %1389
    %1393 = vset.pattern.permute.xlu0 0
    %1394 = vperm.xlu0 %1393, %v1252
    %v1395 = vpop.permute.xlu0 %1394
    %1398 = vset.pattern.permute.xlu0 0
    %1399 = vperm.xlu0 %1398, %v1253
    %v1400 = vpop.permute.xlu0 %1399
    %1403 = vset.pattern.permute.xlu0 0
    %1404 = vperm.xlu0 %1403, %v1254
    %v1405 = vpop.permute.xlu0 %1404
    %1408 = vset.pattern.permute.xlu0 0
    %1409 = vperm.xlu0 %1408, %v1255
    %v1410 = vpop.permute.xlu0 %1409
    %1413 = vset.pattern.permute.xlu0 0
    %1414 = vperm.xlu0 %1413, %v1256
    %v1415 = vpop.permute.xlu0 %1414
    %1417 = vmatpush.msra.mxu0 %v1144
    %1418 = vmatpush.msra.mxu0 %v1143
    %1419 = vmatpush.msra.mxu0 %v1142
    %1420 = vmatpush.msra.mxu0 %v1141
    %1421 = vmatpush.msra.mxu0 %v1140
    %1422 = vmatpush.msra.mxu0 %v1139
    %1423 = vmatpush.msra.mxu0 %v1138
    %1424 = vmatpush.msra.mxu0 %v1137
    %1425 = vmatpush.msra.mxu0 %v1136
    %1426 = vmatpush.msra.mxu0 %v1135
    %1427 = vmatpush.msra.mxu0 %v1134
    %1428 = vmatpush.msra.mxu0 %v1133
    %1429 = vmatpush.msra.mxu0 %v1132
    %1430 = vmatpush.msra.mxu0 %v1131
    %1431 = vmatpush.msra.mxu0 %v1130
    %1432 = vmatpush.msra.mxu0 %v1129
    %1433 = vmatmul.f32.gmra.mxu0 %v1161
    %v1434 = vpop.f32.mrf.mxu0
    %v1435 = vadd.f32 %v1260, %v1434
    %1436 = vmatmul.f32.gmra.mxu0 %v1163
    %v1437 = vpop.f32.mrf.mxu0
    %v1438 = vadd.f32 %v1265, %v1437
    %1439 = vmatmul.f32.gmra.mxu0 %v1165
    %v1440 = vpop.f32.mrf.mxu0
    %v1441 = vadd.f32 %v1270, %v1440
    %1442 = vmatmul.f32.gmra.mxu0 %v1167
    %v1443 = vpop.f32.mrf.mxu0
    %v1444 = vadd.f32 %v1275, %v1443
    %1445 = vmatmul.f32.gmra.mxu0 %v1169
    %v1446 = vpop.f32.mrf.mxu0
    %v1447 = vadd.f32 %v1280, %v1446
    %1448 = vmatmul.f32.gmra.mxu0 %v1171
    %v1449 = vpop.f32.mrf.mxu0
    %v1450 = vadd.f32 %v1285, %v1449
    %1451 = vmatmul.f32.gmra.mxu0 %v1173
    %v1452 = vpop.f32.mrf.mxu0
    %v1453 = vadd.f32 %v1290, %v1452
    %1454 = vmatmul.f32.gmra.mxu0 %v1175
    %v1455 = vpop.f32.mrf.mxu0
    %v1456 = vadd.f32 %v1295, %v1455
    %1457 = vmatmul.f32.gmra.mxu0 %v1177
    %v1458 = vpop.f32.mrf.mxu0
    %v1459 = vadd.f32 %v1300, %v1458
    %1460 = vmatmul.f32.gmra.mxu0 %v1179
    %v1461 = vpop.f32.mrf.mxu0
    %v1462 = vadd.f32 %v1305, %v1461
    %1463 = vmatmul.f32.gmra.mxu0 %v1181
    %v1464 = vpop.f32.mrf.mxu0
    %v1465 = vadd.f32 %v1310, %v1464
    %1466 = vmatmul.f32.gmra.mxu0 %v1183
    %v1467 = vpop.f32.mrf.mxu0
    %v1468 = vadd.f32 %v1315, %v1467
    %1469 = vmatmul.f32.gmra.mxu0 %v1185
    %v1470 = vpop.f32.mrf.mxu0
    %v1471 = vadd.f32 %v1320, %v1470
    %1472 = vmatmul.f32.gmra.mxu0 %v1187
    %v1473 = vpop.f32.mrf.mxu0
    %v1474 = vadd.f32 %v1325, %v1473
    %1475 = vmatmul.f32.gmra.mxu0 %v1189
    %v1476 = vpop.f32.mrf.mxu0
    %v1477 = vadd.f32 %v1330, %v1476
    %1478 = vmatmul.f32.gmra.mxu0 %v1191
    %v1479 = vpop.f32.mrf.mxu0
    %v1480 = vadd.f32 %v1335, %v1479
    %1481 = vmatmul.f32.gmra.mxu0 %v1193
    %v1482 = vpop.f32.mrf.mxu0
    %v1483 = vadd.f32 %v1340, %v1482
    %1484 = vmatmul.f32.gmra.mxu0 %v1195
    %v1485 = vpop.f32.mrf.mxu0
    %v1486 = vadd.f32 %v1345, %v1485
    %1487 = vmatmul.f32.gmra.mxu0 %v1197
    %v1488 = vpop.f32.mrf.mxu0
    %v1489 = vadd.f32 %v1350, %v1488
    %1490 = vmatmul.f32.gmra.mxu0 %v1199
    %v1491 = vpop.f32.mrf.mxu0
    %v1492 = vadd.f32 %v1355, %v1491
    %1493 = vmatmul.f32.gmra.mxu0 %v1201
    %v1494 = vpop.f32.mrf.mxu0
    %v1495 = vadd.f32 %v1360, %v1494
    %1496 = vmatmul.f32.gmra.mxu0 %v1203
    %v1497 = vpop.f32.mrf.mxu0
    %v1498 = vadd.f32 %v1365, %v1497
    %1499 = vmatmul.f32.gmra.mxu0 %v1205
    %v1500 = vpop.f32.mrf.mxu0
    %v1501 = vadd.f32 %v1370, %v1500
    %1502 = vmatmul.f32.gmra.mxu0 %v1207
    %v1503 = vpop.f32.mrf.mxu0
    %v1504 = vadd.f32 %v1375, %v1503
    %1505 = vmatmul.f32.gmra.mxu0 %v1209
    %v1506 = vpop.f32.mrf.mxu0
    %v1507 = vadd.f32 %v1380, %v1506
    %1508 = vmatmul.f32.gmra.mxu0 %v1211
    %v1509 = vpop.f32.mrf.mxu0
    %v1510 = vadd.f32 %v1385, %v1509
    %1511 = vmatmul.f32.gmra.mxu0 %v1213
    %v1512 = vpop.f32.mrf.mxu0
    %v1513 = vadd.f32 %v1390, %v1512
    %1514 = vmatmul.f32.gmra.mxu0 %v1215
    %v1515 = vpop.f32.mrf.mxu0
    %v1516 = vadd.f32 %v1395, %v1515
    %1517 = vmatmul.f32.gmra.mxu0 %v1217
    %v1518 = vpop.f32.mrf.mxu0
    %v1519 = vadd.f32 %v1400, %v1518
    %1520 = vmatmul.f32.gmra.mxu0 %v1219
    %v1521 = vpop.f32.mrf.mxu0
    %v1522 = vadd.f32 %v1405, %v1521
    %1523 = vmatmul.f32.gmra.mxu0 %v1221
    %v1524 = vpop.f32.mrf.mxu0
    %v1525 = vadd.f32 %v1410, %v1524
    %1526 = vmatmul.f32.gmra.mxu0 %v1223
    %v1527 = vpop.f32.mrf.mxu0
    %v1528 = vadd.f32 %v1415, %v1527
    %1529 = vdwg.mxu0
    %1530 = vmatpush.msra.mxu0 %v1160
    %1531 = vmatpush.msra.mxu0 %v1159
    %1532 = vmatpush.msra.mxu0 %v1158
    %1533 = vmatpush.msra.mxu0 %v1157
    %1534 = vmatpush.msra.mxu0 %v1156
    %1535 = vmatpush.msra.mxu0 %v1155
    %1536 = vmatpush.msra.mxu0 %v1154
    %1537 = vmatpush.msra.mxu0 %v1153
    %1538 = vmatpush.msra.mxu0 %v1152
    %1539 = vmatpush.msra.mxu0 %v1151
    %1540 = vmatpush.msra.mxu0 %v1150
    %1541 = vmatpush.msra.mxu0 %v1149
    %1542 = vmatpush.msra.mxu0 %v1148
    %1543 = vmatpush.msra.mxu0 %v1147
    %1544 = vmatpush.msra.mxu0 %v1146
    %1545 = vmatpush.msra.mxu0 %v1145
    %1546 = vmatmul.f32.gmra.mxu0 %v1162
    %v1547 = vpop.f32.mrf.mxu0
    %v1548 = vadd.f32 %v1435, %v1547
    %1549 = vmatmul.f32.gmra.mxu0 %v1164
    %v1550 = vpop.f32.mrf.mxu0
    %v1551 = vadd.f32 %v1438, %v1550
    %1552 = vmatmul.f32.gmra.mxu0 %v1166
    %v1553 = vpop.f32.mrf.mxu0
    %v1554 = vadd.f32 %v1441, %v1553
    %1555 = vmatmul.f32.gmra.mxu0 %v1168
    %v1556 = vpop.f32.mrf.mxu0
    %v1557 = vadd.f32 %v1444, %v1556
    %1558 = vmatmul.f32.gmra.mxu0 %v1170
    %v1559 = vpop.f32.mrf.mxu0
    %v1560 = vadd.f32 %v1447, %v1559
    %1561 = vmatmul.f32.gmra.mxu0 %v1172
    %v1562 = vpop.f32.mrf.mxu0
    %v1563 = vadd.f32 %v1450, %v1562
    %1564 = vmatmul.f32.gmra.mxu0 %v1174
    %v1565 = vpop.f32.mrf.mxu0
    %v1566 = vadd.f32 %v1453, %v1565
    %1567 = vmatmul.f32.gmra.mxu0 %v1176
    %v1568 = vpop.f32.mrf.mxu0
    %v1569 = vadd.f32 %v1456, %v1568
    %1570 = vmatmul.f32.gmra.mxu0 %v1178
    %v1571 = vpop.f32.mrf.mxu0
    %v1572 = vadd.f32 %v1459, %v1571
    %1573 = vmatmul.f32.gmra.mxu0 %v1180
    %v1574 = vpop.f32.mrf.mxu0
    %v1575 = vadd.f32 %v1462, %v1574
    %1576 = vmatmul.f32.gmra.mxu0 %v1182
    %v1577 = vpop.f32.mrf.mxu0
    %v1578 = vadd.f32 %v1465, %v1577
    %1579 = vmatmul.f32.gmra.mxu0 %v1184
    %v1580 = vpop.f32.mrf.mxu0
    %v1581 = vadd.f32 %v1468, %v1580
    %1582 = vmatmul.f32.gmra.mxu0 %v1186
    %v1583 = vpop.f32.mrf.mxu0
    %v1584 = vadd.f32 %v1471, %v1583
    %1585 = vmatmul.f32.gmra.mxu0 %v1188
    %v1586 = vpop.f32.mrf.mxu0
    %v1587 = vadd.f32 %v1474, %v1586
    %1588 = vmatmul.f32.gmra.mxu0 %v1190
    %v1589 = vpop.f32.mrf.mxu0
    %v1590 = vadd.f32 %v1477, %v1589
    %1591 = vmatmul.f32.gmra.mxu0 %v1192
    %v1592 = vpop.f32.mrf.mxu0
    %v1593 = vadd.f32 %v1480, %v1592
    %1594 = vmatmul.f32.gmra.mxu0 %v1194
    %v1595 = vpop.f32.mrf.mxu0
    %v1596 = vadd.f32 %v1483, %v1595
    %1597 = vmatmul.f32.gmra.mxu0 %v1196
    %v1598 = vpop.f32.mrf.mxu0
    %v1599 = vadd.f32 %v1486, %v1598
    %1600 = vmatmul.f32.gmra.mxu0 %v1198
    %v1601 = vpop.f32.mrf.mxu0
    %v1602 = vadd.f32 %v1489, %v1601
    %1603 = vmatmul.f32.gmra.mxu0 %v1200
    %v1604 = vpop.f32.mrf.mxu0
    %v1605 = vadd.f32 %v1492, %v1604
    %1606 = vmatmul.f32.gmra.mxu0 %v1202
    %v1607 = vpop.f32.mrf.mxu0
    %v1608 = vadd.f32 %v1495, %v1607
    %1609 = vmatmul.f32.gmra.mxu0 %v1204
    %v1610 = vpop.f32.mrf.mxu0
    %v1611 = vadd.f32 %v1498, %v1610
    %1612 = vmatmul.f32.gmra.mxu0 %v1206
    %v1613 = vpop.f32.mrf.mxu0
    %v1614 = vadd.f32 %v1501, %v1613
    %1615 = vmatmul.f32.gmra.mxu0 %v1208
    %v1616 = vpop.f32.mrf.mxu0
    %v1617 = vadd.f32 %v1504, %v1616
    %1618 = vmatmul.f32.gmra.mxu0 %v1210
    %v1619 = vpop.f32.mrf.mxu0
    %v1620 = vadd.f32 %v1507, %v1619
    %1621 = vmatmul.f32.gmra.mxu0 %v1212
    %v1622 = vpop.f32.mrf.mxu0
    %v1623 = vadd.f32 %v1510, %v1622
    %1624 = vmatmul.f32.gmra.mxu0 %v1214
    %v1625 = vpop.f32.mrf.mxu0
    %v1626 = vadd.f32 %v1513, %v1625
    %1627 = vmatmul.f32.gmra.mxu0 %v1216
    %v1628 = vpop.f32.mrf.mxu0
    %v1629 = vadd.f32 %v1516, %v1628
    %1630 = vmatmul.f32.gmra.mxu0 %v1218
    %v1631 = vpop.f32.mrf.mxu0
    %v1632 = vadd.f32 %v1519, %v1631
    %1633 = vmatmul.f32.gmra.mxu0 %v1220
    %v1634 = vpop.f32.mrf.mxu0
    %v1635 = vadd.f32 %v1522, %v1634
    %1636 = vmatmul.f32.gmra.mxu0 %v1222
    %v1637 = vpop.f32.mrf.mxu0
    %v1638 = vadd.f32 %v1525, %v1637
    %1639 = vmatmul.f32.gmra.mxu0 %v1224
    %v1640 = vpop.f32.mrf.mxu0
    %v1641 = vadd.f32 %v1528, %v1640
    %1642 = vdwg.mxu0
    %vm1643 = vcmp.ge.f32.partialorder %v1548, 0.0
    %vm1644 = vcmp.ge.f32.partialorder %v1551, 0.0
    %vm1645 = vcmp.ge.f32.partialorder %v1554, 0.0
    %vm1646 = vcmp.ge.f32.partialorder %v1557, 0.0
    %vm1647 = vcmp.ge.f32.partialorder %v1560, 0.0
    %vm1648 = vcmp.ge.f32.partialorder %v1563, 0.0
    %vm1649 = vcmp.ge.f32.partialorder %v1566, 0.0
    %vm1650 = vcmp.ge.f32.partialorder %v1569, 0.0
    %vm1651 = vcmp.ge.f32.partialorder %v1572, 0.0
    %vm1652 = vcmp.ge.f32.partialorder %v1575, 0.0
    %vm1653 = vcmp.ge.f32.partialorder %v1578, 0.0
    %vm1654 = vcmp.ge.f32.partialorder %v1581, 0.0
    %vm1655 = vcmp.ge.f32.partialorder %v1584, 0.0
    %vm1656 = vcmp.ge.f32.partialorder %v1587, 0.0
    %vm1657 = vcmp.ge.f32.partialorder %v1590, 0.0
    %vm1658 = vcmp.ge.f32.partialorder %v1593, 0.0
    %vm1659 = vcmp.ge.f32.partialorder %v1596, 0.0
    %vm1660 = vcmp.ge.f32.partialorder %v1599, 0.0
    %vm1661 = vcmp.ge.f32.partialorder %v1602, 0.0
    %vm1662 = vcmp.ge.f32.partialorder %v1605, 0.0
    %vm1663 = vcmp.ge.f32.partialorder %v1608, 0.0
    %vm1664 = vcmp.ge.f32.partialorder %v1611, 0.0
    %vm1665 = vcmp.ge.f32.partialorder %v1614, 0.0
    %vm1666 = vcmp.ge.f32.partialorder %v1617, 0.0
    %vm1667 = vcmp.ge.f32.partialorder %v1620, 0.0
    %vm1668 = vcmp.ge.f32.partialorder %v1623, 0.0
    %vm1669 = vcmp.ge.f32.partialorder %v1626, 0.0
    %vm1670 = vcmp.ge.f32.partialorder %v1629, 0.0
    %vm1671 = vcmp.ge.f32.partialorder %v1632, 0.0
    %vm1672 = vcmp.ge.f32.partialorder %v1635, 0.0
    %vm1673 = vcmp.ge.f32.partialorder %v1638, 0.0
    %vm1674 = vcmp.ge.f32.partialorder %v1641, 0.0
    %v1675 = vmul.f32 %v1548, 0.01
    %v1676 = vmul.f32 %v1551, 0.01
    %v1677 = vmul.f32 %v1554, 0.01
    %v1678 = vmul.f32 %v1557, 0.01
    %v1679 = vmul.f32 %v1560, 0.01
    %v1680 = vmul.f32 %v1563, 0.01
    %v1681 = vmul.f32 %v1566, 0.01
    %v1682 = vmul.f32 %v1569, 0.01
    %v1683 = vmul.f32 %v1572, 0.01
    %v1684 = vmul.f32 %v1575, 0.01
    %v1685 = vmul.f32 %v1578, 0.01
    %v1686 = vmul.f32 %v1581, 0.01
    %v1687 = vmul.f32 %v1584, 0.01
    %v1688 = vmul.f32 %v1587, 0.01
    %v1689 = vmul.f32 %v1590, 0.01
    %v1690 = vmul.f32 %v1593, 0.01
    %v1691 = vmul.f32 %v1596, 0.01
    %v1692 = vmul.f32 %v1599, 0.01
    %v1693 = vmul.f32 %v1602, 0.01
    %v1694 = vmul.f32 %v1605, 0.01
    %v1695 = vmul.f32 %v1608, 0.01
    %v1696 = vmul.f32 %v1611, 0.01
    %v1697 = vmul.f32 %v1614, 0.01
    %v1698 = vmul.f32 %v1617, 0.01
    %v1699 = vmul.f32 %v1620, 0.01
    %v1700 = vmul.f32 %v1623, 0.01
    %v1701 = vmul.f32 %v1626, 0.01
    %v1702 = vmul.f32 %v1629, 0.01
    %v1703 = vmul.f32 %v1632, 0.01
    %v1704 = vmul.f32 %v1635, 0.01
    %v1705 = vmul.f32 %v1638, 0.01
    %v1706 = vmul.f32 %v1641, 0.01
    %v1707 = vsel %vm1643, %v1548, %v1675
    %v1708 = vsel %vm1644, %v1551, %v1676
    %v1709 = vsel %vm1645, %v1554, %v1677
    %v1710 = vsel %vm1646, %v1557, %v1678
    %v1711 = vsel %vm1647, %v1560, %v1679
    %v1712 = vsel %vm1648, %v1563, %v1680
    %v1713 = vsel %vm1649, %v1566, %v1681
    %v1714 = vsel %vm1650, %v1569, %v1682
    %v1715 = vsel %vm1651, %v1572, %v1683
    %v1716 = vsel %vm1652, %v1575, %v1684
    %v1717 = vsel %vm1653, %v1578, %v1685
    %v1718 = vsel %vm1654, %v1581, %v1686
    %v1719 = vsel %vm1655, %v1584, %v1687
    %v1720 = vsel %vm1656, %v1587, %v1688
    %v1721 = vsel %vm1657, %v1590, %v1689
    %v1722 = vsel %vm1658, %v1593, %v1690
    %v1723 = vsel %vm1659, %v1596, %v1691
    %v1724 = vsel %vm1660, %v1599, %v1692
    %v1725 = vsel %vm1661, %v1602, %v1693
    %v1726 = vsel %vm1662, %v1605, %v1694
    %v1727 = vsel %vm1663, %v1608, %v1695
    %v1728 = vsel %vm1664, %v1611, %v1696
    %v1729 = vsel %vm1665, %v1614, %v1697
    %v1730 = vsel %vm1666, %v1617, %v1698
    %v1731 = vsel %vm1667, %v1620, %v1699
    %v1732 = vsel %vm1668, %v1623, %v1700
    %v1733 = vsel %vm1669, %v1626, %v1701
    %v1734 = vsel %vm1670, %v1629, %v1702
    %v1735 = vsel %vm1671, %v1632, %v1703
    %v1736 = vsel %vm1672, %v1635, %v1704
    %v1737 = vsel %vm1673, %v1638, %v1705
    %v1738 = vsel %vm1674, %v1641, %v1706
    %v1739 = vld [vmem:[%s7] sm:$0xff]
    %v1740 = vld [vmem:[%s7 + $0x8] sm:$0xff]
    %v1741 = vld [vmem:[%s7 + $0x10] sm:$0xff]
    %v1742 = vld [vmem:[%s7 + $0x18] sm:$0xff]
    %v1743 = vld [vmem:[%s7 + $0x20] sm:$0xff]
    %v1744 = vld [vmem:[%s7 + $0x28] sm:$0xff]
    %v1745 = vld [vmem:[%s7 + $0x30] sm:$0xff]
    %v1746 = vld [vmem:[%s7 + $0x38] sm:$0xff]
    %v1747 = vld [vmem:[%s7 + $0x40] sm:$0xff]
    %v1748 = vld [vmem:[%s7 + $0x48] sm:$0xff]
    %v1749 = vld [vmem:[%s7 + $0x50] sm:$0xff]
    %v1750 = vld [vmem:[%s7 + $0x58] sm:$0xff]
    %v1751 = vld [vmem:[%s7 + $0x60] sm:$0xff]
    %v1752 = vld [vmem:[%s7 + $0x68] sm:$0xff]
    %v1753 = vld [vmem:[%s7 + $0x70] sm:$0xff]
    %v1754 = vld [vmem:[%s7 + $0x78] sm:$0xff]
    %v1755 = vld [vmem:[%s7 + $0x80] sm:$0xff]
    %v1756 = vld [vmem:[%s7 + $0x88] sm:$0xff]
    %v1757 = vld [vmem:[%s7 + $0x90] sm:$0xff]
    %v1758 = vld [vmem:[%s7 + $0x98] sm:$0xff]
    %v1759 = vld [vmem:[%s7 + $0xa0] sm:$0xff]
    %v1760 = vld [vmem:[%s7 + $0xa8] sm:$0xff]
    %v1761 = vld [vmem:[%s7 + $0xb0] sm:$0xff]
    %v1762 = vld [vmem:[%s7 + $0xb8] sm:$0xff]
    %v1763 = vld [vmem:[%s7 + $0xc0] sm:$0xff]
    %v1764 = vld [vmem:[%s7 + $0xc8] sm:$0xff]
    %v1765 = vld [vmem:[%s7 + $0xd0] sm:$0xff]
    %v1766 = vld [vmem:[%s7 + $0xd8] sm:$0xff]
    %v1767 = vld [vmem:[%s7 + $0xe0] sm:$0xff]
    %v1768 = vld [vmem:[%s7 + $0xe8] sm:$0xff]
    %v1769 = vld [vmem:[%s7 + $0xf0] sm:$0xff]
    %v1770 = vld [vmem:[%s7 + $0xf8] sm:$0xff]
    %v1771 = vld [vmem:[#allocation2] sm:$0x1]
    %1773 = vset.pattern.permute.xlu0 0
    %1774 = vperm.xlu0 %1773, %v1739
    %v1775 = vpop.permute.xlu0 %1774
    %1778 = vset.pattern.permute.xlu0 0
    %1779 = vperm.xlu0 %1778, %v1740
    %v1780 = vpop.permute.xlu0 %1779
    %1783 = vset.pattern.permute.xlu0 0
    %1784 = vperm.xlu0 %1783, %v1741
    %v1785 = vpop.permute.xlu0 %1784
    %1788 = vset.pattern.permute.xlu0 0
    %1789 = vperm.xlu0 %1788, %v1742
    %v1790 = vpop.permute.xlu0 %1789
    %1793 = vset.pattern.permute.xlu0 0
    %1794 = vperm.xlu0 %1793, %v1743
    %v1795 = vpop.permute.xlu0 %1794
    %1798 = vset.pattern.permute.xlu0 0
    %1799 = vperm.xlu0 %1798, %v1744
    %v1800 = vpop.permute.xlu0 %1799
    %1803 = vset.pattern.permute.xlu0 0
    %1804 = vperm.xlu0 %1803, %v1745
    %v1805 = vpop.permute.xlu0 %1804
    %1808 = vset.pattern.permute.xlu0 0
    %1809 = vperm.xlu0 %1808, %v1746
    %v1810 = vpop.permute.xlu0 %1809
    %1813 = vset.pattern.permute.xlu0 0
    %1814 = vperm.xlu0 %1813, %v1747
    %v1815 = vpop.permute.xlu0 %1814
    %1818 = vset.pattern.permute.xlu0 0
    %1819 = vperm.xlu0 %1818, %v1748
    %v1820 = vpop.permute.xlu0 %1819
    %1823 = vset.pattern.permute.xlu0 0
    %1824 = vperm.xlu0 %1823, %v1749
    %v1825 = vpop.permute.xlu0 %1824
    %1828 = vset.pattern.permute.xlu0 0
    %1829 = vperm.xlu0 %1828, %v1750
    %v1830 = vpop.permute.xlu0 %1829
    %1833 = vset.pattern.permute.xlu0 0
    %1834 = vperm.xlu0 %1833, %v1751
    %v1835 = vpop.permute.xlu0 %1834
    %1838 = vset.pattern.permute.xlu0 0
    %1839 = vperm.xlu0 %1838, %v1752
    %v1840 = vpop.permute.xlu0 %1839
    %1843 = vset.pattern.permute.xlu0 0
    %1844 = vperm.xlu0 %1843, %v1753
    %v1845 = vpop.permute.xlu0 %1844
    %1848 = vset.pattern.permute.xlu0 0
    %1849 = vperm.xlu0 %1848, %v1754
    %v1850 = vpop.permute.xlu0 %1849
    %1853 = vset.pattern.permute.xlu0 0
    %1854 = vperm.xlu0 %1853, %v1755
    %v1855 = vpop.permute.xlu0 %1854
    %1858 = vset.pattern.permute.xlu0 0
    %1859 = vperm.xlu0 %1858, %v1756
    %v1860 = vpop.permute.xlu0 %1859
    %1863 = vset.pattern.permute.xlu0 0
    %1864 = vperm.xlu0 %1863, %v1757
    %v1865 = vpop.permute.xlu0 %1864
    %1868 = vset.pattern.permute.xlu0 0
    %1869 = vperm.xlu0 %1868, %v1758
    %v1870 = vpop.permute.xlu0 %1869
    %1873 = vset.pattern.permute.xlu0 0
    %1874 = vperm.xlu0 %1873, %v1759
    %v1875 = vpop.permute.xlu0 %1874
    %1878 = vset.pattern.permute.xlu0 0
    %1879 = vperm.xlu0 %1878, %v1760
    %v1880 = vpop.permute.xlu0 %1879
    %1883 = vset.pattern.permute.xlu0 0
    %1884 = vperm.xlu0 %1883, %v1761
    %v1885 = vpop.permute.xlu0 %1884
    %1888 = vset.pattern.permute.xlu0 0
    %1889 = vperm.xlu0 %1888, %v1762
    %v1890 = vpop.permute.xlu0 %1889
    %1893 = vset.pattern.permute.xlu0 0
    %1894 = vperm.xlu0 %1893, %v1763
    %v1895 = vpop.permute.xlu0 %1894
    %1898 = vset.pattern.permute.xlu0 0
    %1899 = vperm.xlu0 %1898, %v1764
    %v1900 = vpop.permute.xlu0 %1899
    %1903 = vset.pattern.permute.xlu0 0
    %1904 = vperm.xlu0 %1903, %v1765
    %v1905 = vpop.permute.xlu0 %1904
    %1908 = vset.pattern.permute.xlu0 0
    %1909 = vperm.xlu0 %1908, %v1766
    %v1910 = vpop.permute.xlu0 %1909
    %1913 = vset.pattern.permute.xlu0 0
    %1914 = vperm.xlu0 %1913, %v1767
    %v1915 = vpop.permute.xlu0 %1914
    %1918 = vset.pattern.permute.xlu0 0
    %1919 = vperm.xlu0 %1918, %v1768
    %v1920 = vpop.permute.xlu0 %1919
    %1923 = vset.pattern.permute.xlu0 0
    %1924 = vperm.xlu0 %1923, %v1769
    %v1925 = vpop.permute.xlu0 %1924
    %1928 = vset.pattern.permute.xlu0 0
    %1929 = vperm.xlu0 %1928, %v1770
    %v1930 = vpop.permute.xlu0 %1929
    %v1932 = vmul.f32 %v1775, %v1707
    %v1933 = vmul.f32 %v1780, %v1708
    %v1934 = vmul.f32 %v1785, %v1709
    %v1935 = vmul.f32 %v1790, %v1710
    %v1936 = vmul.f32 %v1795, %v1711
    %v1937 = vmul.f32 %v1800, %v1712
    %v1938 = vmul.f32 %v1805, %v1713
    %v1939 = vmul.f32 %v1810, %v1714
    %v1940 = vmul.f32 %v1815, %v1715
    %v1941 = vmul.f32 %v1820, %v1716
    %v1942 = vmul.f32 %v1825, %v1717
    %v1943 = vmul.f32 %v1830, %v1718
    %v1944 = vmul.f32 %v1835, %v1719
    %v1945 = vmul.f32 %v1840, %v1720
    %v1946 = vmul.f32 %v1845, %v1721
    %v1947 = vmul.f32 %v1850, %v1722
    %v1948 = vmul.f32 %v1855, %v1723
    %v1949 = vmul.f32 %v1860, %v1724
    %v1950 = vmul.f32 %v1865, %v1725
    %v1951 = vmul.f32 %v1870, %v1726
    %v1952 = vmul.f32 %v1875, %v1727
    %v1953 = vmul.f32 %v1880, %v1728
    %v1954 = vmul.f32 %v1885, %v1729
    %v1955 = vmul.f32 %v1890, %v1730
    %v1956 = vmul.f32 %v1895, %v1731
    %v1957 = vmul.f32 %v1900, %v1732
    %v1958 = vmul.f32 %v1905, %v1733
    %v1959 = vmul.f32 %v1910, %v1734
    %v1960 = vmul.f32 %v1915, %v1735
    %v1961 = vmul.f32 %v1920, %v1736
    %v1962 = vmul.f32 %v1925, %v1737
    %v1963 = vmul.f32 %v1930, %v1738
    %v1964 = vadd.f32 %v1932, %v1933
    %v1965 = vadd.f32 %v1964, %v1934
    %v1966 = vadd.f32 %v1965, %v1935
    %v1967 = vadd.f32 %v1966, %v1936
    %v1968 = vadd.f32 %v1967, %v1937
    %v1969 = vadd.f32 %v1968, %v1938
    %v1970 = vadd.f32 %v1969, %v1939
    %v1971 = vadd.f32 %v1970, %v1940
    %v1972 = vadd.f32 %v1971, %v1941
    %v1973 = vadd.f32 %v1972, %v1942
    %v1974 = vadd.f32 %v1973, %v1943
    %v1975 = vadd.f32 %v1974, %v1944
    %v1976 = vadd.f32 %v1975, %v1945
    %v1977 = vadd.f32 %v1976, %v1946
    %v1978 = vadd.f32 %v1977, %v1947
    %v1979 = vadd.f32 %v1978, %v1948
    %v1980 = vadd.f32 %v1979, %v1949
    %v1981 = vadd.f32 %v1980, %v1950
    %v1982 = vadd.f32 %v1981, %v1951
    %v1983 = vadd.f32 %v1982, %v1952
    %v1984 = vadd.f32 %v1983, %v1953
    %v1985 = vadd.f32 %v1984, %v1954
    %v1986 = vadd.f32 %v1985, %v1955
    %v1987 = vadd.f32 %v1986, %v1956
    %v1988 = vadd.f32 %v1987, %v1957
    %v1989 = vadd.f32 %v1988, %v1958
    %v1990 = vadd.f32 %v1989, %v1959
    %v1991 = vadd.f32 %v1990, %v1960
    %v1992 = vadd.f32 %v1991, %v1961
    %v1993 = vadd.f32 %v1992, %v1962
    %v1994 = vadd.f32 %v1993, %v1963
    %v1995 = vrot.slane %v1994, 4
    %v1996 = vadd.f32 %v1994, %v1995
    %v1997 = vrot.slane %v1996, 2
    %v1998 = vadd.f32 %v1996, %v1997
    %v1999 = vrot.slane %v1998, 1
    %v2000 = vadd.f32 %v1998, %v1999
    %2002 = vset.pattern.permute.xlu0 0
    %2003 = vperm.xlu0 %2002, %v1771
    %v2004 = vpop.permute.xlu0 %2003
    %v2006 = vperm.slane %v2004, 0
    %v2007 = vadd.f32 %v2000, %v2006
    %2008 = vst [vmem:[#allocation3] sm:$0x1] %v2007
    // Predicated region
    $region38: #{tpu_custom_call.1} parent=1 // pred_check
      _
    $region39: #{tpu_custom_call.1} parent=1 // pred_check_branch
      %2010 = sbr.rel (0) target = $region41
    $region40: #{tpu_custom_call.1} parent=1 // pred_region
      %2012 = vsyncadd [#allocation4], 0
      %s2014 = sshll.u32 [#allocation3], 4
      %s2015 = int_to_ptr.vmem [resolvable:$true] %s2014
      %s2016 = sshll.u32 %s9, 4
      %s2017 = int_to_ptr.hbm [resolvable:$true] %s2016
      %2019 = dma.vmem_to_hbm [thread:$0]  %s2015, 16, %s2017, [#allocation4]
    $region41: #{tpu_custom_call.1} parent=1 // pred_fallthru
      _
    // Predicated region
    $region42: #{tpu_custom_call.1} parent=1 // pred_check
      _
    $region43: #{tpu_custom_call.1} parent=1 // pred_check_branch
      %2021 = sbr.rel (0) target = $region45
    $region44: #{tpu_custom_call.1} parent=1 // pred_region
      %2023 = dma.done [#allocation4], 16
    $region45: #{tpu_custom_call.1} parent=1 // pred_fallthru
      _
    %2024 = vsyncpa [#allocation4], 1

</llo_original>
